<compile_context>
chip_gen: v5e
topology: v5e:2x2
jax: 0.10.0
libtpu: 0.0.40
codegen_flags: <defaults>
</compile_context>

<pallas_src>
import functools
import math

import jax
import jax.numpy as jnp
from jax.experimental import pallas as pl
from jax.experimental.pallas import tpu as pltpu

_VMEM_LIMIT = 32 * 1024 * 1024  # explicit scoped-VMEM limit (safe on v5e/v6e/v7x)


# ----------------------------------------------------------------------------
# Fused attention block kernel:
#   out[b] = LayerNorm( x[b] + sum_s OutProj_s( MHA_s( Q_s(x[b]), K_s(mem[s,b]),
#                                                      V_s(mem[s,b]) ) ) )
# Grid = (B, n_streams);  B is "parallel", n_streams is "arbitrary" (reduction
# into a VMEM accumulator, LayerNorm applied at the last stream step).
# ----------------------------------------------------------------------------

def _make_attn_block_kernel(n_head, scale, eps, has_bias):
    def kernel(*refs):
        if has_bias:
            (x_ref, mem_ref, wq_ref, bq_ref, wk_ref, bk_ref, wv_ref, bv_ref,
             wo_ref, bo_ref, g_ref, bt_ref, bias_ref, o_ref, acc_ref) = refs
        else:
            (x_ref, mem_ref, wq_ref, bq_ref, wk_ref, bk_ref, wv_ref, bv_ref,
             wo_ref, bo_ref, g_ref, bt_ref, o_ref, acc_ref) = refs
            bias_ref = None

        s_idx = pl.program_id(1)

        @pl.when(s_idx == 0)
        def _():
            acc_ref[...] = jnp.zeros_like(acc_ref)

        x = x_ref[0].astype(jnp.float32)          # [T, D] (also the residual)
        mem = mem_ref[0, 0].astype(jnp.float32)   # [S, D]
        x_bf = x.astype(jnp.bfloat16)
        mem_bf = mem.astype(jnp.bfloat16)

        att = jnp.zeros(acc_ref.shape, jnp.float32)   # [T, D]
        for h in range(n_head):
            # Head-major weights: pure leading-dim ref indexing (no lane slicing).
            qh = (jnp.dot(x_bf, wq_ref[0, h],
                          preferred_element_type=jnp.float32)
                  + bq_ref[0, h]) * scale                              # [T, dh]
            kh = (jnp.dot(mem_bf, wk_ref[0, h],
                          preferred_element_type=jnp.float32)
                  + bk_ref[0, h])                                      # [S, dh]
            vh = (jnp.dot(mem_bf, wv_ref[0, h],
                          preferred_element_type=jnp.float32)
                  + bv_ref[0, h])                                      # [S, dh]

            # scores = qh @ kh^T via dot_general (no in-kernel transpose)
            s = jax.lax.dot_general(
                qh.astype(jnp.bfloat16), kh.astype(jnp.bfloat16),
                (((1,), (1,)), ((), ())),
                preferred_element_type=jnp.float32)                    # [T, S]
            if bias_ref is not None:
                s = s + bias_ref[0, 0, h]

            m = jnp.max(s, axis=-1, keepdims=True)
            p = jnp.exp(s - m)
            p = p * pl.reciprocal(jnp.sum(p, axis=-1, keepdims=True),
                                  approx=True)
            oh = jnp.dot(p.astype(jnp.bfloat16), vh.astype(jnp.bfloat16),
                         preferred_element_type=jnp.float32)           # [T, dh]
            # Output projection per head-slice of W_o, accumulated lane-dense.
            att = att + jnp.dot(oh.astype(jnp.bfloat16), wo_ref[0, h],
                                preferred_element_type=jnp.float32)    # [T, D]

        acc_ref[...] += att + bo_ref[0]

        @pl.when(s_idx == pl.num_programs(1) - 1)
        def _():
            y = x + acc_ref[...]
            mu = jnp.mean(y, axis=-1, keepdims=True)
            yc = y - mu
            var = jnp.mean(yc * yc, axis=-1, keepdims=True)
            yn = yc * jax.lax.rsqrt(var + eps)
            o_ref[0] = (yn * g_ref[...] + bt_ref[...]).astype(o_ref.dtype)

    return kernel


def attention_block(x, mem_stack, ap, gamma, beta, n_head, biases=None,
                    eps=1e-5):
    """Fused (projections + MHA + out-proj) summed over streams + add + LN.

    x:         [B, T, D]
    mem_stack: [n_streams, B, S, D]
    ap:        dict of head-major attention params (see _init_attention_params)
    biases:    optional additive attention bias [n_streams, B, H, T, S]
    """
    B, T, D = x.shape
    ns, _, S, _ = mem_stack.shape
    dh = D // n_head
    scale = 1.0 / math.sqrt(dh)

    kernel = _make_attn_block_kernel(n_head, scale, eps, biases is not None)

    in_specs = [
        pl.BlockSpec((1, T, D), lambda b, s: (b, 0, 0)),              # x
        pl.BlockSpec((1, 1, S, D), lambda b, s: (s, b, 0, 0)),        # mem
        pl.BlockSpec((1, n_head, D, dh), lambda b, s: (s, 0, 0, 0)),  # wq
        pl.BlockSpec((1, n_head, 1, dh), lambda b, s: (s, 0, 0, 0)),  # bq
        pl.BlockSpec((1, n_head, D, dh), lambda b, s: (s, 0, 0, 0)),  # wk
        pl.BlockSpec((1, n_head, 1, dh), lambda b, s: (s, 0, 0, 0)),  # bk
        pl.BlockSpec((1, n_head, D, dh), lambda b, s: (s, 0, 0, 0)),  # wv
        pl.BlockSpec((1, n_head, 1, dh), lambda b, s: (s, 0, 0, 0)),  # bv
        pl.BlockSpec((1, n_head, dh, D), lambda b, s: (s, 0, 0, 0)),  # wo
        pl.BlockSpec((1, 1, D), lambda b, s: (s, 0, 0)),              # bo
        pl.BlockSpec((1, D), lambda b, s: (0, 0)),                    # gamma
        pl.BlockSpec((1, D), lambda b, s: (0, 0)),                    # beta
    ]
    args = [x, mem_stack, ap["wq"], ap["bq"], ap["wk"], ap["bk"],
            ap["wv"], ap["bv"], ap["wo"], ap["bo"], gamma, beta]
    if biases is not None:
        in_specs.append(
            pl.BlockSpec((1, 1, n_head, T, S), lambda b, s: (s, b, 0, 0, 0)))
        args.append(biases)

    return pl.pallas_call(
        kernel,
        out_shape=jax.ShapeDtypeStruct((B, T, D), x.dtype),
        grid=(B, ns),
        in_specs=in_specs,
        out_specs=pl.BlockSpec((1, T, D), lambda b, s: (b, 0, 0)),
        scratch_shapes=[pltpu.VMEM((T, D), jnp.float32)],
        compiler_params=pltpu.CompilerParams(
            dimension_semantics=("parallel", "arbitrary"),
            vmem_limit_bytes=_VMEM_LIMIT),
    )(*args)


# ----------------------------------------------------------------------------
# Fused FFN block kernel:  out = LayerNorm(x + ff2(gelu(ff1(x))))
# Row-tiled over B*T with a "parallel" grid axis.
# ----------------------------------------------------------------------------

def _ffn_ln_kernel(x_ref, w1_ref, b1_ref, w2_ref, b2_ref, g_ref, bt_ref,
                   o_ref, *, eps):
    x = x_ref[...].astype(jnp.float32)                                # [tm, D]
    h = jnp.dot(x.astype(jnp.bfloat16), w1_ref[...],
                preferred_element_type=jnp.float32) + b1_ref[...]     # [tm, Di]
    h = 0.5 * h * (1.0 + jax.lax.erf(h * (1.0 / math.sqrt(2.0))))     # exact GELU
    y = jnp.dot(h.astype(jnp.bfloat16), w2_ref[...],
                preferred_element_type=jnp.float32) + b2_ref[...]     # [tm, D]
    y = x + y
    mu = jnp.mean(y, axis=-1, keepdims=True)
    yc = y - mu
    var = jnp.mean(yc * yc, axis=-1, keepdims=True)
    yn = yc * jax.lax.rsqrt(var + eps)
    o_ref[...] = (yn * g_ref[...] + bt_ref[...]).astype(o_ref.dtype)


def ffn_ln_block(x, w1, b1, w2, b2, gamma, beta, eps=1e-5):
    """LayerNorm(x + ff2(gelu(ff1(x)))).  x: [B, T, D]."""
    B, T, D = x.shape
    Di = w1.shape[1]
    N = B * T
    # Row tile: whole extent for small N, else 512 rows (multiple of 8) so the
    # per-step VMEM footprint stays well under the v7x 64 MiB budget.
    tm = N if N <= 512 else 512
    out = pl.pallas_call(
        functools.partial(_ffn_ln_kernel, eps=eps),
        out_shape=jax.ShapeDtypeStruct((N, D), x.dtype),
        grid=(pl.cdiv(N, tm),),
        in_specs=[
            pl.BlockSpec((tm, D), lambda i: (i, 0)),
            pl.BlockSpec((D, Di), lambda i: (0, 0)),
            pl.BlockSpec((1, Di), lambda i: (0, 0)),
            pl.BlockSpec((Di, D), lambda i: (0, 0)),
            pl.BlockSpec((1, D), lambda i: (0, 0)),
            pl.BlockSpec((1, D), lambda i: (0, 0)),
            pl.BlockSpec((1, D), lambda i: (0, 0)),
        ],
        out_specs=pl.BlockSpec((tm, D), lambda i: (i, 0)),
        compiler_params=pltpu.CompilerParams(
            dimension_semantics=("parallel",),
            vmem_limit_bytes=_VMEM_LIMIT),
    )(x.reshape(N, D), w1, b1, w2, b2, gamma, beta)
    return out.reshape(B, T, D)


# ----------------------------------------------------------------------------
# Parameter initialization (deterministic, synthetic).  Matmul weights are
# stored in bf16, head-major (one-time layout plumbing, no per-forward cost).
# ----------------------------------------------------------------------------

def _init_attention_params(key, d_model, n_head):
    dh = d_model // n_head
    ks = jax.random.split(key, 4)

    def w(k):
        return jax.random.normal(k, (d_model, d_model), jnp.float32) * 0.02

    wq, wk, wv, wo = w(ks[0]), w(ks[1]), w(ks[2]), w(ks[3])

    def cols_by_head(m):   # [D, D] -> [H, D, dh]  (Q/K/V projections)
        return m.reshape(d_model, n_head, dh).transpose(1, 0, 2)

    def rows_by_head(m):   # [D, D] -> [H, dh, D]  (output projection)
        return m.reshape(n_head, dh, d_model)

    z_h = jnp.zeros((n_head, 1, dh), jnp.float32)
    return dict(
        wq=cols_by_head(wq).astype(jnp.bfloat16), bq=z_h,
        wk=cols_by_head(wk).astype(jnp.bfloat16), bk=z_h,
        wv=cols_by_head(wv).astype(jnp.bfloat16), bv=z_h,
        wo=rows_by_head(wo).astype(jnp.bfloat16),
        bo=jnp.zeros((1, d_model), jnp.float32),
    )


def _init_layer_params(key, config):
    d, di, nh = config["d_model"], config["d_inner"], config["n_head"]
    streams = config["memory_streams"]
    ks = jax.random.split(key, 3 + max(len(streams), 1))

    self_w = _init_attention_params(ks[0], d, nh)
    cross_list = [_init_attention_params(ks[1 + i], d, nh)
                  for i in range(len(streams))]

    p = {
        # Leading axis = stream index (size 1 for self-attention).
        "self": {k: v[None] for k, v in self_w.items()},
        "cross": ({k: jnp.stack([cw[k] for cw in cross_list], axis=0)
                   for k in self_w} if cross_list else None),
        "w1": (jax.random.normal(ks[-2], (d, di), jnp.float32) * 0.02
               ).astype(jnp.bfloat16),
        "b1": jnp.zeros((1, di), jnp.float32),
        "w2": (jax.random.normal(ks[-1], (di, d), jnp.float32) * 0.02
               ).astype(jnp.bfloat16),
        "b2": jnp.zeros((1, d), jnp.float32),
        "norm1_g": jnp.ones((1, d), jnp.float32),
        "norm1_b": jnp.zeros((1, d), jnp.float32),
        "norm2_g": jnp.ones((1, d), jnp.float32),
        "norm2_b": jnp.zeros((1, d), jnp.float32),
        "normc_g": jnp.ones((1, d), jnp.float32),
        "normc_b": jnp.zeros((1, d), jnp.float32),
    }
    return p


def init_decoder_params(key, config):
    ks = jax.random.split(key, config["n_layer"])
    return [_init_layer_params(k, config) for k in ks]


# ----------------------------------------------------------------------------
# Decoder forward
# ----------------------------------------------------------------------------

def decoder_layer_forward(p, x, mem_stack, config,
                          tgt_bias=None, mem_bias_stack=None):
    nh = config["n_head"]
    # 1) self-attention + residual + norm1 (one fused pallas_call)
    x = attention_block(
        x, x[None], p["self"], p["norm1_g"], p["norm1_b"], nh,
        biases=None if tgt_bias is None else tgt_bias[None])
    # 2) cross-attention summed over all memory streams + residual + norm_cross
    #    (streams = reduction grid axis of one fused pallas_call)
    if mem_stack is not None and p["cross"] is not None:
        x = attention_block(
            x, mem_stack, p["cross"], p["normc_g"], p["normc_b"], nh,
            biases=mem_bias_stack)
    # 3) FFN + residual + norm2.  TODO(synk): dropout treated as identity (eval mode).
    return ffn_ln_block(x, p["w1"], p["b1"], p["w2"], p["b2"],
                        p["norm2_g"], p["norm2_b"])


def decoder_forward(params, tgt, memories, config,
                    tgt_bias=None, memory_biases=None):
    """tgt: [B, T, D]; memories: dict stream -> [B, S, D].
    Optional masks are additive float biases: tgt_bias [B, H, T, T],
    memory_biases: dict stream -> [B, H, T, S] (None -> no bias)."""
    streams = config["memory_streams"]
    mem_stack, mem_bias_stack = None, None
    if memories is not None and streams:
        # Stack once for all layers (memories are layer-invariant).
        mem_stack = jnp.stack([memories[s] for s in streams], axis=0)
        if memory_biases is not None:
            B, T, _ = tgt.shape
            S = mem_stack.shape[2]
            zeros = jnp.zeros((B, config["n_head"], T, S), jnp.float32)
            mem_bias_stack = jnp.stack(
                [memory_biases.get(s) if memory_biases.get(s) is not None
                 else zeros for s in streams], axis=0)

    h = tgt
    for layer_p in params:
        h = decoder_layer_forward(layer_p, h, mem_stack, config,
                                  tgt_bias, mem_bias_stack)
    return h


# ----------------------------------------------------------------------------
# Example
# ----------------------------------------------------------------------------

if __name__ == "__main__":
    config = dict(d_model=32, n_head=4, d_inner=64, dropout=0.0, n_layer=2,
                  memory_streams=["vision", "audio"])

    key = jax.random.PRNGKey(0)
    kp, kx, km1, km2 = jax.random.split(key, 4)

    params = init_decoder_params(kp, config)

    B, T, S, D = 2, 8, 8, config["d_model"]
    tgt = jax.random.normal(kx, (B, T, D), jnp.float32)
    memories = {
        "vision": jax.random.normal(km1, (B, S, D), jnp.float32),
        "audio": jax.random.normal(km2, (B, S, D), jnp.float32),
    }

    fwd = jax.jit(lambda prm, t, m: decoder_forward(prm, t, m, config))
    out = fwd(params, tgt, memories)
    out = jax.block_until_ready(out)
    assert out.shape == (B, T, D)
    assert bool(jnp.all(jnp.isfinite(out)))
    print("KERNEL_OK")
</pallas_src>

<mosaic_0001>
module attributes {stable_mosaic.version = 11 : i64} {
  func.func @kernel(%arg0: i32, %arg1: i32, %arg2: memref<1x8x32xf32, #tpu.memory_space<vmem>>, %arg3: memref<1x1x8x32xf32, #tpu.memory_space<vmem>>, %arg4: memref<1x4x32x8xbf16, #tpu.memory_space<vmem>>, %arg5: memref<1x4x1x8xf32, #tpu.memory_space<vmem>>, %arg6: memref<1x4x32x8xbf16, #tpu.memory_space<vmem>>, %arg7: memref<1x4x1x8xf32, #tpu.memory_space<vmem>>, %arg8: memref<1x4x32x8xbf16, #tpu.memory_space<vmem>>, %arg9: memref<1x4x1x8xf32, #tpu.memory_space<vmem>>, %arg10: memref<1x4x8x32xbf16, #tpu.memory_space<vmem>>, %arg11: memref<1x1x32xf32, #tpu.memory_space<vmem>>, %arg12: memref<1x32xf32, #tpu.memory_space<vmem>>, %arg13: memref<1x32xf32, #tpu.memory_space<vmem>>, %arg14: memref<1x8x32xf32, #tpu.memory_space<vmem>>, %arg15: memref<8x32xf32, #tpu.memory_space<vmem>>) attributes {dimension_semantics = [#tpu.dimension_semantics<parallel>, #tpu.dimension_semantics<arbitrary>], iteration_bounds = array<i64: 2, 1>, scalar_prefetch = 0 : i64, scratch_operands = 1 : i64, tpu.core_type = #tpu.core_type<tc>, window_params = [{transform_indices = @transform_0, window_bounds = array<i64: 1, 8, 32>}, {transform_indices = @transform_1, window_bounds = array<i64: 1, 1, 8, 32>}, {transform_indices = @transform_2, window_bounds = array<i64: 1, 4, 32, 8>}, {transform_indices = @transform_3, window_bounds = array<i64: 1, 4, 1, 8>}, {transform_indices = @transform_4, window_bounds = array<i64: 1, 4, 32, 8>}, {transform_indices = @transform_5, window_bounds = array<i64: 1, 4, 1, 8>}, {transform_indices = @transform_6, window_bounds = array<i64: 1, 4, 32, 8>}, {transform_indices = @transform_7, window_bounds = array<i64: 1, 4, 1, 8>}, {transform_indices = @transform_8, window_bounds = array<i64: 1, 4, 8, 32>}, {transform_indices = @transform_9, window_bounds = array<i64: 1, 1, 32>}, {pipeline_mode = #tpu.pipeline_mode<synchronous>, transform_indices = @transform_10, window_bounds = array<i64: 1, 32>}, {pipeline_mode = #tpu.pipeline_mode<synchronous>, transform_indices = @transform_11, window_bounds = array<i64: 1, 32>}, {transform_indices = @transform_12, window_bounds = array<i64: 1, 8, 32>}]} {
    %c0_i32 = arith.constant 0 : i32
    %0 = arith.cmpi eq, %arg1, %c0_i32 : i32
    %1 = arith.extui %0 : i1 to i32
    %c0_i32_0 = arith.constant 0 : i32
    %2 = arith.cmpi ne, %1, %c0_i32_0 : i32
    scf.if %2 {
      %cst_161 = arith.constant 0.000000e+00 : f32
      %196 = vector.broadcast %cst_161 : f32 to vector<8x32xf32>
      %c0_162 = arith.constant 0 : index
      %c0_163 = arith.constant 0 : index
      %197 = vector.load %arg15[%c0_162, %c0_163] : memref<8x32xf32, #tpu.memory_space<vmem>>, vector<8x32xf32>
      tpu.vector_store %arg15[%c0_162, %c0_163], %196 {strides = array<i32>} : memref<8x32xf32, #tpu.memory_space<vmem>>, vector<8x32xf32>,
    } else {
    }
    %c0 = arith.constant 0 : index
    %c0_1 = arith.constant 0 : index
    %c0_2 = arith.constant 0 : index
    %3 = vector.load %arg2[%c0, %c0_1, %c0_2] : memref<1x8x32xf32, #tpu.memory_space<vmem>>, vector<1x8x32xf32>
    %4 = vector.shape_cast %3 : vector<1x8x32xf32> to vector<8x32xf32>
    %c0_3 = arith.constant 0 : index
    %c0_4 = arith.constant 0 : index
    %c0_5 = arith.constant 0 : index
    %c0_6 = arith.constant 0 : index
    %5 = vector.load %arg3[%c0_3, %c0_4, %c0_5, %c0_6] : memref<1x1x8x32xf32, #tpu.memory_space<vmem>>, vector<1x1x8x32xf32>
    %6 = vector.shape_cast %5 : vector<1x1x8x32xf32> to vector<8x32xf32>
    %7 = arith.truncf %4 : vector<8x32xf32> to vector<8x32xbf16>
    %8 = arith.truncf %6 : vector<8x32xf32> to vector<8x32xbf16>
    %cst = arith.constant 0.000000e+00 : f32
    %9 = vector.broadcast %cst : f32 to vector<8x32xf32>
    %c0_7 = arith.constant 0 : index
    %c0_8 = arith.constant 0 : index
    %c0_9 = arith.constant 0 : index
    %c0_10 = arith.constant 0 : index
    %10 = vector.load %arg4[%c0_7, %c0_8, %c0_9, %c0_10] : memref<1x4x32x8xbf16, #tpu.memory_space<vmem>>, vector<1x1x32x8xbf16>
    %11 = vector.shape_cast %10 : vector<1x1x32x8xbf16> to vector<32x8xbf16>
    %cst_11 = arith.constant dense<0.000000e+00> : vector<8x8xf32>
    %12 = tpu.matmul %7, %11, %cst_11 {dimension_numbers = #tpu.dot_dimension_numbers<[1], [0], [0], [1], [0, 0, 1, 1], [], []>} : vector<8x32xbf16>, vector<32x8xbf16>, vector<8x8xf32> -> vector<8x8xf32>
    %c0_12 = arith.constant 0 : index
    %c0_13 = arith.constant 0 : index
    %c0_14 = arith.constant 0 : index
    %c0_15 = arith.constant 0 : index
    %13 = vector.load %arg5[%c0_12, %c0_13, %c0_14, %c0_15] : memref<1x4x1x8xf32, #tpu.memory_space<vmem>>, vector<1x1x1x8xf32>
    %14 = vector.shape_cast %13 : vector<1x1x1x8xf32> to vector<1x8xf32>
    %15 = vector.broadcast %14 : vector<1x8xf32> to vector<8x8xf32>
    %16 = arith.addf %12, %15 : vector<8x8xf32>
    %cst_16 = arith.constant 0.353553385 : f32
    %17 = vector.broadcast %cst_16 : f32 to vector<8x8xf32>
    %18 = arith.mulf %16, %17 : vector<8x8xf32>
    %c0_17 = arith.constant 0 : index
    %c0_18 = arith.constant 0 : index
    %c0_19 = arith.constant 0 : index
    %c0_20 = arith.constant 0 : index
    %19 = vector.load %arg6[%c0_17, %c0_18, %c0_19, %c0_20] : memref<1x4x32x8xbf16, #tpu.memory_space<vmem>>, vector<1x1x32x8xbf16>
    %20 = vector.shape_cast %19 : vector<1x1x32x8xbf16> to vector<32x8xbf16>
    %cst_21 = arith.constant dense<0.000000e+00> : vector<8x8xf32>
    %21 = tpu.matmul %8, %20, %cst_21 {dimension_numbers = #tpu.dot_dimension_numbers<[1], [0], [0], [1], [0, 0, 1, 1], [], []>} : vector<8x32xbf16>, vector<32x8xbf16>, vector<8x8xf32> -> vector<8x8xf32>
    %c0_22 = arith.constant 0 : index
    %c0_23 = arith.constant 0 : index
    %c0_24 = arith.constant 0 : index
    %c0_25 = arith.constant 0 : index
    %22 = vector.load %arg7[%c0_22, %c0_23, %c0_24, %c0_25] : memref<1x4x1x8xf32, #tpu.memory_space<vmem>>, vector<1x1x1x8xf32>
    %23 = vector.shape_cast %22 : vector<1x1x1x8xf32> to vector<1x8xf32>
    %24 = vector.broadcast %23 : vector<1x8xf32> to vector<8x8xf32>
    %25 = arith.addf %21, %24 : vector<8x8xf32>
    %c0_26 = arith.constant 0 : index
    %c0_27 = arith.constant 0 : index
    %c0_28 = arith.constant 0 : index
    %c0_29 = arith.constant 0 : index
    %26 = vector.load %arg8[%c0_26, %c0_27, %c0_28, %c0_29] : memref<1x4x32x8xbf16, #tpu.memory_space<vmem>>, vector<1x1x32x8xbf16>
    %27 = vector.shape_cast %26 : vector<1x1x32x8xbf16> to vector<32x8xbf16>
    %cst_30 = arith.constant dense<0.000000e+00> : vector<8x8xf32>
    %28 = tpu.matmul %8, %27, %cst_30 {dimension_numbers = #tpu.dot_dimension_numbers<[1], [0], [0], [1], [0, 0, 1, 1], [], []>} : vector<8x32xbf16>, vector<32x8xbf16>, vector<8x8xf32> -> vector<8x8xf32>
    %c0_31 = arith.constant 0 : index
    %c0_32 = arith.constant 0 : index
    %c0_33 = arith.constant 0 : index
    %c0_34 = arith.constant 0 : index
    %29 = vector.load %arg9[%c0_31, %c0_32, %c0_33, %c0_34] : memref<1x4x1x8xf32, #tpu.memory_space<vmem>>, vector<1x1x1x8xf32>
    %30 = vector.shape_cast %29 : vector<1x1x1x8xf32> to vector<1x8xf32>
    %31 = vector.broadcast %30 : vector<1x8xf32> to vector<8x8xf32>
    %32 = arith.addf %28, %31 : vector<8x8xf32>
    %33 = arith.truncf %18 : vector<8x8xf32> to vector<8x8xbf16>
    %34 = arith.truncf %25 : vector<8x8xf32> to vector<8x8xbf16>
    %cst_35 = arith.constant dense<0.000000e+00> : vector<8x8xf32>
    %35 = tpu.matmul %33, %34, %cst_35 {dimension_numbers = #tpu.dot_dimension_numbers<[1], [1], [0], [0], [0, 0, 1, 0], [], []>} : vector<8x8xbf16>, vector<8x8xbf16>, vector<8x8xf32> -> vector<8x8xf32>
    %cst_36 = arith.constant dense<0xFF800000> : vector<8xf32>
    %36 = vector.multi_reduction <maximumf>, %35, %cst_36 [1] : vector<8x8xf32> to vector<8xf32>
    %37 = vector.shape_cast %36 : vector<8xf32> to vector<8x1xf32>
    %38 = vector.broadcast %37 : vector<8x1xf32> to vector<8x8xf32>
    %39 = arith.subf %35, %38 : vector<8x8xf32>
    %40 = math.exp %39 : vector<8x8xf32>
    %cst_37 = arith.constant dense<0.000000e+00> : vector<8xf32>
    %41 = vector.multi_reduction <add>, %40, %cst_37 [1] : vector<8x8xf32> to vector<8xf32>
    %42 = vector.shape_cast %41 : vector<8xf32> to vector<8x1xf32>
    %43 = tpu.reciprocal %42 {approx = true} : vector<8x1xf32> -> vector<8x1xf32>
    %44 = vector.broadcast %43 : vector<8x1xf32> to vector<8x8xf32>
    %45 = arith.mulf %40, %44 : vector<8x8xf32>
    %46 = arith.truncf %45 : vector<8x8xf32> to vector<8x8xbf16>
    %47 = arith.truncf %32 : vector<8x8xf32> to vector<8x8xbf16>
    %cst_38 = arith.constant dense<0.000000e+00> : vector<8x8xf32>
    %48 = tpu.matmul %46, %47, %cst_38 {dimension_numbers = #tpu.dot_dimension_numbers<[1], [0], [0], [1], [0, 0, 1, 1], [], []>} : vector<8x8xbf16>, vector<8x8xbf16>, vector<8x8xf32> -> vector<8x8xf32>
    %49 = arith.truncf %48 : vector<8x8xf32> to vector<8x8xbf16>
    %c0_39 = arith.constant 0 : index
    %c0_40 = arith.constant 0 : index
    %c0_41 = arith.constant 0 : index
    %c0_42 = arith.constant 0 : index
    %50 = vector.load %arg10[%c0_39, %c0_40, %c0_41, %c0_42] : memref<1x4x8x32xbf16, #tpu.memory_space<vmem>>, vector<1x1x8x32xbf16>
    %51 = vector.shape_cast %50 : vector<1x1x8x32xbf16> to vector<8x32xbf16>
    %cst_43 = arith.constant dense<0.000000e+00> : vector<8x32xf32>
    %52 = tpu.matmul %49, %51, %cst_43 {dimension_numbers = #tpu.dot_dimension_numbers<[1], [0], [0], [1], [0, 0, 1, 1], [], []>} : vector<8x8xbf16>, vector<8x32xbf16>, vector<8x32xf32> -> vector<8x32xf32>
    %53 = arith.addf %9, %52 : vector<8x32xf32>
    %c0_44 = arith.constant 0 : index
    %c1 = arith.constant 1 : index
    %c0_45 = arith.constant 0 : index
    %c0_46 = arith.constant 0 : index
    %54 = vector.load %arg4[%c0_44, %c1, %c0_45, %c0_46] : memref<1x4x32x8xbf16, #tpu.memory_space<vmem>>, vector<1x1x32x8xbf16>
    %55 = vector.shape_cast %54 : vector<1x1x32x8xbf16> to vector<32x8xbf16>
    %cst_47 = arith.constant dense<0.000000e+00> : vector<8x8xf32>
    %56 = tpu.matmul %7, %55, %cst_47 {dimension_numbers = #tpu.dot_dimension_numbers<[1], [0], [0], [1], [0, 0, 1, 1], [], []>} : vector<8x32xbf16>, vector<32x8xbf16>, vector<8x8xf32> -> vector<8x8xf32>
    %c0_48 = arith.constant 0 : index
    %c1_49 = arith.constant 1 : index
    %c0_50 = arith.constant 0 : index
    %c0_51 = arith.constant 0 : index
    %57 = vector.load %arg5[%c0_48, %c1_49, %c0_50, %c0_51] : memref<1x4x1x8xf32, #tpu.memory_space<vmem>>, vector<1x1x1x8xf32>
    %58 = vector.shape_cast %57 : vector<1x1x1x8xf32> to vector<1x8xf32>
    %59 = vector.broadcast %58 : vector<1x8xf32> to vector<8x8xf32>
    %60 = arith.addf %56, %59 : vector<8x8xf32>
    %cst_52 = arith.constant 0.353553385 : f32
    %61 = vector.broadcast %cst_52 : f32 to vector<8x8xf32>
    %62 = arith.mulf %60, %61 : vector<8x8xf32>
    %c0_53 = arith.constant 0 : index
    %c1_54 = arith.constant 1 : index
    %c0_55 = arith.constant 0 : index
    %c0_56 = arith.constant 0 : index
    %63 = vector.load %arg6[%c0_53, %c1_54, %c0_55, %c0_56] : memref<1x4x32x8xbf16, #tpu.memory_space<vmem>>, vector<1x1x32x8xbf16>
    %64 = vector.shape_cast %63 : vector<1x1x32x8xbf16> to vector<32x8xbf16>
    %cst_57 = arith.constant dense<0.000000e+00> : vector<8x8xf32>
    %65 = tpu.matmul %8, %64, %cst_57 {dimension_numbers = #tpu.dot_dimension_numbers<[1], [0], [0], [1], [0, 0, 1, 1], [], []>} : vector<8x32xbf16>, vector<32x8xbf16>, vector<8x8xf32> -> vector<8x8xf32>
    %c0_58 = arith.constant 0 : index
    %c1_59 = arith.constant 1 : index
    %c0_60 = arith.constant 0 : index
    %c0_61 = arith.constant 0 : index
    %66 = vector.load %arg7[%c0_58, %c1_59, %c0_60, %c0_61] : memref<1x4x1x8xf32, #tpu.memory_space<vmem>>, vector<1x1x1x8xf32>
    %67 = vector.shape_cast %66 : vector<1x1x1x8xf32> to vector<1x8xf32>
    %68 = vector.broadcast %67 : vector<1x8xf32> to vector<8x8xf32>
    %69 = arith.addf %65, %68 : vector<8x8xf32>
    %c0_62 = arith.constant 0 : index
    %c1_63 = arith.constant 1 : index
    %c0_64 = arith.constant 0 : index
    %c0_65 = arith.constant 0 : index
    %70 = vector.load %arg8[%c0_62, %c1_63, %c0_64, %c0_65] : memref<1x4x32x8xbf16, #tpu.memory_space<vmem>>, vector<1x1x32x8xbf16>
    %71 = vector.shape_cast %70 : vector<1x1x32x8xbf16> to vector<32x8xbf16>
    %cst_66 = arith.constant dense<0.000000e+00> : vector<8x8xf32>
    %72 = tpu.matmul %8, %71, %cst_66 {dimension_numbers = #tpu.dot_dimension_numbers<[1], [0], [0], [1], [0, 0, 1, 1], [], []>} : vector<8x32xbf16>, vector<32x8xbf16>, vector<8x8xf32> -> vector<8x8xf32>
    %c0_67 = arith.constant 0 : index
    %c1_68 = arith.constant 1 : index
    %c0_69 = arith.constant 0 : index
    %c0_70 = arith.constant 0 : index
    %73 = vector.load %arg9[%c0_67, %c1_68, %c0_69, %c0_70] : memref<1x4x1x8xf32, #tpu.memory_space<vmem>>, vector<1x1x1x8xf32>
    %74 = vector.shape_cast %73 : vector<1x1x1x8xf32> to vector<1x8xf32>
    %75 = vector.broadcast %74 : vector<1x8xf32> to vector<8x8xf32>
    %76 = arith.addf %72, %75 : vector<8x8xf32>
    %77 = arith.truncf %62 : vector<8x8xf32> to vector<8x8xbf16>
    %78 = arith.truncf %69 : vector<8x8xf32> to vector<8x8xbf16>
    %cst_71 = arith.constant dense<0.000000e+00> : vector<8x8xf32>
    %79 = tpu.matmul %77, %78, %cst_71 {dimension_numbers = #tpu.dot_dimension_numbers<[1], [1], [0], [0], [0, 0, 1, 0], [], []>} : vector<8x8xbf16>, vector<8x8xbf16>, vector<8x8xf32> -> vector<8x8xf32>
    %cst_72 = arith.constant dense<0xFF800000> : vector<8xf32>
    %80 = vector.multi_reduction <maximumf>, %79, %cst_72 [1] : vector<8x8xf32> to vector<8xf32>
    %81 = vector.shape_cast %80 : vector<8xf32> to vector<8x1xf32>
    %82 = vector.broadcast %81 : vector<8x1xf32> to vector<8x8xf32>
    %83 = arith.subf %79, %82 : vector<8x8xf32>
    %84 = math.exp %83 : vector<8x8xf32>
    %cst_73 = arith.constant dense<0.000000e+00> : vector<8xf32>
    %85 = vector.multi_reduction <add>, %84, %cst_73 [1] : vector<8x8xf32> to vector<8xf32>
    %86 = vector.shape_cast %85 : vector<8xf32> to vector<8x1xf32>
    %87 = tpu.reciprocal %86 {approx = true} : vector<8x1xf32> -> vector<8x1xf32>
    %88 = vector.broadcast %87 : vector<8x1xf32> to vector<8x8xf32>
    %89 = arith.mulf %84, %88 : vector<8x8xf32>
    %90 = arith.truncf %89 : vector<8x8xf32> to vector<8x8xbf16>
    %91 = arith.truncf %76 : vector<8x8xf32> to vector<8x8xbf16>
    %cst_74 = arith.constant dense<0.000000e+00> : vector<8x8xf32>
    %92 = tpu.matmul %90, %91, %cst_74 {dimension_numbers = #tpu.dot_dimension_numbers<[1], [0], [0], [1], [0, 0, 1, 1], [], []>} : vector<8x8xbf16>, vector<8x8xbf16>, vector<8x8xf32> -> vector<8x8xf32>
    %93 = arith.truncf %92 : vector<8x8xf32> to vector<8x8xbf16>
    %c0_75 = arith.constant 0 : index
    %c1_76 = arith.constant 1 : index
    %c0_77 = arith.constant 0 : index
    %c0_78 = arith.constant 0 : index
    %94 = vector.load %arg10[%c0_75, %c1_76, %c0_77, %c0_78] : memref<1x4x8x32xbf16, #tpu.memory_space<vmem>>, vector<1x1x8x32xbf16>
    %95 = vector.shape_cast %94 : vector<1x1x8x32xbf16> to vector<8x32xbf16>
    %cst_79 = arith.constant dense<0.000000e+00> : vector<8x32xf32>
    %96 = tpu.matmul %93, %95, %cst_79 {dimension_numbers = #tpu.dot_dimension_numbers<[1], [0], [0], [1], [0, 0, 1, 1], [], []>} : vector<8x8xbf16>, vector<8x32xbf16>, vector<8x32xf32> -> vector<8x32xf32>
    %97 = arith.addf %53, %96 : vector<8x32xf32>
    %c0_80 = arith.constant 0 : index
    %c2 = arith.constant 2 : index
    %c0_81 = arith.constant 0 : index
    %c0_82 = arith.constant 0 : index
    %98 = vector.load %arg4[%c0_80, %c2, %c0_81, %c0_82] : memref<1x4x32x8xbf16, #tpu.memory_space<vmem>>, vector<1x1x32x8xbf16>
    %99 = vector.shape_cast %98 : vector<1x1x32x8xbf16> to vector<32x8xbf16>
    %cst_83 = arith.constant dense<0.000000e+00> : vector<8x8xf32>
    %100 = tpu.matmul %7, %99, %cst_83 {dimension_numbers = #tpu.dot_dimension_numbers<[1], [0], [0], [1], [0, 0, 1, 1], [], []>} : vector<8x32xbf16>, vector<32x8xbf16>, vector<8x8xf32> -> vector<8x8xf32>
    %c0_84 = arith.constant 0 : index
    %c2_85 = arith.constant 2 : index
    %c0_86 = arith.constant 0 : index
    %c0_87 = arith.constant 0 : index
    %101 = vector.load %arg5[%c0_84, %c2_85, %c0_86, %c0_87] : memref<1x4x1x8xf32, #tpu.memory_space<vmem>>, vector<1x1x1x8xf32>
    %102 = vector.shape_cast %101 : vector<1x1x1x8xf32> to vector<1x8xf32>
    %103 = vector.broadcast %102 : vector<1x8xf32> to vector<8x8xf32>
    %104 = arith.addf %100, %103 : vector<8x8xf32>
    %cst_88 = arith.constant 0.353553385 : f32
    %105 = vector.broadcast %cst_88 : f32 to vector<8x8xf32>
    %106 = arith.mulf %104, %105 : vector<8x8xf32>
    %c0_89 = arith.constant 0 : index
    %c2_90 = arith.constant 2 : index
    %c0_91 = arith.constant 0 : index
    %c0_92 = arith.constant 0 : index
    %107 = vector.load %arg6[%c0_89, %c2_90, %c0_91, %c0_92] : memref<1x4x32x8xbf16, #tpu.memory_space<vmem>>, vector<1x1x32x8xbf16>
    %108 = vector.shape_cast %107 : vector<1x1x32x8xbf16> to vector<32x8xbf16>
    %cst_93 = arith.constant dense<0.000000e+00> : vector<8x8xf32>
    %109 = tpu.matmul %8, %108, %cst_93 {dimension_numbers = #tpu.dot_dimension_numbers<[1], [0], [0], [1], [0, 0, 1, 1], [], []>} : vector<8x32xbf16>, vector<32x8xbf16>, vector<8x8xf32> -> vector<8x8xf32>
    %c0_94 = arith.constant 0 : index
    %c2_95 = arith.constant 2 : index
    %c0_96 = arith.constant 0 : index
    %c0_97 = arith.constant 0 : index
    %110 = vector.load %arg7[%c0_94, %c2_95, %c0_96, %c0_97] : memref<1x4x1x8xf32, #tpu.memory_space<vmem>>, vector<1x1x1x8xf32>
    %111 = vector.shape_cast %110 : vector<1x1x1x8xf32> to vector<1x8xf32>
    %112 = vector.broadcast %111 : vector<1x8xf32> to vector<8x8xf32>
    %113 = arith.addf %109, %112 : vector<8x8xf32>
    %c0_98 = arith.constant 0 : index
    %c2_99 = arith.constant 2 : index
    %c0_100 = arith.constant 0 : index
    %c0_101 = arith.constant 0 : index
    %114 = vector.load %arg8[%c0_98, %c2_99, %c0_100, %c0_101] : memref<1x4x32x8xbf16, #tpu.memory_space<vmem>>, vector<1x1x32x8xbf16>
    %115 = vector.shape_cast %114 : vector<1x1x32x8xbf16> to vector<32x8xbf16>
    %cst_102 = arith.constant dense<0.000000e+00> : vector<8x8xf32>
    %116 = tpu.matmul %8, %115, %cst_102 {dimension_numbers = #tpu.dot_dimension_numbers<[1], [0], [0], [1], [0, 0, 1, 1], [], []>} : vector<8x32xbf16>, vector<32x8xbf16>, vector<8x8xf32> -> vector<8x8xf32>
    %c0_103 = arith.constant 0 : index
    %c2_104 = arith.constant 2 : index
    %c0_105 = arith.constant 0 : index
    %c0_106 = arith.constant 0 : index
    %117 = vector.load %arg9[%c0_103, %c2_104, %c0_105, %c0_106] : memref<1x4x1x8xf32, #tpu.memory_space<vmem>>, vector<1x1x1x8xf32>
    %118 = vector.shape_cast %117 : vector<1x1x1x8xf32> to vector<1x8xf32>
    %119 = vector.broadcast %118 : vector<1x8xf32> to vector<8x8xf32>
    %120 = arith.addf %116, %119 : vector<8x8xf32>
    %121 = arith.truncf %106 : vector<8x8xf32> to vector<8x8xbf16>
    %122 = arith.truncf %113 : vector<8x8xf32> to vector<8x8xbf16>
    %cst_107 = arith.constant dense<0.000000e+00> : vector<8x8xf32>
    %123 = tpu.matmul %121, %122, %cst_107 {dimension_numbers = #tpu.dot_dimension_numbers<[1], [1], [0], [0], [0, 0, 1, 0], [], []>} : vector<8x8xbf16>, vector<8x8xbf16>, vector<8x8xf32> -> vector<8x8xf32>
    %cst_108 = arith.constant dense<0xFF800000> : vector<8xf32>
    %124 = vector.multi_reduction <maximumf>, %123, %cst_108 [1] : vector<8x8xf32> to vector<8xf32>
    %125 = vector.shape_cast %124 : vector<8xf32> to vector<8x1xf32>
    %126 = vector.broadcast %125 : vector<8x1xf32> to vector<8x8xf32>
    %127 = arith.subf %123, %126 : vector<8x8xf32>
    %128 = math.exp %127 : vector<8x8xf32>
    %cst_109 = arith.constant dense<0.000000e+00> : vector<8xf32>
    %129 = vector.multi_reduction <add>, %128, %cst_109 [1] : vector<8x8xf32> to vector<8xf32>
    %130 = vector.shape_cast %129 : vector<8xf32> to vector<8x1xf32>
    %131 = tpu.reciprocal %130 {approx = true} : vector<8x1xf32> -> vector<8x1xf32>
    %132 = vector.broadcast %131 : vector<8x1xf32> to vector<8x8xf32>
    %133 = arith.mulf %128, %132 : vector<8x8xf32>
    %134 = arith.truncf %133 : vector<8x8xf32> to vector<8x8xbf16>
    %135 = arith.truncf %120 : vector<8x8xf32> to vector<8x8xbf16>
    %cst_110 = arith.constant dense<0.000000e+00> : vector<8x8xf32>
    %136 = tpu.matmul %134, %135, %cst_110 {dimension_numbers = #tpu.dot_dimension_numbers<[1], [0], [0], [1], [0, 0, 1, 1], [], []>} : vector<8x8xbf16>, vector<8x8xbf16>, vector<8x8xf32> -> vector<8x8xf32>
    %137 = arith.truncf %136 : vector<8x8xf32> to vector<8x8xbf16>
    %c0_111 = arith.constant 0 : index
    %c2_112 = arith.constant 2 : index
    %c0_113 = arith.constant 0 : index
    %c0_114 = arith.constant 0 : index
    %138 = vector.load %arg10[%c0_111, %c2_112, %c0_113, %c0_114] : memref<1x4x8x32xbf16, #tpu.memory_space<vmem>>, vector<1x1x8x32xbf16>
    %139 = vector.shape_cast %138 : vector<1x1x8x32xbf16> to vector<8x32xbf16>
    %cst_115 = arith.constant dense<0.000000e+00> : vector<8x32xf32>
    %140 = tpu.matmul %137, %139, %cst_115 {dimension_numbers = #tpu.dot_dimension_numbers<[1], [0], [0], [1], [0, 0, 1, 1], [], []>} : vector<8x8xbf16>, vector<8x32xbf16>, vector<8x32xf32> -> vector<8x32xf32>
    %141 = arith.addf %97, %140 : vector<8x32xf32>
    %c0_116 = arith.constant 0 : index
    %c3 = arith.constant 3 : index
    %c0_117 = arith.constant 0 : index
    %c0_118 = arith.constant 0 : index
    %142 = vector.load %arg4[%c0_116, %c3, %c0_117, %c0_118] : memref<1x4x32x8xbf16, #tpu.memory_space<vmem>>, vector<1x1x32x8xbf16>
    %143 = vector.shape_cast %142 : vector<1x1x32x8xbf16> to vector<32x8xbf16>
    %cst_119 = arith.constant dense<0.000000e+00> : vector<8x8xf32>
    %144 = tpu.matmul %7, %143, %cst_119 {dimension_numbers = #tpu.dot_dimension_numbers<[1], [0], [0], [1], [0, 0, 1, 1], [], []>} : vector<8x32xbf16>, vector<32x8xbf16>, vector<8x8xf32> -> vector<8x8xf32>
    %c0_120 = arith.constant 0 : index
    %c3_121 = arith.constant 3 : index
    %c0_122 = arith.constant 0 : index
    %c0_123 = arith.constant 0 : index
    %145 = vector.load %arg5[%c0_120, %c3_121, %c0_122, %c0_123] : memref<1x4x1x8xf32, #tpu.memory_space<vmem>>, vector<1x1x1x8xf32>
    %146 = vector.shape_cast %145 : vector<1x1x1x8xf32> to vector<1x8xf32>
    %147 = vector.broadcast %146 : vector<1x8xf32> to vector<8x8xf32>
    %148 = arith.addf %144, %147 : vector<8x8xf32>
    %cst_124 = arith.constant 0.353553385 : f32
    %149 = vector.broadcast %cst_124 : f32 to vector<8x8xf32>
    %150 = arith.mulf %148, %149 : vector<8x8xf32>
    %c0_125 = arith.constant 0 : index
    %c3_126 = arith.constant 3 : index
    %c0_127 = arith.constant 0 : index
    %c0_128 = arith.constant 0 : index
    %151 = vector.load %arg6[%c0_125, %c3_126, %c0_127, %c0_128] : memref<1x4x32x8xbf16, #tpu.memory_space<vmem>>, vector<1x1x32x8xbf16>
    %152 = vector.shape_cast %151 : vector<1x1x32x8xbf16> to vector<32x8xbf16>
    %cst_129 = arith.constant dense<0.000000e+00> : vector<8x8xf32>
    %153 = tpu.matmul %8, %152, %cst_129 {dimension_numbers = #tpu.dot_dimension_numbers<[1], [0], [0], [1], [0, 0, 1, 1], [], []>} : vector<8x32xbf16>, vector<32x8xbf16>, vector<8x8xf32> -> vector<8x8xf32>
    %c0_130 = arith.constant 0 : index
    %c3_131 = arith.constant 3 : index
    %c0_132 = arith.constant 0 : index
    %c0_133 = arith.constant 0 : index
    %154 = vector.load %arg7[%c0_130, %c3_131, %c0_132, %c0_133] : memref<1x4x1x8xf32, #tpu.memory_space<vmem>>, vector<1x1x1x8xf32>
    %155 = vector.shape_cast %154 : vector<1x1x1x8xf32> to vector<1x8xf32>
    %156 = vector.broadcast %155 : vector<1x8xf32> to vector<8x8xf32>
    %157 = arith.addf %153, %156 : vector<8x8xf32>
    %c0_134 = arith.constant 0 : index
    %c3_135 = arith.constant 3 : index
    %c0_136 = arith.constant 0 : index
    %c0_137 = arith.constant 0 : index
    %158 = vector.load %arg8[%c0_134, %c3_135, %c0_136, %c0_137] : memref<1x4x32x8xbf16, #tpu.memory_space<vmem>>, vector<1x1x32x8xbf16>
    %159 = vector.shape_cast %158 : vector<1x1x32x8xbf16> to vector<32x8xbf16>
    %cst_138 = arith.constant dense<0.000000e+00> : vector<8x8xf32>
    %160 = tpu.matmul %8, %159, %cst_138 {dimension_numbers = #tpu.dot_dimension_numbers<[1], [0], [0], [1], [0, 0, 1, 1], [], []>} : vector<8x32xbf16>, vector<32x8xbf16>, vector<8x8xf32> -> vector<8x8xf32>
    %c0_139 = arith.constant 0 : index
    %c3_140 = arith.constant 3 : index
    %c0_141 = arith.constant 0 : index
    %c0_142 = arith.constant 0 : index
    %161 = vector.load %arg9[%c0_139, %c3_140, %c0_141, %c0_142] : memref<1x4x1x8xf32, #tpu.memory_space<vmem>>, vector<1x1x1x8xf32>
    %162 = vector.shape_cast %161 : vector<1x1x1x8xf32> to vector<1x8xf32>
    %163 = vector.broadcast %162 : vector<1x8xf32> to vector<8x8xf32>
    %164 = arith.addf %160, %163 : vector<8x8xf32>
    %165 = arith.truncf %150 : vector<8x8xf32> to vector<8x8xbf16>
    %166 = arith.truncf %157 : vector<8x8xf32> to vector<8x8xbf16>
    %cst_143 = arith.constant dense<0.000000e+00> : vector<8x8xf32>
    %167 = tpu.matmul %165, %166, %cst_143 {dimension_numbers = #tpu.dot_dimension_numbers<[1], [1], [0], [0], [0, 0, 1, 0], [], []>} : vector<8x8xbf16>, vector<8x8xbf16>, vector<8x8xf32> -> vector<8x8xf32>
    %cst_144 = arith.constant dense<0xFF800000> : vector<8xf32>
    %168 = vector.multi_reduction <maximumf>, %167, %cst_144 [1] : vector<8x8xf32> to vector<8xf32>
    %169 = vector.shape_cast %168 : vector<8xf32> to vector<8x1xf32>
    %170 = vector.broadcast %169 : vector<8x1xf32> to vector<8x8xf32>
    %171 = arith.subf %167, %170 : vector<8x8xf32>
    %172 = math.exp %171 : vector<8x8xf32>
    %cst_145 = arith.constant dense<0.000000e+00> : vector<8xf32>
    %173 = vector.multi_reduction <add>, %172, %cst_145 [1] : vector<8x8xf32> to vector<8xf32>
    %174 = vector.shape_cast %173 : vector<8xf32> to vector<8x1xf32>
    %175 = tpu.reciprocal %174 {approx = true} : vector<8x1xf32> -> vector<8x1xf32>
    %176 = vector.broadcast %175 : vector<8x1xf32> to vector<8x8xf32>
    %177 = arith.mulf %172, %176 : vector<8x8xf32>
    %178 = arith.truncf %177 : vector<8x8xf32> to vector<8x8xbf16>
    %179 = arith.truncf %164 : vector<8x8xf32> to vector<8x8xbf16>
    %cst_146 = arith.constant dense<0.000000e+00> : vector<8x8xf32>
    %180 = tpu.matmul %178, %179, %cst_146 {dimension_numbers = #tpu.dot_dimension_numbers<[1], [0], [0], [1], [0, 0, 1, 1], [], []>} : vector<8x8xbf16>, vector<8x8xbf16>, vector<8x8xf32> -> vector<8x8xf32>
    %181 = arith.truncf %180 : vector<8x8xf32> to vector<8x8xbf16>
    %c0_147 = arith.constant 0 : index
    %c3_148 = arith.constant 3 : index
    %c0_149 = arith.constant 0 : index
    %c0_150 = arith.constant 0 : index
    %182 = vector.load %arg10[%c0_147, %c3_148, %c0_149, %c0_150] : memref<1x4x8x32xbf16, #tpu.memory_space<vmem>>, vector<1x1x8x32xbf16>
    %183 = vector.shape_cast %182 : vector<1x1x8x32xbf16> to vector<8x32xbf16>
    %cst_151 = arith.constant dense<0.000000e+00> : vector<8x32xf32>
    %184 = tpu.matmul %181, %183, %cst_151 {dimension_numbers = #tpu.dot_dimension_numbers<[1], [0], [0], [1], [0, 0, 1, 1], [], []>} : vector<8x8xbf16>, vector<8x32xbf16>, vector<8x32xf32> -> vector<8x32xf32>
    %185 = arith.addf %141, %184 : vector<8x32xf32>
    %c0_152 = arith.constant 0 : index
    %c0_153 = arith.constant 0 : index
    %186 = vector.load %arg15[%c0_152, %c0_153] : memref<8x32xf32, #tpu.memory_space<vmem>>, vector<8x32xf32>
    %c0_154 = arith.constant 0 : index
    %c0_155 = arith.constant 0 : index
    %c0_156 = arith.constant 0 : index
    %187 = vector.load %arg11[%c0_154, %c0_155, %c0_156] : memref<1x1x32xf32, #tpu.memory_space<vmem>>, vector<1x1x32xf32>
    %188 = vector.shape_cast %187 : vector<1x1x32xf32> to vector<1x32xf32>
    %189 = vector.broadcast %188 : vector<1x32xf32> to vector<8x32xf32>
    %190 = arith.addf %185, %189 : vector<8x32xf32>
    %191 = arith.addf %186, %190 : vector<8x32xf32>
    %c0_157 = arith.constant 0 : index
    %c0_158 = arith.constant 0 : index
    %192 = vector.load %arg15[%c0_157, %c0_158] : memref<8x32xf32, #tpu.memory_space<vmem>>, vector<8x32xf32>
    tpu.vector_store %arg15[%c0_157, %c0_158], %191 {strides = array<i32>} : memref<8x32xf32, #tpu.memory_space<vmem>>, vector<8x32xf32>,
    %c0_i32_159 = arith.constant 0 : i32
    %193 = arith.cmpi eq, %arg1, %c0_i32_159 : i32
    %194 = arith.extui %193 : i1 to i32
    %c0_i32_160 = arith.constant 0 : i32
    %195 = arith.cmpi ne, %194, %c0_i32_160 : i32
    scf.if %195 {
      %c0_161 = arith.constant 0 : index
      %c0_162 = arith.constant 0 : index
      %196 = vector.load %arg15[%c0_161, %c0_162] : memref<8x32xf32, #tpu.memory_space<vmem>>, vector<8x32xf32>
      %197 = arith.addf %4, %196 : vector<8x32xf32>
      %cst_163 = arith.constant dense<0.000000e+00> : vector<8xf32>
      %198 = vector.multi_reduction <add>, %197, %cst_163 [1] : vector<8x32xf32> to vector<8xf32>
      %199 = vector.shape_cast %198 : vector<8xf32> to vector<8x1xf32>
      %cst_164 = arith.constant 3.200000e+01 : f32
      %200 = vector.broadcast %cst_164 : f32 to vector<8x1xf32>
      %201 = arith.divf %199, %200 : vector<8x1xf32>
      %202 = vector.broadcast %201 : vector<8x1xf32> to vector<8x32xf32>
      %203 = arith.subf %197, %202 : vector<8x32xf32>
      %204 = arith.mulf %203, %203 : vector<8x32xf32>
      %cst_165 = arith.constant dense<0.000000e+00> : vector<8xf32>
      %205 = vector.multi_reduction <add>, %204, %cst_165 [1] : vector<8x32xf32> to vector<8xf32>
      %206 = vector.shape_cast %205 : vector<8xf32> to vector<8x1xf32>
      %cst_166 = arith.constant 3.200000e+01 : f32
      %207 = vector.broadcast %cst_166 : f32 to vector<8x1xf32>
      %208 = arith.divf %206, %207 : vector<8x1xf32>
      %cst_167 = arith.constant 9.99999974E-6 : f32
      %209 = vector.broadcast %cst_167 : f32 to vector<8x1xf32>
      %210 = arith.addf %208, %209 : vector<8x1xf32>
      %211 = math.rsqrt %210 : vector<8x1xf32>
      %212 = vector.broadcast %211 : vector<8x1xf32> to vector<8x32xf32>
      %213 = arith.mulf %203, %212 : vector<8x32xf32>
      %c0_168 = arith.constant 0 : index
      %c0_169 = arith.constant 0 : index
      %214 = vector.load %arg12[%c0_168, %c0_169] : memref<1x32xf32, #tpu.memory_space<vmem>>, vector<1x32xf32>
      %215 = vector.broadcast %214 : vector<1x32xf32> to vector<8x32xf32>
      %216 = arith.mulf %213, %215 : vector<8x32xf32>
      %c0_170 = arith.constant 0 : index
      %c0_171 = arith.constant 0 : index
      %217 = vector.load %arg13[%c0_170, %c0_171] : memref<1x32xf32, #tpu.memory_space<vmem>>, vector<1x32xf32>
      %218 = vector.broadcast %217 : vector<1x32xf32> to vector<8x32xf32>
      %219 = arith.addf %216, %218 : vector<8x32xf32>
      %c0_172 = arith.constant 0 : index
      %c0_173 = arith.constant 0 : index
      %c0_174 = arith.constant 0 : index
      %220 = vector.load %arg14[%c0_172, %c0_173, %c0_174] : memref<1x8x32xf32, #tpu.memory_space<vmem>>, vector<1x8x32xf32>
      %221 = vector.shape_cast %220 : vector<1x8x32xf32> to vector<8x32xf32>
      %222 = vector.shape_cast %219 : vector<8x32xf32> to vector<1x8x32xf32>
      tpu.vector_store %arg14[%c0_172, %c0_173, %c0_174], %222 {strides = array<i32>} : memref<1x8x32xf32, #tpu.memory_space<vmem>>, vector<1x8x32xf32>,
    } else {
    }
    return
  }
  func.func @transform_0(%arg0: i32, %arg1: i32) -> (i32, i32, i32) {
    %c0_i32 = arith.constant 0 : i32
    %c0_i32_0 = arith.constant 0 : i32
    %c0_i32_1 = arith.constant 0 : i32
    return %arg0, %c0_i32, %c0_i32_0 : i32, i32, i32
  }
  func.func @transform_1(%arg0: i32, %arg1: i32) -> (i32, i32, i32, i32) {
    %c0_i32 = arith.constant 0 : i32
    %c0_i32_0 = arith.constant 0 : i32
    %c0_i32_1 = arith.constant 0 : i32
    return %arg1, %arg0, %c0_i32, %c0_i32_0 : i32, i32, i32, i32
  }
  func.func @transform_2(%arg0: i32, %arg1: i32) -> (i32, i32, i32, i32) {
    %c0_i32 = arith.constant 0 : i32
    %c0_i32_0 = arith.constant 0 : i32
    %c0_i32_1 = arith.constant 0 : i32
    %c0_i32_2 = arith.constant 0 : i32
    return %arg1, %c0_i32, %c0_i32_0, %c0_i32_1 : i32, i32, i32, i32
  }
  func.func @transform_3(%arg0: i32, %arg1: i32) -> (i32, i32, i32, i32) {
    %c0_i32 = arith.constant 0 : i32
    %c0_i32_0 = arith.constant 0 : i32
    %c0_i32_1 = arith.constant 0 : i32
    %c0_i32_2 = arith.constant 0 : i32
    return %arg1, %c0_i32, %c0_i32_0, %c0_i32_1 : i32, i32, i32, i32
  }
  func.func @transform_4(%arg0: i32, %arg1: i32) -> (i32, i32, i32, i32) {
    %c0_i32 = arith.constant 0 : i32
    %c0_i32_0 = arith.constant 0 : i32
    %c0_i32_1 = arith.constant 0 : i32
    %c0_i32_2 = arith.constant 0 : i32
    return %arg1, %c0_i32, %c0_i32_0, %c0_i32_1 : i32, i32, i32, i32
  }
  func.func @transform_5(%arg0: i32, %arg1: i32) -> (i32, i32, i32, i32) {
    %c0_i32 = arith.constant 0 : i32
    %c0_i32_0 = arith.constant 0 : i32
    %c0_i32_1 = arith.constant 0 : i32
    %c0_i32_2 = arith.constant 0 : i32
    return %arg1, %c0_i32, %c0_i32_0, %c0_i32_1 : i32, i32, i32, i32
  }
  func.func @transform_6(%arg0: i32, %arg1: i32) -> (i32, i32, i32, i32) {
    %c0_i32 = arith.constant 0 : i32
    %c0_i32_0 = arith.constant 0 : i32
    %c0_i32_1 = arith.constant 0 : i32
    %c0_i32_2 = arith.constant 0 : i32
    return %arg1, %c0_i32, %c0_i32_0, %c0_i32_1 : i32, i32, i32, i32
  }
  func.func @transform_7(%arg0: i32, %arg1: i32) -> (i32, i32, i32, i32) {
    %c0_i32 = arith.constant 0 : i32
    %c0_i32_0 = arith.constant 0 : i32
    %c0_i32_1 = arith.constant 0 : i32
    %c0_i32_2 = arith.constant 0 : i32
    return %arg1, %c0_i32, %c0_i32_0, %c0_i32_1 : i32, i32, i32, i32
  }
  func.func @transform_8(%arg0: i32, %arg1: i32) -> (i32, i32, i32, i32) {
    %c0_i32 = arith.constant 0 : i32
    %c0_i32_0 = arith.constant 0 : i32
    %c0_i32_1 = arith.constant 0 : i32
    %c0_i32_2 = arith.constant 0 : i32
    return %arg1, %c0_i32, %c0_i32_0, %c0_i32_1 : i32, i32, i32, i32
  }
  func.func @transform_9(%arg0: i32, %arg1: i32) -> (i32, i32, i32) {
    %c0_i32 = arith.constant 0 : i32
    %c0_i32_0 = arith.constant 0 : i32
    %c0_i32_1 = arith.constant 0 : i32
    return %arg1, %c0_i32, %c0_i32_0 : i32, i32, i32
  }
  func.func @transform_10(%arg0: i32, %arg1: i32) -> (i32, i32) {
    %c0_i32 = arith.constant 0 : i32
    %c0_i32_0 = arith.constant 0 : i32
    %c0_i32_1 = arith.constant 0 : i32
    return %c0_i32, %c0_i32_0 : i32, i32
  }
  func.func @transform_11(%arg0: i32, %arg1: i32) -> (i32, i32) {
    %c0_i32 = arith.constant 0 : i32
    %c0_i32_0 = arith.constant 0 : i32
    %c0_i32_1 = arith.constant 0 : i32
    return %c0_i32, %c0_i32_0 : i32, i32
  }
  func.func @transform_12(%arg0: i32, %arg1: i32) -> (i32, i32, i32) {
    %c0_i32 = arith.constant 0 : i32
    %c0_i32_0 = arith.constant 0 : i32
    %c0_i32_1 = arith.constant 0 : i32
    return %arg0, %c0_i32, %c0_i32_0 : i32, i32, i32
  }
}

module attributes {stable_mosaic.version = 11 : i64} {
  func.func @kernel(%arg0: i32, %arg1: i32, %arg2: memref<1x8x32xf32, #tpu.memory_space<vmem>>, %arg3: memref<1x1x8x32xf32, #tpu.memory_space<vmem>>, %arg4: memref<1x4x32x8xbf16, #tpu.memory_space<vmem>>, %arg5: memref<1x4x1x8xf32, #tpu.memory_space<vmem>>, %arg6: memref<1x4x32x8xbf16, #tpu.memory_space<vmem>>, %arg7: memref<1x4x1x8xf32, #tpu.memory_space<vmem>>, %arg8: memref<1x4x32x8xbf16, #tpu.memory_space<vmem>>, %arg9: memref<1x4x1x8xf32, #tpu.memory_space<vmem>>, %arg10: memref<1x4x8x32xbf16, #tpu.memory_space<vmem>>, %arg11: memref<1x1x32xf32, #tpu.memory_space<vmem>>, %arg12: memref<1x32xf32, #tpu.memory_space<vmem>>, %arg13: memref<1x32xf32, #tpu.memory_space<vmem>>, %arg14: memref<1x8x32xf32, #tpu.memory_space<vmem>>, %arg15: memref<8x32xf32, #tpu.memory_space<vmem>>) attributes {dimension_semantics = [#tpu.dimension_semantics<parallel>, #tpu.dimension_semantics<arbitrary>], iteration_bounds = array<i64: 2, 2>, scalar_prefetch = 0 : i64, scratch_operands = 1 : i64, tpu.core_type = #tpu.core_type<tc>, window_params = [{transform_indices = @transform_0, window_bounds = array<i64: 1, 8, 32>}, {transform_indices = @transform_1, window_bounds = array<i64: 1, 1, 8, 32>}, {transform_indices = @transform_2, window_bounds = array<i64: 1, 4, 32, 8>}, {transform_indices = @transform_3, window_bounds = array<i64: 1, 4, 1, 8>}, {transform_indices = @transform_4, window_bounds = array<i64: 1, 4, 32, 8>}, {transform_indices = @transform_5, window_bounds = array<i64: 1, 4, 1, 8>}, {transform_indices = @transform_6, window_bounds = array<i64: 1, 4, 32, 8>}, {transform_indices = @transform_7, window_bounds = array<i64: 1, 4, 1, 8>}, {transform_indices = @transform_8, window_bounds = array<i64: 1, 4, 8, 32>}, {transform_indices = @transform_9, window_bounds = array<i64: 1, 1, 32>}, {pipeline_mode = #tpu.pipeline_mode<synchronous>, transform_indices = @transform_10, window_bounds = array<i64: 1, 32>}, {pipeline_mode = #tpu.pipeline_mode<synchronous>, transform_indices = @transform_11, window_bounds = array<i64: 1, 32>}, {transform_indices = @transform_12, window_bounds = array<i64: 1, 8, 32>}]} {
    %c0_i32 = arith.constant 0 : i32
    %0 = arith.cmpi eq, %arg1, %c0_i32 : i32
    %1 = arith.extui %0 : i1 to i32
    %c0_i32_0 = arith.constant 0 : i32
    %2 = arith.cmpi ne, %1, %c0_i32_0 : i32
    scf.if %2 {
      %cst_160 = arith.constant 0.000000e+00 : f32
      %196 = vector.broadcast %cst_160 : f32 to vector<8x32xf32>
      %c0_161 = arith.constant 0 : index
      %c0_162 = arith.constant 0 : index
      %197 = vector.load %arg15[%c0_161, %c0_162] : memref<8x32xf32, #tpu.memory_space<vmem>>, vector<8x32xf32>
      tpu.vector_store %arg15[%c0_161, %c0_162], %196 {strides = array<i32>} : memref<8x32xf32, #tpu.memory_space<vmem>>, vector<8x32xf32>,
    } else {
    }
    %c0 = arith.constant 0 : index
    %c0_1 = arith.constant 0 : index
    %c0_2 = arith.constant 0 : index
    %3 = vector.load %arg2[%c0, %c0_1, %c0_2] : memref<1x8x32xf32, #tpu.memory_space<vmem>>, vector<1x8x32xf32>
    %4 = vector.shape_cast %3 : vector<1x8x32xf32> to vector<8x32xf32>
    %c0_3 = arith.constant 0 : index
    %c0_4 = arith.constant 0 : index
    %c0_5 = arith.constant 0 : index
    %c0_6 = arith.constant 0 : index
    %5 = vector.load %arg3[%c0_3, %c0_4, %c0_5, %c0_6] : memref<1x1x8x32xf32, #tpu.memory_space<vmem>>, vector<1x1x8x32xf32>
    %6 = vector.shape_cast %5 : vector<1x1x8x32xf32> to vector<8x32xf32>
    %7 = arith.truncf %4 : vector<8x32xf32> to vector<8x32xbf16>
    %8 = arith.truncf %6 : vector<8x32xf32> to vector<8x32xbf16>
    %cst = arith.constant 0.000000e+00 : f32
    %9 = vector.broadcast %cst : f32 to vector<8x32xf32>
    %c0_7 = arith.constant 0 : index
    %c0_8 = arith.constant 0 : index
    %c0_9 = arith.constant 0 : index
    %c0_10 = arith.constant 0 : index
    %10 = vector.load %arg4[%c0_7, %c0_8, %c0_9, %c0_10] : memref<1x4x32x8xbf16, #tpu.memory_space<vmem>>, vector<1x1x32x8xbf16>
    %11 = vector.shape_cast %10 : vector<1x1x32x8xbf16> to vector<32x8xbf16>
    %cst_11 = arith.constant dense<0.000000e+00> : vector<8x8xf32>
    %12 = tpu.matmul %7, %11, %cst_11 {dimension_numbers = #tpu.dot_dimension_numbers<[1], [0], [0], [1], [0, 0, 1, 1], [], []>} : vector<8x32xbf16>, vector<32x8xbf16>, vector<8x8xf32> -> vector<8x8xf32>
    %c0_12 = arith.constant 0 : index
    %c0_13 = arith.constant 0 : index
    %c0_14 = arith.constant 0 : index
    %c0_15 = arith.constant 0 : index
    %13 = vector.load %arg5[%c0_12, %c0_13, %c0_14, %c0_15] : memref<1x4x1x8xf32, #tpu.memory_space<vmem>>, vector<1x1x1x8xf32>
    %14 = vector.shape_cast %13 : vector<1x1x1x8xf32> to vector<1x8xf32>
    %15 = vector.broadcast %14 : vector<1x8xf32> to vector<8x8xf32>
    %16 = arith.addf %12, %15 : vector<8x8xf32>
    %cst_16 = arith.constant 0.353553385 : f32
    %17 = vector.broadcast %cst_16 : f32 to vector<8x8xf32>
    %18 = arith.mulf %16, %17 : vector<8x8xf32>
    %c0_17 = arith.constant 0 : index
    %c0_18 = arith.constant 0 : index
    %c0_19 = arith.constant 0 : index
    %c0_20 = arith.constant 0 : index
    %19 = vector.load %arg6[%c0_17, %c0_18, %c0_19, %c0_20] : memref<1x4x32x8xbf16, #tpu.memory_space<vmem>>, vector<1x1x32x8xbf16>
    %20 = vector.shape_cast %19 : vector<1x1x32x8xbf16> to vector<32x8xbf16>
    %cst_21 = arith.constant dense<0.000000e+00> : vector<8x8xf32>
    %21 = tpu.matmul %8, %20, %cst_21 {dimension_numbers = #tpu.dot_dimension_numbers<[1], [0], [0], [1], [0, 0, 1, 1], [], []>} : vector<8x32xbf16>, vector<32x8xbf16>, vector<8x8xf32> -> vector<8x8xf32>
    %c0_22 = arith.constant 0 : index
    %c0_23 = arith.constant 0 : index
    %c0_24 = arith.constant 0 : index
    %c0_25 = arith.constant 0 : index
    %22 = vector.load %arg7[%c0_22, %c0_23, %c0_24, %c0_25] : memref<1x4x1x8xf32, #tpu.memory_space<vmem>>, vector<1x1x1x8xf32>
    %23 = vector.shape_cast %22 : vector<1x1x1x8xf32> to vector<1x8xf32>
    %24 = vector.broadcast %23 : vector<1x8xf32> to vector<8x8xf32>
    %25 = arith.addf %21, %24 : vector<8x8xf32>
    %c0_26 = arith.constant 0 : index
    %c0_27 = arith.constant 0 : index
    %c0_28 = arith.constant 0 : index
    %c0_29 = arith.constant 0 : index
    %26 = vector.load %arg8[%c0_26, %c0_27, %c0_28, %c0_29] : memref<1x4x32x8xbf16, #tpu.memory_space<vmem>>, vector<1x1x32x8xbf16>
    %27 = vector.shape_cast %26 : vector<1x1x32x8xbf16> to vector<32x8xbf16>
    %cst_30 = arith.constant dense<0.000000e+00> : vector<8x8xf32>
    %28 = tpu.matmul %8, %27, %cst_30 {dimension_numbers = #tpu.dot_dimension_numbers<[1], [0], [0], [1], [0, 0, 1, 1], [], []>} : vector<8x32xbf16>, vector<32x8xbf16>, vector<8x8xf32> -> vector<8x8xf32>
    %c0_31 = arith.constant 0 : index
    %c0_32 = arith.constant 0 : index
    %c0_33 = arith.constant 0 : index
    %c0_34 = arith.constant 0 : index
    %29 = vector.load %arg9[%c0_31, %c0_32, %c0_33, %c0_34] : memref<1x4x1x8xf32, #tpu.memory_space<vmem>>, vector<1x1x1x8xf32>
    %30 = vector.shape_cast %29 : vector<1x1x1x8xf32> to vector<1x8xf32>
    %31 = vector.broadcast %30 : vector<1x8xf32> to vector<8x8xf32>
    %32 = arith.addf %28, %31 : vector<8x8xf32>
    %33 = arith.truncf %18 : vector<8x8xf32> to vector<8x8xbf16>
    %34 = arith.truncf %25 : vector<8x8xf32> to vector<8x8xbf16>
    %cst_35 = arith.constant dense<0.000000e+00> : vector<8x8xf32>
    %35 = tpu.matmul %33, %34, %cst_35 {dimension_numbers = #tpu.dot_dimension_numbers<[1], [1], [0], [0], [0, 0, 1, 0], [], []>} : vector<8x8xbf16>, vector<8x8xbf16>, vector<8x8xf32> -> vector<8x8xf32>
    %cst_36 = arith.constant dense<0xFF800000> : vector<8xf32>
    %36 = vector.multi_reduction <maximumf>, %35, %cst_36 [1] : vector<8x8xf32> to vector<8xf32>
    %37 = vector.shape_cast %36 : vector<8xf32> to vector<8x1xf32>
    %38 = vector.broadcast %37 : vector<8x1xf32> to vector<8x8xf32>
    %39 = arith.subf %35, %38 : vector<8x8xf32>
    %40 = math.exp %39 : vector<8x8xf32>
    %cst_37 = arith.constant dense<0.000000e+00> : vector<8xf32>
    %41 = vector.multi_reduction <add>, %40, %cst_37 [1] : vector<8x8xf32> to vector<8xf32>
    %42 = vector.shape_cast %41 : vector<8xf32> to vector<8x1xf32>
    %43 = tpu.reciprocal %42 {approx = true} : vector<8x1xf32> -> vector<8x1xf32>
    %44 = vector.broadcast %43 : vector<8x1xf32> to vector<8x8xf32>
    %45 = arith.mulf %40, %44 : vector<8x8xf32>
    %46 = arith.truncf %45 : vector<8x8xf32> to vector<8x8xbf16>
    %47 = arith.truncf %32 : vector<8x8xf32> to vector<8x8xbf16>
    %cst_38 = arith.constant dense<0.000000e+00> : vector<8x8xf32>
    %48 = tpu.matmul %46, %47, %cst_38 {dimension_numbers = #tpu.dot_dimension_numbers<[1], [0], [0], [1], [0, 0, 1, 1], [], []>} : vector<8x8xbf16>, vector<8x8xbf16>, vector<8x8xf32> -> vector<8x8xf32>
    %49 = arith.truncf %48 : vector<8x8xf32> to vector<8x8xbf16>
    %c0_39 = arith.constant 0 : index
    %c0_40 = arith.constant 0 : index
    %c0_41 = arith.constant 0 : index
    %c0_42 = arith.constant 0 : index
    %50 = vector.load %arg10[%c0_39, %c0_40, %c0_41, %c0_42] : memref<1x4x8x32xbf16, #tpu.memory_space<vmem>>, vector<1x1x8x32xbf16>
    %51 = vector.shape_cast %50 : vector<1x1x8x32xbf16> to vector<8x32xbf16>
    %cst_43 = arith.constant dense<0.000000e+00> : vector<8x32xf32>
    %52 = tpu.matmul %49, %51, %cst_43 {dimension_numbers = #tpu.dot_dimension_numbers<[1], [0], [0], [1], [0, 0, 1, 1], [], []>} : vector<8x8xbf16>, vector<8x32xbf16>, vector<8x32xf32> -> vector<8x32xf32>
    %53 = arith.addf %9, %52 : vector<8x32xf32>
    %c0_44 = arith.constant 0 : index
    %c1 = arith.constant 1 : index
    %c0_45 = arith.constant 0 : index
    %c0_46 = arith.constant 0 : index
    %54 = vector.load %arg4[%c0_44, %c1, %c0_45, %c0_46] : memref<1x4x32x8xbf16, #tpu.memory_space<vmem>>, vector<1x1x32x8xbf16>
    %55 = vector.shape_cast %54 : vector<1x1x32x8xbf16> to vector<32x8xbf16>
    %cst_47 = arith.constant dense<0.000000e+00> : vector<8x8xf32>
    %56 = tpu.matmul %7, %55, %cst_47 {dimension_numbers = #tpu.dot_dimension_numbers<[1], [0], [0], [1], [0, 0, 1, 1], [], []>} : vector<8x32xbf16>, vector<32x8xbf16>, vector<8x8xf32> -> vector<8x8xf32>
    %c0_48 = arith.constant 0 : index
    %c1_49 = arith.constant 1 : index
    %c0_50 = arith.constant 0 : index
    %c0_51 = arith.constant 0 : index
    %57 = vector.load %arg5[%c0_48, %c1_49, %c0_50, %c0_51] : memref<1x4x1x8xf32, #tpu.memory_space<vmem>>, vector<1x1x1x8xf32>
    %58 = vector.shape_cast %57 : vector<1x1x1x8xf32> to vector<1x8xf32>
    %59 = vector.broadcast %58 : vector<1x8xf32> to vector<8x8xf32>
    %60 = arith.addf %56, %59 : vector<8x8xf32>
    %cst_52 = arith.constant 0.353553385 : f32
    %61 = vector.broadcast %cst_52 : f32 to vector<8x8xf32>
    %62 = arith.mulf %60, %61 : vector<8x8xf32>
    %c0_53 = arith.constant 0 : index
    %c1_54 = arith.constant 1 : index
    %c0_55 = arith.constant 0 : index
    %c0_56 = arith.constant 0 : index
    %63 = vector.load %arg6[%c0_53, %c1_54, %c0_55, %c0_56] : memref<1x4x32x8xbf16, #tpu.memory_space<vmem>>, vector<1x1x32x8xbf16>
    %64 = vector.shape_cast %63 : vector<1x1x32x8xbf16> to vector<32x8xbf16>
    %cst_57 = arith.constant dense<0.000000e+00> : vector<8x8xf32>
    %65 = tpu.matmul %8, %64, %cst_57 {dimension_numbers = #tpu.dot_dimension_numbers<[1], [0], [0], [1], [0, 0, 1, 1], [], []>} : vector<8x32xbf16>, vector<32x8xbf16>, vector<8x8xf32> -> vector<8x8xf32>
    %c0_58 = arith.constant 0 : index
    %c1_59 = arith.constant 1 : index
    %c0_60 = arith.constant 0 : index
    %c0_61 = arith.constant 0 : index
    %66 = vector.load %arg7[%c0_58, %c1_59, %c0_60, %c0_61] : memref<1x4x1x8xf32, #tpu.memory_space<vmem>>, vector<1x1x1x8xf32>
    %67 = vector.shape_cast %66 : vector<1x1x1x8xf32> to vector<1x8xf32>
    %68 = vector.broadcast %67 : vector<1x8xf32> to vector<8x8xf32>
    %69 = arith.addf %65, %68 : vector<8x8xf32>
    %c0_62 = arith.constant 0 : index
    %c1_63 = arith.constant 1 : index
    %c0_64 = arith.constant 0 : index
    %c0_65 = arith.constant 0 : index
    %70 = vector.load %arg8[%c0_62, %c1_63, %c0_64, %c0_65] : memref<1x4x32x8xbf16, #tpu.memory_space<vmem>>, vector<1x1x32x8xbf16>
    %71 = vector.shape_cast %70 : vector<1x1x32x8xbf16> to vector<32x8xbf16>
    %cst_66 = arith.constant dense<0.000000e+00> : vector<8x8xf32>
    %72 = tpu.matmul %8, %71, %cst_66 {dimension_numbers = #tpu.dot_dimension_numbers<[1], [0], [0], [1], [0, 0, 1, 1], [], []>} : vector<8x32xbf16>, vector<32x8xbf16>, vector<8x8xf32> -> vector<8x8xf32>
    %c0_67 = arith.constant 0 : index
    %c1_68 = arith.constant 1 : index
    %c0_69 = arith.constant 0 : index
    %c0_70 = arith.constant 0 : index
    %73 = vector.load %arg9[%c0_67, %c1_68, %c0_69, %c0_70] : memref<1x4x1x8xf32, #tpu.memory_space<vmem>>, vector<1x1x1x8xf32>
    %74 = vector.shape_cast %73 : vector<1x1x1x8xf32> to vector<1x8xf32>
    %75 = vector.broadcast %74 : vector<1x8xf32> to vector<8x8xf32>
    %76 = arith.addf %72, %75 : vector<8x8xf32>
    %77 = arith.truncf %62 : vector<8x8xf32> to vector<8x8xbf16>
    %78 = arith.truncf %69 : vector<8x8xf32> to vector<8x8xbf16>
    %cst_71 = arith.constant dense<0.000000e+00> : vector<8x8xf32>
    %79 = tpu.matmul %77, %78, %cst_71 {dimension_numbers = #tpu.dot_dimension_numbers<[1], [1], [0], [0], [0, 0, 1, 0], [], []>} : vector<8x8xbf16>, vector<8x8xbf16>, vector<8x8xf32> -> vector<8x8xf32>
    %cst_72 = arith.constant dense<0xFF800000> : vector<8xf32>
    %80 = vector.multi_reduction <maximumf>, %79, %cst_72 [1] : vector<8x8xf32> to vector<8xf32>
    %81 = vector.shape_cast %80 : vector<8xf32> to vector<8x1xf32>
    %82 = vector.broadcast %81 : vector<8x1xf32> to vector<8x8xf32>
    %83 = arith.subf %79, %82 : vector<8x8xf32>
    %84 = math.exp %83 : vector<8x8xf32>
    %cst_73 = arith.constant dense<0.000000e+00> : vector<8xf32>
    %85 = vector.multi_reduction <add>, %84, %cst_73 [1] : vector<8x8xf32> to vector<8xf32>
    %86 = vector.shape_cast %85 : vector<8xf32> to vector<8x1xf32>
    %87 = tpu.reciprocal %86 {approx = true} : vector<8x1xf32> -> vector<8x1xf32>
    %88 = vector.broadcast %87 : vector<8x1xf32> to vector<8x8xf32>
    %89 = arith.mulf %84, %88 : vector<8x8xf32>
    %90 = arith.truncf %89 : vector<8x8xf32> to vector<8x8xbf16>
    %91 = arith.truncf %76 : vector<8x8xf32> to vector<8x8xbf16>
    %cst_74 = arith.constant dense<0.000000e+00> : vector<8x8xf32>
    %92 = tpu.matmul %90, %91, %cst_74 {dimension_numbers = #tpu.dot_dimension_numbers<[1], [0], [0], [1], [0, 0, 1, 1], [], []>} : vector<8x8xbf16>, vector<8x8xbf16>, vector<8x8xf32> -> vector<8x8xf32>
    %93 = arith.truncf %92 : vector<8x8xf32> to vector<8x8xbf16>
    %c0_75 = arith.constant 0 : index
    %c1_76 = arith.constant 1 : index
    %c0_77 = arith.constant 0 : index
    %c0_78 = arith.constant 0 : index
    %94 = vector.load %arg10[%c0_75, %c1_76, %c0_77, %c0_78] : memref<1x4x8x32xbf16, #tpu.memory_space<vmem>>, vector<1x1x8x32xbf16>
    %95 = vector.shape_cast %94 : vector<1x1x8x32xbf16> to vector<8x32xbf16>
    %cst_79 = arith.constant dense<0.000000e+00> : vector<8x32xf32>
    %96 = tpu.matmul %93, %95, %cst_79 {dimension_numbers = #tpu.dot_dimension_numbers<[1], [0], [0], [1], [0, 0, 1, 1], [], []>} : vector<8x8xbf16>, vector<8x32xbf16>, vector<8x32xf32> -> vector<8x32xf32>
    %97 = arith.addf %53, %96 : vector<8x32xf32>
    %c0_80 = arith.constant 0 : index
    %c2 = arith.constant 2 : index
    %c0_81 = arith.constant 0 : index
    %c0_82 = arith.constant 0 : index
    %98 = vector.load %arg4[%c0_80, %c2, %c0_81, %c0_82] : memref<1x4x32x8xbf16, #tpu.memory_space<vmem>>, vector<1x1x32x8xbf16>
    %99 = vector.shape_cast %98 : vector<1x1x32x8xbf16> to vector<32x8xbf16>
    %cst_83 = arith.constant dense<0.000000e+00> : vector<8x8xf32>
    %100 = tpu.matmul %7, %99, %cst_83 {dimension_numbers = #tpu.dot_dimension_numbers<[1], [0], [0], [1], [0, 0, 1, 1], [], []>} : vector<8x32xbf16>, vector<32x8xbf16>, vector<8x8xf32> -> vector<8x8xf32>
    %c0_84 = arith.constant 0 : index
    %c2_85 = arith.constant 2 : index
    %c0_86 = arith.constant 0 : index
    %c0_87 = arith.constant 0 : index
    %101 = vector.load %arg5[%c0_84, %c2_85, %c0_86, %c0_87] : memref<1x4x1x8xf32, #tpu.memory_space<vmem>>, vector<1x1x1x8xf32>
    %102 = vector.shape_cast %101 : vector<1x1x1x8xf32> to vector<1x8xf32>
    %103 = vector.broadcast %102 : vector<1x8xf32> to vector<8x8xf32>
    %104 = arith.addf %100, %103 : vector<8x8xf32>
    %cst_88 = arith.constant 0.353553385 : f32
    %105 = vector.broadcast %cst_88 : f32 to vector<8x8xf32>
    %106 = arith.mulf %104, %105 : vector<8x8xf32>
    %c0_89 = arith.constant 0 : index
    %c2_90 = arith.constant 2 : index
    %c0_91 = arith.constant 0 : index
    %c0_92 = arith.constant 0 : index
    %107 = vector.load %arg6[%c0_89, %c2_90, %c0_91, %c0_92] : memref<1x4x32x8xbf16, #tpu.memory_space<vmem>>, vector<1x1x32x8xbf16>
    %108 = vector.shape_cast %107 : vector<1x1x32x8xbf16> to vector<32x8xbf16>
    %cst_93 = arith.constant dense<0.000000e+00> : vector<8x8xf32>
    %109 = tpu.matmul %8, %108, %cst_93 {dimension_numbers = #tpu.dot_dimension_numbers<[1], [0], [0], [1], [0, 0, 1, 1], [], []>} : vector<8x32xbf16>, vector<32x8xbf16>, vector<8x8xf32> -> vector<8x8xf32>
    %c0_94 = arith.constant 0 : index
    %c2_95 = arith.constant 2 : index
    %c0_96 = arith.constant 0 : index
    %c0_97 = arith.constant 0 : index
    %110 = vector.load %arg7[%c0_94, %c2_95, %c0_96, %c0_97] : memref<1x4x1x8xf32, #tpu.memory_space<vmem>>, vector<1x1x1x8xf32>
    %111 = vector.shape_cast %110 : vector<1x1x1x8xf32> to vector<1x8xf32>
    %112 = vector.broadcast %111 : vector<1x8xf32> to vector<8x8xf32>
    %113 = arith.addf %109, %112 : vector<8x8xf32>
    %c0_98 = arith.constant 0 : index
    %c2_99 = arith.constant 2 : index
    %c0_100 = arith.constant 0 : index
    %c0_101 = arith.constant 0 : index
    %114 = vector.load %arg8[%c0_98, %c2_99, %c0_100, %c0_101] : memref<1x4x32x8xbf16, #tpu.memory_space<vmem>>, vector<1x1x32x8xbf16>
    %115 = vector.shape_cast %114 : vector<1x1x32x8xbf16> to vector<32x8xbf16>
    %cst_102 = arith.constant dense<0.000000e+00> : vector<8x8xf32>
    %116 = tpu.matmul %8, %115, %cst_102 {dimension_numbers = #tpu.dot_dimension_numbers<[1], [0], [0], [1], [0, 0, 1, 1], [], []>} : vector<8x32xbf16>, vector<32x8xbf16>, vector<8x8xf32> -> vector<8x8xf32>
    %c0_103 = arith.constant 0 : index
    %c2_104 = arith.constant 2 : index
    %c0_105 = arith.constant 0 : index
    %c0_106 = arith.constant 0 : index
    %117 = vector.load %arg9[%c0_103, %c2_104, %c0_105, %c0_106] : memref<1x4x1x8xf32, #tpu.memory_space<vmem>>, vector<1x1x1x8xf32>
    %118 = vector.shape_cast %117 : vector<1x1x1x8xf32> to vector<1x8xf32>
    %119 = vector.broadcast %118 : vector<1x8xf32> to vector<8x8xf32>
    %120 = arith.addf %116, %119 : vector<8x8xf32>
    %121 = arith.truncf %106 : vector<8x8xf32> to vector<8x8xbf16>
    %122 = arith.truncf %113 : vector<8x8xf32> to vector<8x8xbf16>
    %cst_107 = arith.constant dense<0.000000e+00> : vector<8x8xf32>
    %123 = tpu.matmul %121, %122, %cst_107 {dimension_numbers = #tpu.dot_dimension_numbers<[1], [1], [0], [0], [0, 0, 1, 0], [], []>} : vector<8x8xbf16>, vector<8x8xbf16>, vector<8x8xf32> -> vector<8x8xf32>
    %cst_108 = arith.constant dense<0xFF800000> : vector<8xf32>
    %124 = vector.multi_reduction <maximumf>, %123, %cst_108 [1] : vector<8x8xf32> to vector<8xf32>
    %125 = vector.shape_cast %124 : vector<8xf32> to vector<8x1xf32>
    %126 = vector.broadcast %125 : vector<8x1xf32> to vector<8x8xf32>
    %127 = arith.subf %123, %126 : vector<8x8xf32>
    %128 = math.exp %127 : vector<8x8xf32>
    %cst_109 = arith.constant dense<0.000000e+00> : vector<8xf32>
    %129 = vector.multi_reduction <add>, %128, %cst_109 [1] : vector<8x8xf32> to vector<8xf32>
    %130 = vector.shape_cast %129 : vector<8xf32> to vector<8x1xf32>
    %131 = tpu.reciprocal %130 {approx = true} : vector<8x1xf32> -> vector<8x1xf32>
    %132 = vector.broadcast %131 : vector<8x1xf32> to vector<8x8xf32>
    %133 = arith.mulf %128, %132 : vector<8x8xf32>
    %134 = arith.truncf %133 : vector<8x8xf32> to vector<8x8xbf16>
    %135 = arith.truncf %120 : vector<8x8xf32> to vector<8x8xbf16>
    %cst_110 = arith.constant dense<0.000000e+00> : vector<8x8xf32>
    %136 = tpu.matmul %134, %135, %cst_110 {dimension_numbers = #tpu.dot_dimension_numbers<[1], [0], [0], [1], [0, 0, 1, 1], [], []>} : vector<8x8xbf16>, vector<8x8xbf16>, vector<8x8xf32> -> vector<8x8xf32>
    %137 = arith.truncf %136 : vector<8x8xf32> to vector<8x8xbf16>
    %c0_111 = arith.constant 0 : index
    %c2_112 = arith.constant 2 : index
    %c0_113 = arith.constant 0 : index
    %c0_114 = arith.constant 0 : index
    %138 = vector.load %arg10[%c0_111, %c2_112, %c0_113, %c0_114] : memref<1x4x8x32xbf16, #tpu.memory_space<vmem>>, vector<1x1x8x32xbf16>
    %139 = vector.shape_cast %138 : vector<1x1x8x32xbf16> to vector<8x32xbf16>
    %cst_115 = arith.constant dense<0.000000e+00> : vector<8x32xf32>
    %140 = tpu.matmul %137, %139, %cst_115 {dimension_numbers = #tpu.dot_dimension_numbers<[1], [0], [0], [1], [0, 0, 1, 1], [], []>} : vector<8x8xbf16>, vector<8x32xbf16>, vector<8x32xf32> -> vector<8x32xf32>
    %141 = arith.addf %97, %140 : vector<8x32xf32>
    %c0_116 = arith.constant 0 : index
    %c3 = arith.constant 3 : index
    %c0_117 = arith.constant 0 : index
    %c0_118 = arith.constant 0 : index
    %142 = vector.load %arg4[%c0_116, %c3, %c0_117, %c0_118] : memref<1x4x32x8xbf16, #tpu.memory_space<vmem>>, vector<1x1x32x8xbf16>
    %143 = vector.shape_cast %142 : vector<1x1x32x8xbf16> to vector<32x8xbf16>
    %cst_119 = arith.constant dense<0.000000e+00> : vector<8x8xf32>
    %144 = tpu.matmul %7, %143, %cst_119 {dimension_numbers = #tpu.dot_dimension_numbers<[1], [0], [0], [1], [0, 0, 1, 1], [], []>} : vector<8x32xbf16>, vector<32x8xbf16>, vector<8x8xf32> -> vector<8x8xf32>
    %c0_120 = arith.constant 0 : index
    %c3_121 = arith.constant 3 : index
    %c0_122 = arith.constant 0 : index
    %c0_123 = arith.constant 0 : index
    %145 = vector.load %arg5[%c0_120, %c3_121, %c0_122, %c0_123] : memref<1x4x1x8xf32, #tpu.memory_space<vmem>>, vector<1x1x1x8xf32>
    %146 = vector.shape_cast %145 : vector<1x1x1x8xf32> to vector<1x8xf32>
    %147 = vector.broadcast %146 : vector<1x8xf32> to vector<8x8xf32>
    %148 = arith.addf %144, %147 : vector<8x8xf32>
    %cst_124 = arith.constant 0.353553385 : f32
    %149 = vector.broadcast %cst_124 : f32 to vector<8x8xf32>
    %150 = arith.mulf %148, %149 : vector<8x8xf32>
    %c0_125 = arith.constant 0 : index
    %c3_126 = arith.constant 3 : index
    %c0_127 = arith.constant 0 : index
    %c0_128 = arith.constant 0 : index
    %151 = vector.load %arg6[%c0_125, %c3_126, %c0_127, %c0_128] : memref<1x4x32x8xbf16, #tpu.memory_space<vmem>>, vector<1x1x32x8xbf16>
    %152 = vector.shape_cast %151 : vector<1x1x32x8xbf16> to vector<32x8xbf16>
    %cst_129 = arith.constant dense<0.000000e+00> : vector<8x8xf32>
    %153 = tpu.matmul %8, %152, %cst_129 {dimension_numbers = #tpu.dot_dimension_numbers<[1], [0], [0], [1], [0, 0, 1, 1], [], []>} : vector<8x32xbf16>, vector<32x8xbf16>, vector<8x8xf32> -> vector<8x8xf32>
    %c0_130 = arith.constant 0 : index
    %c3_131 = arith.constant 3 : index
    %c0_132 = arith.constant 0 : index
    %c0_133 = arith.constant 0 : index
    %154 = vector.load %arg7[%c0_130, %c3_131, %c0_132, %c0_133] : memref<1x4x1x8xf32, #tpu.memory_space<vmem>>, vector<1x1x1x8xf32>
    %155 = vector.shape_cast %154 : vector<1x1x1x8xf32> to vector<1x8xf32>
    %156 = vector.broadcast %155 : vector<1x8xf32> to vector<8x8xf32>
    %157 = arith.addf %153, %156 : vector<8x8xf32>
    %c0_134 = arith.constant 0 : index
    %c3_135 = arith.constant 3 : index
    %c0_136 = arith.constant 0 : index
    %c0_137 = arith.constant 0 : index
    %158 = vector.load %arg8[%c0_134, %c3_135, %c0_136, %c0_137] : memref<1x4x32x8xbf16, #tpu.memory_space<vmem>>, vector<1x1x32x8xbf16>
    %159 = vector.shape_cast %158 : vector<1x1x32x8xbf16> to vector<32x8xbf16>
    %cst_138 = arith.constant dense<0.000000e+00> : vector<8x8xf32>
    %160 = tpu.matmul %8, %159, %cst_138 {dimension_numbers = #tpu.dot_dimension_numbers<[1], [0], [0], [1], [0, 0, 1, 1], [], []>} : vector<8x32xbf16>, vector<32x8xbf16>, vector<8x8xf32> -> vector<8x8xf32>
    %c0_139 = arith.constant 0 : index
    %c3_140 = arith.constant 3 : index
    %c0_141 = arith.constant 0 : index
    %c0_142 = arith.constant 0 : index
    %161 = vector.load %arg9[%c0_139, %c3_140, %c0_141, %c0_142] : memref<1x4x1x8xf32, #tpu.memory_space<vmem>>, vector<1x1x1x8xf32>
    %162 = vector.shape_cast %161 : vector<1x1x1x8xf32> to vector<1x8xf32>
    %163 = vector.broadcast %162 : vector<1x8xf32> to vector<8x8xf32>
    %164 = arith.addf %160, %163 : vector<8x8xf32>
    %165 = arith.truncf %150 : vector<8x8xf32> to vector<8x8xbf16>
    %166 = arith.truncf %157 : vector<8x8xf32> to vector<8x8xbf16>
    %cst_143 = arith.constant dense<0.000000e+00> : vector<8x8xf32>
    %167 = tpu.matmul %165, %166, %cst_143 {dimension_numbers = #tpu.dot_dimension_numbers<[1], [1], [0], [0], [0, 0, 1, 0], [], []>} : vector<8x8xbf16>, vector<8x8xbf16>, vector<8x8xf32> -> vector<8x8xf32>
    %cst_144 = arith.constant dense<0xFF800000> : vector<8xf32>
    %168 = vector.multi_reduction <maximumf>, %167, %cst_144 [1] : vector<8x8xf32> to vector<8xf32>
    %169 = vector.shape_cast %168 : vector<8xf32> to vector<8x1xf32>
    %170 = vector.broadcast %169 : vector<8x1xf32> to vector<8x8xf32>
    %171 = arith.subf %167, %170 : vector<8x8xf32>
    %172 = math.exp %171 : vector<8x8xf32>
    %cst_145 = arith.constant dense<0.000000e+00> : vector<8xf32>
    %173 = vector.multi_reduction <add>, %172, %cst_145 [1] : vector<8x8xf32> to vector<8xf32>
    %174 = vector.shape_cast %173 : vector<8xf32> to vector<8x1xf32>
    %175 = tpu.reciprocal %174 {approx = true} : vector<8x1xf32> -> vector<8x1xf32>
    %176 = vector.broadcast %175 : vector<8x1xf32> to vector<8x8xf32>
    %177 = arith.mulf %172, %176 : vector<8x8xf32>
    %178 = arith.truncf %177 : vector<8x8xf32> to vector<8x8xbf16>
    %179 = arith.truncf %164 : vector<8x8xf32> to vector<8x8xbf16>
    %cst_146 = arith.constant dense<0.000000e+00> : vector<8x8xf32>
    %180 = tpu.matmul %178, %179, %cst_146 {dimension_numbers = #tpu.dot_dimension_numbers<[1], [0], [0], [1], [0, 0, 1, 1], [], []>} : vector<8x8xbf16>, vector<8x8xbf16>, vector<8x8xf32> -> vector<8x8xf32>
    %181 = arith.truncf %180 : vector<8x8xf32> to vector<8x8xbf16>
    %c0_147 = arith.constant 0 : index
    %c3_148 = arith.constant 3 : index
    %c0_149 = arith.constant 0 : index
    %c0_150 = arith.constant 0 : index
    %182 = vector.load %arg10[%c0_147, %c3_148, %c0_149, %c0_150] : memref<1x4x8x32xbf16, #tpu.memory_space<vmem>>, vector<1x1x8x32xbf16>
    %183 = vector.shape_cast %182 : vector<1x1x8x32xbf16> to vector<8x32xbf16>
    %cst_151 = arith.constant dense<0.000000e+00> : vector<8x32xf32>
    %184 = tpu.matmul %181, %183, %cst_151 {dimension_numbers = #tpu.dot_dimension_numbers<[1], [0], [0], [1], [0, 0, 1, 1], [], []>} : vector<8x8xbf16>, vector<8x32xbf16>, vector<8x32xf32> -> vector<8x32xf32>
    %185 = arith.addf %141, %184 : vector<8x32xf32>
    %c0_152 = arith.constant 0 : index
    %c0_153 = arith.constant 0 : index
    %186 = vector.load %arg15[%c0_152, %c0_153] : memref<8x32xf32, #tpu.memory_space<vmem>>, vector<8x32xf32>
    %c0_154 = arith.constant 0 : index
    %c0_155 = arith.constant 0 : index
    %c0_156 = arith.constant 0 : index
    %187 = vector.load %arg11[%c0_154, %c0_155, %c0_156] : memref<1x1x32xf32, #tpu.memory_space<vmem>>, vector<1x1x32xf32>
    %188 = vector.shape_cast %187 : vector<1x1x32xf32> to vector<1x32xf32>
    %189 = vector.broadcast %188 : vector<1x32xf32> to vector<8x32xf32>
    %190 = arith.addf %185, %189 : vector<8x32xf32>
    %191 = arith.addf %186, %190 : vector<8x32xf32>
    %c0_157 = arith.constant 0 : index
    %c0_158 = arith.constant 0 : index
    %192 = vector.load %arg15[%c0_157, %c0_158] : memref<8x32xf32, #tpu.memory_space<vmem>>, vector<8x32xf32>
    tpu.vector_store %arg15[%c0_157, %c0_158], %191 {strides = array<i32>} : memref<8x32xf32, #tpu.memory_space<vmem>>, vector<8x32xf32>,
    %c1_i32 = arith.constant 1 : i32
    %193 = arith.cmpi eq, %arg1, %c1_i32 : i32
    %194 = arith.extui %193 : i1 to i32
    %c0_i32_159 = arith.constant 0 : i32
    %195 = arith.cmpi ne, %194, %c0_i32_159 : i32
    scf.if %195 {
      %c0_160 = arith.constant 0 : index
      %c0_161 = arith.constant 0 : index
      %196 = vector.load %arg15[%c0_160, %c0_161] : memref<8x32xf32, #tpu.memory_space<vmem>>, vector<8x32xf32>
      %197 = arith.addf %4, %196 : vector<8x32xf32>
      %cst_162 = arith.constant dense<0.000000e+00> : vector<8xf32>
      %198 = vector.multi_reduction <add>, %197, %cst_162 [1] : vector<8x32xf32> to vector<8xf32>
      %199 = vector.shape_cast %198 : vector<8xf32> to vector<8x1xf32>
      %cst_163 = arith.constant 3.200000e+01 : f32
      %200 = vector.broadcast %cst_163 : f32 to vector<8x1xf32>
      %201 = arith.divf %199, %200 : vector<8x1xf32>
      %202 = vector.broadcast %201 : vector<8x1xf32> to vector<8x32xf32>
      %203 = arith.subf %197, %202 : vector<8x32xf32>
      %204 = arith.mulf %203, %203 : vector<8x32xf32>
      %cst_164 = arith.constant dense<0.000000e+00> : vector<8xf32>
      %205 = vector.multi_reduction <add>, %204, %cst_164 [1] : vector<8x32xf32> to vector<8xf32>
      %206 = vector.shape_cast %205 : vector<8xf32> to vector<8x1xf32>
      %cst_165 = arith.constant 3.200000e+01 : f32
      %207 = vector.broadcast %cst_165 : f32 to vector<8x1xf32>
      %208 = arith.divf %206, %207 : vector<8x1xf32>
      %cst_166 = arith.constant 9.99999974E-6 : f32
      %209 = vector.broadcast %cst_166 : f32 to vector<8x1xf32>
      %210 = arith.addf %208, %209 : vector<8x1xf32>
      %211 = math.rsqrt %210 : vector<8x1xf32>
      %212 = vector.broadcast %211 : vector<8x1xf32> to vector<8x32xf32>
      %213 = arith.mulf %203, %212 : vector<8x32xf32>
      %c0_167 = arith.constant 0 : index
      %c0_168 = arith.constant 0 : index
      %214 = vector.load %arg12[%c0_167, %c0_168] : memref<1x32xf32, #tpu.memory_space<vmem>>, vector<1x32xf32>
      %215 = vector.broadcast %214 : vector<1x32xf32> to vector<8x32xf32>
      %216 = arith.mulf %213, %215 : vector<8x32xf32>
      %c0_169 = arith.constant 0 : index
      %c0_170 = arith.constant 0 : index
      %217 = vector.load %arg13[%c0_169, %c0_170] : memref<1x32xf32, #tpu.memory_space<vmem>>, vector<1x32xf32>
      %218 = vector.broadcast %217 : vector<1x32xf32> to vector<8x32xf32>
      %219 = arith.addf %216, %218 : vector<8x32xf32>
      %c0_171 = arith.constant 0 : index
      %c0_172 = arith.constant 0 : index
      %c0_173 = arith.constant 0 : index
      %220 = vector.load %arg14[%c0_171, %c0_172, %c0_173] : memref<1x8x32xf32, #tpu.memory_space<vmem>>, vector<1x8x32xf32>
      %221 = vector.shape_cast %220 : vector<1x8x32xf32> to vector<8x32xf32>
      %222 = vector.shape_cast %219 : vector<8x32xf32> to vector<1x8x32xf32>
      tpu.vector_store %arg14[%c0_171, %c0_172, %c0_173], %222 {strides = array<i32>} : memref<1x8x32xf32, #tpu.memory_space<vmem>>, vector<1x8x32xf32>,
    } else {
    }
    return
  }
  func.func @transform_0(%arg0: i32, %arg1: i32) -> (i32, i32, i32) {
    %c0_i32 = arith.constant 0 : i32
    %c0_i32_0 = arith.constant 0 : i32
    %c0_i32_1 = arith.constant 0 : i32
    return %arg0, %c0_i32, %c0_i32_0 : i32, i32, i32
  }
  func.func @transform_1(%arg0: i32, %arg1: i32) -> (i32, i32, i32, i32) {
    %c0_i32 = arith.constant 0 : i32
    %c0_i32_0 = arith.constant 0 : i32
    %c0_i32_1 = arith.constant 0 : i32
    return %arg1, %arg0, %c0_i32, %c0_i32_0 : i32, i32, i32, i32
  }
  func.func @transform_2(%arg0: i32, %arg1: i32) -> (i32, i32, i32, i32) {
    %c0_i32 = arith.constant 0 : i32
    %c0_i32_0 = arith.constant 0 : i32
    %c0_i32_1 = arith.constant 0 : i32
    %c0_i32_2 = arith.constant 0 : i32
    return %arg1, %c0_i32, %c0_i32_0, %c0_i32_1 : i32, i32, i32, i32
  }
  func.func @transform_3(%arg0: i32, %arg1: i32) -> (i32, i32, i32, i32) {
    %c0_i32 = arith.constant 0 : i32
    %c0_i32_0 = arith.constant 0 : i32
    %c0_i32_1 = arith.constant 0 : i32
    %c0_i32_2 = arith.constant 0 : i32
    return %arg1, %c0_i32, %c0_i32_0, %c0_i32_1 : i32, i32, i32, i32
  }
  func.func @transform_4(%arg0: i32, %arg1: i32) -> (i32, i32, i32, i32) {
    %c0_i32 = arith.constant 0 : i32
    %c0_i32_0 = arith.constant 0 : i32
    %c0_i32_1 = arith.constant 0 : i32
    %c0_i32_2 = arith.constant 0 : i32
    return %arg1, %c0_i32, %c0_i32_0, %c0_i32_1 : i32, i32, i32, i32
  }
  func.func @transform_5(%arg0: i32, %arg1: i32) -> (i32, i32, i32, i32) {
    %c0_i32 = arith.constant 0 : i32
    %c0_i32_0 = arith.constant 0 : i32
    %c0_i32_1 = arith.constant 0 : i32
    %c0_i32_2 = arith.constant 0 : i32
    return %arg1, %c0_i32, %c0_i32_0, %c0_i32_1 : i32, i32, i32, i32
  }
  func.func @transform_6(%arg0: i32, %arg1: i32) -> (i32, i32, i32, i32) {
    %c0_i32 = arith.constant 0 : i32
    %c0_i32_0 = arith.constant 0 : i32
    %c0_i32_1 = arith.constant 0 : i32
    %c0_i32_2 = arith.constant 0 : i32
    return %arg1, %c0_i32, %c0_i32_0, %c0_i32_1 : i32, i32, i32, i32
  }
  func.func @transform_7(%arg0: i32, %arg1: i32) -> (i32, i32, i32, i32) {
    %c0_i32 = arith.constant 0 : i32
    %c0_i32_0 = arith.constant 0 : i32
    %c0_i32_1 = arith.constant 0 : i32
    %c0_i32_2 = arith.constant 0 : i32
    return %arg1, %c0_i32, %c0_i32_0, %c0_i32_1 : i32, i32, i32, i32
  }
  func.func @transform_8(%arg0: i32, %arg1: i32) -> (i32, i32, i32, i32) {
    %c0_i32 = arith.constant 0 : i32
    %c0_i32_0 = arith.constant 0 : i32
    %c0_i32_1 = arith.constant 0 : i32
    %c0_i32_2 = arith.constant 0 : i32
    return %arg1, %c0_i32, %c0_i32_0, %c0_i32_1 : i32, i32, i32, i32
  }
  func.func @transform_9(%arg0: i32, %arg1: i32) -> (i32, i32, i32) {
    %c0_i32 = arith.constant 0 : i32
    %c0_i32_0 = arith.constant 0 : i32
    %c0_i32_1 = arith.constant 0 : i32
    return %arg1, %c0_i32, %c0_i32_0 : i32, i32, i32
  }
  func.func @transform_10(%arg0: i32, %arg1: i32) -> (i32, i32) {
    %c0_i32 = arith.constant 0 : i32
    %c0_i32_0 = arith.constant 0 : i32
    %c0_i32_1 = arith.constant 0 : i32
    return %c0_i32, %c0_i32_0 : i32, i32
  }
  func.func @transform_11(%arg0: i32, %arg1: i32) -> (i32, i32) {
    %c0_i32 = arith.constant 0 : i32
    %c0_i32_0 = arith.constant 0 : i32
    %c0_i32_1 = arith.constant 0 : i32
    return %c0_i32, %c0_i32_0 : i32, i32
  }
  func.func @transform_12(%arg0: i32, %arg1: i32) -> (i32, i32, i32) {
    %c0_i32 = arith.constant 0 : i32
    %c0_i32_0 = arith.constant 0 : i32
    %c0_i32_1 = arith.constant 0 : i32
    return %arg0, %c0_i32, %c0_i32_0 : i32, i32, i32
  }
}

module attributes {stable_mosaic.version = 11 : i64} {
  func.func @_ffn_ln_kernel(%arg0: i32, %arg1: memref<16x32xf32, #tpu.memory_space<vmem>>, %arg2: memref<32x64xbf16, #tpu.memory_space<vmem>>, %arg3: memref<1x64xf32, #tpu.memory_space<vmem>>, %arg4: memref<64x32xbf16, #tpu.memory_space<vmem>>, %arg5: memref<1x32xf32, #tpu.memory_space<vmem>>, %arg6: memref<1x32xf32, #tpu.memory_space<vmem>>, %arg7: memref<1x32xf32, #tpu.memory_space<vmem>>, %arg8: memref<16x32xf32, #tpu.memory_space<vmem>>) attributes {dimension_semantics = [#tpu.dimension_semantics<parallel>], iteration_bounds = array<i64: 1>, scalar_prefetch = 0 : i64, scratch_operands = 0 : i64, tpu.core_type = #tpu.core_type<tc>, window_params = [{transform_indices = @transform_0, window_bounds = array<i64: 16, 32>}, {pipeline_mode = #tpu.pipeline_mode<synchronous>, transform_indices = @transform_1, window_bounds = array<i64: 32, 64>}, {pipeline_mode = #tpu.pipeline_mode<synchronous>, transform_indices = @transform_2, window_bounds = array<i64: 1, 64>}, {pipeline_mode = #tpu.pipeline_mode<synchronous>, transform_indices = @transform_3, window_bounds = array<i64: 64, 32>}, {pipeline_mode = #tpu.pipeline_mode<synchronous>, transform_indices = @transform_4, window_bounds = array<i64: 1, 32>}, {pipeline_mode = #tpu.pipeline_mode<synchronous>, transform_indices = @transform_5, window_bounds = array<i64: 1, 32>}, {pipeline_mode = #tpu.pipeline_mode<synchronous>, transform_indices = @transform_6, window_bounds = array<i64: 1, 32>}, {transform_indices = @transform_7, window_bounds = array<i64: 16, 32>}]} {
    %c0 = arith.constant 0 : index
    %c0_0 = arith.constant 0 : index
    %0 = vector.load %arg1[%c0, %c0_0] : memref<16x32xf32, #tpu.memory_space<vmem>>, vector<16x32xf32>
    %1 = arith.truncf %0 : vector<16x32xf32> to vector<16x32xbf16>
    %c0_1 = arith.constant 0 : index
    %c0_2 = arith.constant 0 : index
    %2 = vector.load %arg2[%c0_1, %c0_2] : memref<32x64xbf16, #tpu.memory_space<vmem>>, vector<32x64xbf16>
    %cst = arith.constant dense<0.000000e+00> : vector<16x64xf32>
    %3 = tpu.matmul %1, %2, %cst {dimension_numbers = #tpu.dot_dimension_numbers<[1], [0], [0], [1], [0, 0, 1, 1], [], []>} : vector<16x32xbf16>, vector<32x64xbf16>, vector<16x64xf32> -> vector<16x64xf32>
    %c0_3 = arith.constant 0 : index
    %c0_4 = arith.constant 0 : index
    %4 = vector.load %arg3[%c0_3, %c0_4] : memref<1x64xf32, #tpu.memory_space<vmem>>, vector<1x64xf32>
    %5 = vector.broadcast %4 : vector<1x64xf32> to vector<16x64xf32>
    %6 = arith.addf %3, %5 : vector<16x64xf32>
    %cst_5 = arith.constant 5.000000e-01 : f32
    %7 = vector.broadcast %cst_5 : f32 to vector<16x64xf32>
    %8 = arith.mulf %7, %6 : vector<16x64xf32>
    %cst_6 = arith.constant 0.707106769 : f32
    %9 = vector.broadcast %cst_6 : f32 to vector<16x64xf32>
    %10 = arith.mulf %6, %9 : vector<16x64xf32>
    %11 = math.erf %10 : vector<16x64xf32>
    %cst_7 = arith.constant 1.000000e+00 : f32
    %12 = vector.broadcast %cst_7 : f32 to vector<16x64xf32>
    %13 = arith.addf %12, %11 : vector<16x64xf32>
    %14 = arith.mulf %8, %13 : vector<16x64xf32>
    %15 = arith.truncf %14 : vector<16x64xf32> to vector<16x64xbf16>
    %c0_8 = arith.constant 0 : index
    %c0_9 = arith.constant 0 : index
    %16 = vector.load %arg4[%c0_8, %c0_9] : memref<64x32xbf16, #tpu.memory_space<vmem>>, vector<64x32xbf16>
    %cst_10 = arith.constant dense<0.000000e+00> : vector<16x32xf32>
    %17 = tpu.matmul %15, %16, %cst_10 {dimension_numbers = #tpu.dot_dimension_numbers<[1], [0], [0], [1], [0, 0, 1, 1], [], []>} : vector<16x64xbf16>, vector<64x32xbf16>, vector<16x32xf32> -> vector<16x32xf32>
    %c0_11 = arith.constant 0 : index
    %c0_12 = arith.constant 0 : index
    %18 = vector.load %arg5[%c0_11, %c0_12] : memref<1x32xf32, #tpu.memory_space<vmem>>, vector<1x32xf32>
    %19 = vector.broadcast %18 : vector<1x32xf32> to vector<16x32xf32>
    %20 = arith.addf %17, %19 : vector<16x32xf32>
    %21 = arith.addf %0, %20 : vector<16x32xf32>
    %cst_13 = arith.constant dense<0.000000e+00> : vector<16xf32>
    %22 = vector.multi_reduction <add>, %21, %cst_13 [1] : vector<16x32xf32> to vector<16xf32>
    %23 = vector.shape_cast %22 : vector<16xf32> to vector<16x1xf32>
    %cst_14 = arith.constant 3.200000e+01 : f32
    %24 = vector.broadcast %cst_14 : f32 to vector<16x1xf32>
    %25 = arith.divf %23, %24 : vector<16x1xf32>
    %26 = vector.broadcast %25 : vector<16x1xf32> to vector<16x32xf32>
    %27 = arith.subf %21, %26 : vector<16x32xf32>
    %28 = arith.mulf %27, %27 : vector<16x32xf32>
    %cst_15 = arith.constant dense<0.000000e+00> : vector<16xf32>
    %29 = vector.multi_reduction <add>, %28, %cst_15 [1] : vector<16x32xf32> to vector<16xf32>
    %30 = vector.shape_cast %29 : vector<16xf32> to vector<16x1xf32>
    %cst_16 = arith.constant 3.200000e+01 : f32
    %31 = vector.broadcast %cst_16 : f32 to vector<16x1xf32>
    %32 = arith.divf %30, %31 : vector<16x1xf32>
    %cst_17 = arith.constant 9.99999974E-6 : f32
    %33 = vector.broadcast %cst_17 : f32 to vector<16x1xf32>
    %34 = arith.addf %32, %33 : vector<16x1xf32>
    %35 = math.rsqrt %34 : vector<16x1xf32>
    %36 = vector.broadcast %35 : vector<16x1xf32> to vector<16x32xf32>
    %37 = arith.mulf %27, %36 : vector<16x32xf32>
    %c0_18 = arith.constant 0 : index
    %c0_19 = arith.constant 0 : index
    %38 = vector.load %arg6[%c0_18, %c0_19] : memref<1x32xf32, #tpu.memory_space<vmem>>, vector<1x32xf32>
    %39 = vector.broadcast %38 : vector<1x32xf32> to vector<16x32xf32>
    %40 = arith.mulf %37, %39 : vector<16x32xf32>
    %c0_20 = arith.constant 0 : index
    %c0_21 = arith.constant 0 : index
    %41 = vector.load %arg7[%c0_20, %c0_21] : memref<1x32xf32, #tpu.memory_space<vmem>>, vector<1x32xf32>
    %42 = vector.broadcast %41 : vector<1x32xf32> to vector<16x32xf32>
    %43 = arith.addf %40, %42 : vector<16x32xf32>
    %c0_22 = arith.constant 0 : index
    %c0_23 = arith.constant 0 : index
    %44 = vector.load %arg8[%c0_22, %c0_23] : memref<16x32xf32, #tpu.memory_space<vmem>>, vector<16x32xf32>
    tpu.vector_store %arg8[%c0_22, %c0_23], %43 {strides = array<i32>} : memref<16x32xf32, #tpu.memory_space<vmem>>, vector<16x32xf32>,
    return
  }
  func.func @transform_0(%arg0: i32) -> (i32, i32) {
    %c0_i32 = arith.constant 0 : i32
    %c0_i32_0 = arith.constant 0 : i32
    return %arg0, %c0_i32 : i32, i32
  }
  func.func @transform_1(%arg0: i32) -> (i32, i32) {
    %c0_i32 = arith.constant 0 : i32
    %c0_i32_0 = arith.constant 0 : i32
    %c0_i32_1 = arith.constant 0 : i32
    return %c0_i32, %c0_i32_0 : i32, i32
  }
  func.func @transform_2(%arg0: i32) -> (i32, i32) {
    %c0_i32 = arith.constant 0 : i32
    %c0_i32_0 = arith.constant 0 : i32
    %c0_i32_1 = arith.constant 0 : i32
    return %c0_i32, %c0_i32_0 : i32, i32
  }
  func.func @transform_3(%arg0: i32) -> (i32, i32) {
    %c0_i32 = arith.constant 0 : i32
    %c0_i32_0 = arith.constant 0 : i32
    %c0_i32_1 = arith.constant 0 : i32
    return %c0_i32, %c0_i32_0 : i32, i32
  }
  func.func @transform_4(%arg0: i32) -> (i32, i32) {
    %c0_i32 = arith.constant 0 : i32
    %c0_i32_0 = arith.constant 0 : i32
    %c0_i32_1 = arith.constant 0 : i32
    return %c0_i32, %c0_i32_0 : i32, i32
  }
  func.func @transform_5(%arg0: i32) -> (i32, i32) {
    %c0_i32 = arith.constant 0 : i32
    %c0_i32_0 = arith.constant 0 : i32
    %c0_i32_1 = arith.constant 0 : i32
    return %c0_i32, %c0_i32_0 : i32, i32
  }
  func.func @transform_6(%arg0: i32) -> (i32, i32) {
    %c0_i32 = arith.constant 0 : i32
    %c0_i32_0 = arith.constant 0 : i32
    %c0_i32_1 = arith.constant 0 : i32
    return %c0_i32, %c0_i32_0 : i32, i32
  }
  func.func @transform_7(%arg0: i32) -> (i32, i32) {
    %c0_i32 = arith.constant 0 : i32
    %c0_i32_0 = arith.constant 0 : i32
    return %arg0, %c0_i32 : i32, i32
  }
}

module attributes {stable_mosaic.version = 11 : i64} {
  func.func @_ffn_ln_kernel(%arg0: i32, %arg1: memref<16x32xf32, #tpu.memory_space<vmem>>, %arg2: memref<32x64xbf16, #tpu.memory_space<vmem>>, %arg3: memref<1x64xf32, #tpu.memory_space<vmem>>, %arg4: memref<64x32xbf16, #tpu.memory_space<vmem>>, %arg5: memref<1x32xf32, #tpu.memory_space<vmem>>, %arg6: memref<1x32xf32, #tpu.memory_space<vmem>>, %arg7: memref<1x32xf32, #tpu.memory_space<vmem>>, %arg8: memref<16x32xf32, #tpu.memory_space<vmem>>) attributes {dimension_semantics = [#tpu.dimension_semantics<parallel>], iteration_bounds = array<i64: 1>, scalar_prefetch = 0 : i64, scratch_operands = 0 : i64, tpu.core_type = #tpu.core_type<tc>, window_params = [{transform_indices = @transform_0, window_bounds = array<i64: 16, 32>}, {pipeline_mode = #tpu.pipeline_mode<synchronous>, transform_indices = @transform_1, window_bounds = array<i64: 32, 64>}, {pipeline_mode = #tpu.pipeline_mode<synchronous>, transform_indices = @transform_2, window_bounds = array<i64: 1, 64>}, {pipeline_mode = #tpu.pipeline_mode<synchronous>, transform_indices = @transform_3, window_bounds = array<i64: 64, 32>}, {pipeline_mode = #tpu.pipeline_mode<synchronous>, transform_indices = @transform_4, window_bounds = array<i64: 1, 32>}, {pipeline_mode = #tpu.pipeline_mode<synchronous>, transform_indices = @transform_5, window_bounds = array<i64: 1, 32>}, {pipeline_mode = #tpu.pipeline_mode<synchronous>, transform_indices = @transform_6, window_bounds = array<i64: 1, 32>}, {transform_indices = @transform_7, window_bounds = array<i64: 16, 32>}]} {
    %c0 = arith.constant 0 : index
    %c0_0 = arith.constant 0 : index
    %0 = vector.load %arg1[%c0, %c0_0] : memref<16x32xf32, #tpu.memory_space<vmem>>, vector<16x32xf32>
    %1 = arith.truncf %0 : vector<16x32xf32> to vector<16x32xbf16>
    %c0_1 = arith.constant 0 : index
    %c0_2 = arith.constant 0 : index
    %2 = vector.load %arg2[%c0_1, %c0_2] : memref<32x64xbf16, #tpu.memory_space<vmem>>, vector<32x64xbf16>
    %cst = arith.constant dense<0.000000e+00> : vector<16x64xf32>
    %3 = tpu.matmul %1, %2, %cst {dimension_numbers = #tpu.dot_dimension_numbers<[1], [0], [0], [1], [0, 0, 1, 1], [], []>} : vector<16x32xbf16>, vector<32x64xbf16>, vector<16x64xf32> -> vector<16x64xf32>
    %c0_3 = arith.constant 0 : index
    %c0_4 = arith.constant 0 : index
    %4 = vector.load %arg3[%c0_3, %c0_4] : memref<1x64xf32, #tpu.memory_space<vmem>>, vector<1x64xf32>
    %5 = vector.broadcast %4 : vector<1x64xf32> to vector<16x64xf32>
    %6 = arith.addf %3, %5 : vector<16x64xf32>
    %cst_5 = arith.constant 5.000000e-01 : f32
    %7 = vector.broadcast %cst_5 : f32 to vector<16x64xf32>
    %8 = arith.mulf %7, %6 : vector<16x64xf32>
    %cst_6 = arith.constant 0.707106769 : f32
    %9 = vector.broadcast %cst_6 : f32 to vector<16x64xf32>
    %10 = arith.mulf %6, %9 : vector<16x64xf32>
    %11 = math.erf %10 : vector<16x64xf32>
    %cst_7 = arith.constant 1.000000e+00 : f32
    %12 = vector.broadcast %cst_7 : f32 to vector<16x64xf32>
    %13 = arith.addf %12, %11 : vector<16x64xf32>
    %14 = arith.mulf %8, %13 : vector<16x64xf32>
    %15 = arith.truncf %14 : vector<16x64xf32> to vector<16x64xbf16>
    %c0_8 = arith.constant 0 : index
    %c0_9 = arith.constant 0 : index
    %16 = vector.load %arg4[%c0_8, %c0_9] : memref<64x32xbf16, #tpu.memory_space<vmem>>, vector<64x32xbf16>
    %cst_10 = arith.constant dense<0.000000e+00> : vector<16x32xf32>
    %17 = tpu.matmul %15, %16, %cst_10 {dimension_numbers = #tpu.dot_dimension_numbers<[1], [0], [0], [1], [0, 0, 1, 1], [], []>} : vector<16x64xbf16>, vector<64x32xbf16>, vector<16x32xf32> -> vector<16x32xf32>
    %c0_11 = arith.constant 0 : index
    %c0_12 = arith.constant 0 : index
    %18 = vector.load %arg5[%c0_11, %c0_12] : memref<1x32xf32, #tpu.memory_space<vmem>>, vector<1x32xf32>
    %19 = vector.broadcast %18 : vector<1x32xf32> to vector<16x32xf32>
    %20 = arith.addf %17, %19 : vector<16x32xf32>
    %21 = arith.addf %0, %20 : vector<16x32xf32>
    %cst_13 = arith.constant dense<0.000000e+00> : vector<16xf32>
    %22 = vector.multi_reduction <add>, %21, %cst_13 [1] : vector<16x32xf32> to vector<16xf32>
    %23 = vector.shape_cast %22 : vector<16xf32> to vector<16x1xf32>
    %cst_14 = arith.constant 3.200000e+01 : f32
    %24 = vector.broadcast %cst_14 : f32 to vector<16x1xf32>
    %25 = arith.divf %23, %24 : vector<16x1xf32>
    %26 = vector.broadcast %25 : vector<16x1xf32> to vector<16x32xf32>
    %27 = arith.subf %21, %26 : vector<16x32xf32>
    %28 = arith.mulf %27, %27 : vector<16x32xf32>
    %cst_15 = arith.constant dense<0.000000e+00> : vector<16xf32>
    %29 = vector.multi_reduction <add>, %28, %cst_15 [1] : vector<16x32xf32> to vector<16xf32>
    %30 = vector.shape_cast %29 : vector<16xf32> to vector<16x1xf32>
    %cst_16 = arith.constant 3.200000e+01 : f32
    %31 = vector.broadcast %cst_16 : f32 to vector<16x1xf32>
    %32 = arith.divf %30, %31 : vector<16x1xf32>
    %cst_17 = arith.constant 9.99999974E-6 : f32
    %33 = vector.broadcast %cst_17 : f32 to vector<16x1xf32>
    %34 = arith.addf %32, %33 : vector<16x1xf32>
    %35 = math.rsqrt %34 : vector<16x1xf32>
    %36 = vector.broadcast %35 : vector<16x1xf32> to vector<16x32xf32>
    %37 = arith.mulf %27, %36 : vector<16x32xf32>
    %c0_18 = arith.constant 0 : index
    %c0_19 = arith.constant 0 : index
    %38 = vector.load %arg6[%c0_18, %c0_19] : memref<1x32xf32, #tpu.memory_space<vmem>>, vector<1x32xf32>
    %39 = vector.broadcast %38 : vector<1x32xf32> to vector<16x32xf32>
    %40 = arith.mulf %37, %39 : vector<16x32xf32>
    %c0_20 = arith.constant 0 : index
    %c0_21 = arith.constant 0 : index
    %41 = vector.load %arg7[%c0_20, %c0_21] : memref<1x32xf32, #tpu.memory_space<vmem>>, vector<1x32xf32>
    %42 = vector.broadcast %41 : vector<1x32xf32> to vector<16x32xf32>
    %43 = arith.addf %40, %42 : vector<16x32xf32>
    %c0_22 = arith.constant 0 : index
    %c0_23 = arith.constant 0 : index
    %44 = vector.load %arg8[%c0_22, %c0_23] : memref<16x32xf32, #tpu.memory_space<vmem>>, vector<16x32xf32>
    tpu.vector_store %arg8[%c0_22, %c0_23], %43 {strides = array<i32>} : memref<16x32xf32, #tpu.memory_space<vmem>>, vector<16x32xf32>,
    return
  }
  func.func @transform_0(%arg0: i32) -> (i32, i32) {
    %c0_i32 = arith.constant 0 : i32
    %c0_i32_0 = arith.constant 0 : i32
    return %arg0, %c0_i32 : i32, i32
  }
  func.func @transform_1(%arg0: i32) -> (i32, i32) {
    %c0_i32 = arith.constant 0 : i32
    %c0_i32_0 = arith.constant 0 : i32
    %c0_i32_1 = arith.constant 0 : i32
    return %c0_i32, %c0_i32_0 : i32, i32
  }
  func.func @transform_2(%arg0: i32) -> (i32, i32) {
    %c0_i32 = arith.constant 0 : i32
    %c0_i32_0 = arith.constant 0 : i32
    %c0_i32_1 = arith.constant 0 : i32
    return %c0_i32, %c0_i32_0 : i32, i32
  }
  func.func @transform_3(%arg0: i32) -> (i32, i32) {
    %c0_i32 = arith.constant 0 : i32
    %c0_i32_0 = arith.constant 0 : i32
    %c0_i32_1 = arith.constant 0 : i32
    return %c0_i32, %c0_i32_0 : i32, i32
  }
  func.func @transform_4(%arg0: i32) -> (i32, i32) {
    %c0_i32 = arith.constant 0 : i32
    %c0_i32_0 = arith.constant 0 : i32
    %c0_i32_1 = arith.constant 0 : i32
    return %c0_i32, %c0_i32_0 : i32, i32
  }
  func.func @transform_5(%arg0: i32) -> (i32, i32) {
    %c0_i32 = arith.constant 0 : i32
    %c0_i32_0 = arith.constant 0 : i32
    %c0_i32_1 = arith.constant 0 : i32
    return %c0_i32, %c0_i32_0 : i32, i32
  }
  func.func @transform_6(%arg0: i32) -> (i32, i32) {
    %c0_i32 = arith.constant 0 : i32
    %c0_i32_0 = arith.constant 0 : i32
    %c0_i32_1 = arith.constant 0 : i32
    return %c0_i32, %c0_i32_0 : i32, i32
  }
  func.func @transform_7(%arg0: i32) -> (i32, i32) {
    %c0_i32 = arith.constant 0 : i32
    %c0_i32_0 = arith.constant 0 : i32
    return %arg0, %c0_i32 : i32, i32
  }
}

</mosaic_0001>

<llo_original>
// kernel: _lambda_.8
$region0: #{_lambda_.8}
  #allocation0 [shape = 'u32[]', space=smem, size = 0x4, offset = 0x4, fixed_abs, tag = 'smem constant byte address 0x4 - core index']
  #allocation1 [shape = 'u32[72,128]{1,0:T(1,128)}', space=vmem, size = 0x9000, scoped, tag = 'internal scratch']
  %s0 = inlined_call_operand.vmem [shape: f32[16,32], index: 0, kind: input, shape index: {}]
  %s1 = inlined_call_operand.vmem [shape: bf16[32,64], index: 1, kind: input, shape index: {}]
  %s2 = inlined_call_operand.vmem [shape: f32[1,64], index: 2, kind: input, shape index: {}]
  %s3 = inlined_call_operand.vmem [shape: bf16[64,32], index: 3, kind: input, shape index: {}]
  %s4 = inlined_call_operand.vmem [shape: f32[1,32], index: 4, kind: input, shape index: {}]
  %s5 = inlined_call_operand.vmem [shape: f32[1,32], index: 5, kind: input, shape index: {}]
  %s6 = inlined_call_operand.vmem [shape: f32[1,32], index: 6, kind: input, shape index: {}]
  %s7 = inlined_call_operand.vmem [shape: f32[16,32], index: 7, kind: output, shape index: {}]
  %s8 = sld [smem:[#allocation0]]
  $region38: #{_lambda_.8} parent=0
    _
  %s10 = ssub.s32 1, %s8
  %s11 = scalar_select 0, %s10, %s8
  // Predicated region
  $region2: #{_lambda_.8} parent=0 // pred_check
    _
  $region3: #{_lambda_.8} parent=0 // pred_check_branch
    %13 = sbr.rel (0) target = $region5
  $region4: #{_lambda_.8} parent=0 // pred_region
    _
  $region5: #{_lambda_.8} parent=0 // pred_fallthru
    _
  // Predicated region
  $region6: #{_lambda_.8} parent=0 // pred_check
    _
  $region7: #{_lambda_.8} parent=0 // pred_check_branch
    %15 = sbr.rel (0) target = $region9
  $region8: #{_lambda_.8} parent=0 // pred_region
    _
  $region9: #{_lambda_.8} parent=0 // pred_fallthru
    _
  // Predicated region
  $region10: #{_lambda_.8} parent=0 // pred_check
    _
  $region11: #{_lambda_.8} parent=0 // pred_check_branch
    %17 = sbr.rel (0) target = $region13
  $region12: #{_lambda_.8} parent=0 // pred_region
    _
  $region13: #{_lambda_.8} parent=0 // pred_fallthru
    _
  // Predicated region
  $region14: #{_lambda_.8} parent=0 // pred_check
    _
  $region15: #{_lambda_.8} parent=0 // pred_check_branch
    %19 = sbr.rel (0) target = $region17
  $region16: #{_lambda_.8} parent=0 // pred_region
    _
  $region17: #{_lambda_.8} parent=0 // pred_fallthru
    _
  // Predicated region
  $region18: #{_lambda_.8} parent=0 // pred_check
    _
  $region19: #{_lambda_.8} parent=0 // pred_check_branch
    %21 = sbr.rel (0) target = $region21
  $region20: #{_lambda_.8} parent=0 // pred_region
    _
  $region21: #{_lambda_.8} parent=0 // pred_fallthru
    _
  // Predicated region
  $region22: #{_lambda_.8} parent=0 // pred_check
    _
  $region23: #{_lambda_.8} parent=0 // pred_check_branch
    %23 = sbr.rel (0) target = $region25
  $region24: #{_lambda_.8} parent=0 // pred_region
    _
  $region25: #{_lambda_.8} parent=0 // pred_fallthru
    _
  // Predicated region
  $region26: #{_lambda_.8} parent=0 // pred_check
    _
  $region27: #{_lambda_.8} parent=0 // pred_check_branch
    %25 = sbr.rel (0) target = $region29
  $region28: #{_lambda_.8} parent=0 // pred_region
    _
  $region29: #{_lambda_.8} parent=0 // pred_fallthru
    _
  %v27 = vld [vmem:[%s0] sm:$0xff]
  %v28 = vld [vmem:[%s0 + $0x8] sm:$0xff]
  %v29 = vpack.c.bf16 %v28, %v27
  %v30 = vld [vmem:[%s1] sm:$0xf]
  %v31 = vld [vmem:[%s1 + $0x4] sm:$0xf]
  %v32 = vld [vmem:[%s1 + $0x8] sm:$0xf]
  %v33 = vld [vmem:[%s1 + $0xc] sm:$0xf]
  %v34 = vld [vmem:[%s2] sm:$0x1]
  %v36 = vperm.slane %v34, 0
  %v42 = vunpack.c.l.b16 %v30
  %v43 = vunpack.c.l.b16 %v31
  %v44 = vunpack.c.l.b16 %v32
  %v45 = vunpack.c.l.b16 %v33
  %v46 = vpack.c.b16 %v43, %v42
  %v47 = vpack.c.b16 %v45, %v44
  %vm50 = vcmask 261120
  %v52 = vsel %vm50, %v29, 0
  %54 = vmatpush.bf16.msra.mxu0 0
  %55 = vmatpush.bf16.msra.mxu0 0
  %56 = vmatpush.bf16.msra.mxu0 0
  %57 = vmatpush.bf16.msra.mxu0 0
  %58 = vmatpush.bf16.msra.mxu0 0
  %59 = vmatpush.bf16.msra.mxu0 0
  %60 = vmatpush.bf16.msra.mxu0 %v47
  %61 = vmatpush.bf16.msra.mxu0 %v46
  %62 = vmatmul.bf16.gmra.mxu0 %v52
  %v63 = vpop.f32.mrf.mxu0
  %v64 = vadd.f32 %v36, %v63
  %v65 = vpop.f32.mrf.mxu0
  %v66 = vadd.f32 %v36, %v65
  %67 = vdwg.mxu0
  %v68 = vmul.f32 %v64, 0.5
  %v69 = vmul.f32 %v66, 0.5
  %v70 = vmul.f32 %v64, 0.70710677
  %v71 = vmul.f32 %v66, 0.70710677
  %v72 = vmul.f32 %v70, %v70
  %v73 = vmin.f32 16.0, %v72
  %v74 = vmul.f32 %v73, 2.1237322e-06
  %v75 = vadd.f32 %v74, 0.00028619796
  %v76 = vmul.f32 %v73, %v75
  %v77 = vadd.f32 %v76, 0.0036580483
  %v78 = vmul.f32 %v73, %v77
  %v79 = vadd.f32 %v78, 0.05243302
  %v80 = vmul.f32 %v73, %v79
  %v81 = vadd.f32 %v80, 0.18741608
  %v82 = vmul.f32 %v73, %v81
  %v83 = vadd.f32 %v82, 1.1283791
  %v84 = vmul.f32 %v70, %v83
  %v85 = vmul.f32 %v73, 3.8918573e-05
  %v86 = vadd.f32 %v85, 0.001143296
  %v87 = vmul.f32 %v73, %v86
  %v88 = vadd.f32 %v87, 0.014752088
  %v89 = vmul.f32 %v73, %v88
  %v90 = vadd.f32 %v89, 0.112945676
  %v91 = vmul.f32 %v73, %v90
  %v92 = vadd.f32 %v91, 0.4994258
  %v93 = vmul.f32 %v73, %v92
  %v94 = vadd.f32 %v93, 1.0
  %v95 = vrcp.pop %v94
  %v96 = vmul.f32 %v94, %v95
  %v97 = vsub.f32 1.0, %v96
  %v98 = vmul.f32 %v95, %v97
  %v99 = vadd.f32 %v95, %v98
  %vm100 = vweird.f32 %v94
  %vm101 = vweird.f32 %v95
  %vm102 = vmor %vm100, %vm101
  %v103 = vsel %vm102, %v95, %v99
  %v104 = vand.u32 2147483647, %v94
  %vm105 = vcmp.eq.f32.partialorder %v104, 8.507059e+37
  %v106 = vand.u32 %v94, 2147483648
  %v107 = vor.u32 1.1754944e-38, %v106
  %v108 = vsel %vm105, %v107, %v103
  %v109 = vmul.f32 %v84, %v108
  %v110 = vmin.f32 %v109, 1.0
  %v111 = vmax.f32 %v110, -1.0
  %v112 = vmul.f32 %v71, %v71
  %v113 = vmin.f32 16.0, %v112
  %v114 = vmul.f32 %v113, 2.1237322e-06
  %v115 = vadd.f32 %v114, 0.00028619796
  %v116 = vmul.f32 %v113, %v115
  %v117 = vadd.f32 %v116, 0.0036580483
  %v118 = vmul.f32 %v113, %v117
  %v119 = vadd.f32 %v118, 0.05243302
  %v120 = vmul.f32 %v113, %v119
  %v121 = vadd.f32 %v120, 0.18741608
  %v122 = vmul.f32 %v113, %v121
  %v123 = vadd.f32 %v122, 1.1283791
  %v124 = vmul.f32 %v71, %v123
  %v125 = vmul.f32 %v113, 3.8918573e-05
  %v126 = vadd.f32 %v125, 0.001143296
  %v127 = vmul.f32 %v113, %v126
  %v128 = vadd.f32 %v127, 0.014752088
  %v129 = vmul.f32 %v113, %v128
  %v130 = vadd.f32 %v129, 0.112945676
  %v131 = vmul.f32 %v113, %v130
  %v132 = vadd.f32 %v131, 0.4994258
  %v133 = vmul.f32 %v113, %v132
  %v134 = vadd.f32 %v133, 1.0
  %v135 = vrcp.pop %v134
  %v136 = vmul.f32 %v134, %v135
  %v137 = vsub.f32 1.0, %v136
  %v138 = vmul.f32 %v135, %v137
  %v139 = vadd.f32 %v135, %v138
  %vm140 = vweird.f32 %v134
  %vm141 = vweird.f32 %v135
  %vm142 = vmor %vm140, %vm141
  %v143 = vsel %vm142, %v135, %v139
  %v144 = vand.u32 2147483647, %v134
  %vm145 = vcmp.eq.f32.partialorder %v144, 8.507059e+37
  %v146 = vand.u32 %v134, 2147483648
  %v147 = vor.u32 1.1754944e-38, %v146
  %v148 = vsel %vm145, %v147, %v143
  %v149 = vmul.f32 %v124, %v148
  %v150 = vmin.f32 %v149, 1.0
  %v151 = vmax.f32 %v150, -1.0
  %v152 = vadd.f32 %v111, 1.0
  %v153 = vadd.f32 %v151, 1.0
  %v154 = vmul.f32 %v68, %v152
  %v155 = vmul.f32 %v69, %v153
  %v156 = vpack.c.bf16 %v155, %v154
  %v157 = vld [vmem:[%s3] sm:$0xf]
  %v158 = vld [vmem:[%s3 + $0x4] sm:$0xf]
  %v159 = vld [vmem:[%s3 + $0x8] sm:$0xf]
  %v160 = vld [vmem:[%s3 + $0xc] sm:$0xf]
  %v161 = vld [vmem:[%s3 + $0x10] sm:$0xf]
  %v162 = vld [vmem:[%s3 + $0x14] sm:$0xf]
  %v163 = vld [vmem:[%s3 + $0x18] sm:$0xf]
  %v164 = vld [vmem:[%s3 + $0x1c] sm:$0xf]
  %v165 = vld [vmem:[%s4] sm:$0x1]
  %v167 = vperm.slane %v165, 0
  %v177 = vunpack.c.l.b16 %v157
  %v178 = vunpack.c.l.b16 %v158
  %v179 = vunpack.c.l.b16 %v159
  %v180 = vunpack.c.l.b16 %v160
  %v181 = vunpack.c.l.b16 %v161
  %v182 = vunpack.c.l.b16 %v162
  %v183 = vunpack.c.l.b16 %v163
  %v184 = vunpack.c.l.b16 %v164
  %v185 = vpack.c.b16 %v178, %v177
  %v186 = vpack.c.b16 %v180, %v179
  %v187 = vpack.c.b16 %v182, %v181
  %v188 = vpack.c.b16 %v184, %v183
  %vm193 = vcmask 523264
  %v195 = vsel %vm193, %v156, 0
  %197 = vmatpush.bf16.msra.mxu0 0
  %198 = vmatpush.bf16.msra.mxu0 0
  %199 = vmatpush.bf16.msra.mxu0 0
  %200 = vmatpush.bf16.msra.mxu0 0
  %201 = vmatpush.bf16.msra.mxu0 %v188
  %202 = vmatpush.bf16.msra.mxu0 %v187
  %203 = vmatpush.bf16.msra.mxu0 %v186
  %204 = vmatpush.bf16.msra.mxu0 %v185
  %205 = vmatmul.bf16.gmra.mxu0 %v195
  %v206 = vpop.f32.mrf.mxu0
  %v207 = vadd.f32 %v167, %v206
  %v208 = vpop.f32.mrf.mxu0
  %v209 = vadd.f32 %v167, %v208
  %210 = vdwg.mxu0
  %v211 = vadd.f32 %v27, %v207
  %v212 = vadd.f32 %v28, %v209
  %v213 = vsel %vm50, %v211, 0.0
  %214 = vadd.xlane.f32.xlu0 %v213
  %v215 = vpop.xlane.xlu0 %214
  %v216 = vsel %vm50, %v212, 0.0
  %217 = vadd.xlane.f32.xlu0 %v216
  %v218 = vpop.xlane.xlu0 %217
  %v219 = vrcp.pop 32.0
  %v220 = vmul.f32 32.0, %v219
  %v221 = vsub.f32 1.0, %v220
  %v222 = vmul.f32 %v219, %v221
  %v223 = vadd.f32 %v219, %v222
  %vm224 = vweird.f32 %v219
  %v225 = vsel %vm224, %v219, %v223
  %v226 = vmul.f32 %v215, %v225
  %v227 = vmul.f32 %v218, %v225
  %v228 = vsub.f32 %v211, %v226
  %v229 = vsub.f32 %v212, %v227
  %v230 = vmul.f32 %v228, %v228
  %v231 = vmul.f32 %v229, %v229
  %v232 = vsel %vm50, %v230, 0.0
  %233 = vadd.xlane.f32.xlu0 %v232
  %v234 = vpop.xlane.xlu0 %233
  %v235 = vsel %vm50, %v231, 0.0
  %236 = vadd.xlane.f32.xlu0 %v235
  %v237 = vpop.xlane.xlu0 %236
  %v238 = vmul.f32 %v234, %v225
  %v239 = vmul.f32 %v237, %v225
  %v240 = vadd.f32 %v238, 1e-05
  %v241 = vadd.f32 %v239, 1e-05
  %v242 = vrsqrt.pop %v240
  %v243 = vmul.f32 %v242, %v240
  %v244 = vmul.f32 %v243, %v242
  %v245 = vmul.f32 0.5, %v244
  %v246 = vsub.f32 1.5, %v245
  %v247 = vmul.f32 %v242, %v246
  %vm248 = vweird.f32 %v240
  %vm249 = vweird.f32 %v242
  %vm250 = vmor %vm248, %vm249
  %v251 = vsel %vm250, %v242, %v247
  %v252 = vrsqrt.pop %v241
  %v253 = vmul.f32 %v252, %v241
  %v254 = vmul.f32 %v253, %v252
  %v255 = vmul.f32 0.5, %v254
  %v256 = vsub.f32 1.5, %v255
  %v257 = vmul.f32 %v252, %v256
  %vm258 = vweird.f32 %v241
  %vm259 = vweird.f32 %v252
  %vm260 = vmor %vm258, %vm259
  %v261 = vsel %vm260, %v252, %v257
  %v262 = vmul.f32 %v228, %v251
  %v263 = vmul.f32 %v229, %v261
  %v264 = vld [vmem:[%s5] sm:$0x1]
  %v266 = vperm.slane %v264, 0
  %v268 = vmul.f32 %v262, %v266
  %v269 = vmul.f32 %v263, %v266
  %v270 = vld [vmem:[%s6] sm:$0x1]
  %v272 = vperm.slane %v270, 0
  %v274 = vadd.f32 %v268, %v272
  %v275 = vadd.f32 %v269, %v272
  %276 = vst.msk [vmem:[%s7] sm:$0xff] %vm50, %v274
  %277 = vst.msk [vmem:[%s7 + $0x8] sm:$0xff] %vm50, %v275
  // Predicated region
  $region30: #{_lambda_.8} parent=0 // pred_check
    _
  $region31: #{_lambda_.8} parent=0 // pred_check_branch
    %279 = sbr.rel (0) target = $region33
  $region32: #{_lambda_.8} parent=0 // pred_region
    _
  $region33: #{_lambda_.8} parent=0 // pred_fallthru
    _
  // Predicated region
  $region34: #{_lambda_.8} parent=0 // pred_check
    _
  $region35: #{_lambda_.8} parent=0 // pred_check_branch
    %281 = sbr.rel (0) target = $region37
  $region36: #{_lambda_.8} parent=0 // pred_region
    _
  $region37: #{_lambda_.8} parent=0 // pred_fallthru
    _

// kernel: _lambda_.11
$region0: #{_lambda_.11}
  #allocation0 [shape = 'u32[]', space=smem, size = 0x4, offset = 0x4, fixed_abs, tag = 'smem constant byte address 0x4 - core index']
  #allocation1 [shape = 'u32[72,128]{1,0:T(1,128)}', space=vmem, size = 0x9000, scoped, tag = 'internal scratch']
  %s0 = inlined_call_operand.vmem [shape: f32[16,32], index: 0, kind: input, shape index: {}]
  %s1 = inlined_call_operand.vmem [shape: bf16[32,64], index: 1, kind: input, shape index: {}]
  %s2 = inlined_call_operand.vmem [shape: f32[1,64], index: 2, kind: input, shape index: {}]
  %s3 = inlined_call_operand.vmem [shape: bf16[64,32], index: 3, kind: input, shape index: {}]
  %s4 = inlined_call_operand.vmem [shape: f32[1,32], index: 4, kind: input, shape index: {}]
  %s5 = inlined_call_operand.vmem [shape: f32[1,32], index: 5, kind: input, shape index: {}]
  %s6 = inlined_call_operand.vmem [shape: f32[1,32], index: 6, kind: input, shape index: {}]
  %s7 = inlined_call_operand.hbm [shape: f32[16,32], index: 7, kind: output, shape index: {}]
  %s8 = sld [smem:[#allocation0]]
  $region38: #{_lambda_.11} parent=0
    _
  %s10 = ssub.s32 1, %s8
  %s11 = scalar_select 0, %s10, %s8
  $region1: #{_lambda_.11} parent=0
    #allocation2 [shape = 'u8[8192]{0}', space=vmem, size = 0x2000, scoped, tag = 'output window, operand 0, single buffered']
    #allocation3 [shape = 's32[1]{0}', space=sflag, size = 0x4, scoped, tag = 'scoped memory for _lambda_.11']
    %12 = vsyncpa [#allocation3], 0
    // Predicated region
    $region2: #{_lambda_.11} parent=1 // pred_check
      _
    $region3: #{_lambda_.11} parent=1 // pred_check_branch
      %14 = sbr.rel (0) target = $region5
    $region4: #{_lambda_.11} parent=1 // pred_region
      _
    $region5: #{_lambda_.11} parent=1 // pred_fallthru
      _
    // Predicated region
    $region6: #{_lambda_.11} parent=1 // pred_check
      _
    $region7: #{_lambda_.11} parent=1 // pred_check_branch
      %16 = sbr.rel (0) target = $region9
    $region8: #{_lambda_.11} parent=1 // pred_region
      _
    $region9: #{_lambda_.11} parent=1 // pred_fallthru
      _
    // Predicated region
    $region10: #{_lambda_.11} parent=1 // pred_check
      _
    $region11: #{_lambda_.11} parent=1 // pred_check_branch
      %18 = sbr.rel (0) target = $region13
    $region12: #{_lambda_.11} parent=1 // pred_region
      _
    $region13: #{_lambda_.11} parent=1 // pred_fallthru
      _
    // Predicated region
    $region14: #{_lambda_.11} parent=1 // pred_check
      _
    $region15: #{_lambda_.11} parent=1 // pred_check_branch
      %20 = sbr.rel (0) target = $region17
    $region16: #{_lambda_.11} parent=1 // pred_region
      _
    $region17: #{_lambda_.11} parent=1 // pred_fallthru
      _
    // Predicated region
    $region18: #{_lambda_.11} parent=1 // pred_check
      _
    $region19: #{_lambda_.11} parent=1 // pred_check_branch
      %22 = sbr.rel (0) target = $region21
    $region20: #{_lambda_.11} parent=1 // pred_region
      _
    $region21: #{_lambda_.11} parent=1 // pred_fallthru
      _
    // Predicated region
    $region22: #{_lambda_.11} parent=1 // pred_check
      _
    $region23: #{_lambda_.11} parent=1 // pred_check_branch
      %24 = sbr.rel (0) target = $region25
    $region24: #{_lambda_.11} parent=1 // pred_region
      _
    $region25: #{_lambda_.11} parent=1 // pred_fallthru
      _
    // Predicated region
    $region26: #{_lambda_.11} parent=1 // pred_check
      _
    $region27: #{_lambda_.11} parent=1 // pred_check_branch
      %26 = sbr.rel (0) target = $region29
    $region28: #{_lambda_.11} parent=1 // pred_region
      _
    $region29: #{_lambda_.11} parent=1 // pred_fallthru
      _
    %v28 = vld [vmem:[%s0] sm:$0xff]
    %v29 = vld [vmem:[%s0 + $0x8] sm:$0xff]
    %v30 = vpack.c.bf16 %v29, %v28
    %v31 = vld [vmem:[%s1] sm:$0xf]
    %v32 = vld [vmem:[%s1 + $0x4] sm:$0xf]
    %v33 = vld [vmem:[%s1 + $0x8] sm:$0xf]
    %v34 = vld [vmem:[%s1 + $0xc] sm:$0xf]
    %v35 = vld [vmem:[%s2] sm:$0x1]
    %v37 = vperm.slane %v35, 0
    %v43 = vunpack.c.l.b16 %v31
    %v44 = vunpack.c.l.b16 %v32
    %v45 = vunpack.c.l.b16 %v33
    %v46 = vunpack.c.l.b16 %v34
    %v47 = vpack.c.b16 %v44, %v43
    %v48 = vpack.c.b16 %v46, %v45
    %vm51 = vcmask 261120
    %v53 = vsel %vm51, %v30, 0
    %55 = vmatpush.bf16.msra.mxu0 0
    %56 = vmatpush.bf16.msra.mxu0 0
    %57 = vmatpush.bf16.msra.mxu0 0
    %58 = vmatpush.bf16.msra.mxu0 0
    %59 = vmatpush.bf16.msra.mxu0 0
    %60 = vmatpush.bf16.msra.mxu0 0
    %61 = vmatpush.bf16.msra.mxu0 %v48
    %62 = vmatpush.bf16.msra.mxu0 %v47
    %63 = vmatmul.bf16.gmra.mxu0 %v53
    %v64 = vpop.f32.mrf.mxu0
    %v65 = vadd.f32 %v37, %v64
    %v66 = vpop.f32.mrf.mxu0
    %v67 = vadd.f32 %v37, %v66
    %68 = vdwg.mxu0
    %v69 = vmul.f32 %v65, 0.5
    %v70 = vmul.f32 %v67, 0.5
    %v71 = vmul.f32 %v65, 0.70710677
    %v72 = vmul.f32 %v67, 0.70710677
    %v73 = vmul.f32 %v71, %v71
    %v74 = vmin.f32 16.0, %v73
    %v75 = vmul.f32 %v74, 2.1237322e-06
    %v76 = vadd.f32 %v75, 0.00028619796
    %v77 = vmul.f32 %v74, %v76
    %v78 = vadd.f32 %v77, 0.0036580483
    %v79 = vmul.f32 %v74, %v78
    %v80 = vadd.f32 %v79, 0.05243302
    %v81 = vmul.f32 %v74, %v80
    %v82 = vadd.f32 %v81, 0.18741608
    %v83 = vmul.f32 %v74, %v82
    %v84 = vadd.f32 %v83, 1.1283791
    %v85 = vmul.f32 %v71, %v84
    %v86 = vmul.f32 %v74, 3.8918573e-05
    %v87 = vadd.f32 %v86, 0.001143296
    %v88 = vmul.f32 %v74, %v87
    %v89 = vadd.f32 %v88, 0.014752088
    %v90 = vmul.f32 %v74, %v89
    %v91 = vadd.f32 %v90, 0.112945676
    %v92 = vmul.f32 %v74, %v91
    %v93 = vadd.f32 %v92, 0.4994258
    %v94 = vmul.f32 %v74, %v93
    %v95 = vadd.f32 %v94, 1.0
    %v96 = vrcp.pop %v95
    %v97 = vmul.f32 %v95, %v96
    %v98 = vsub.f32 1.0, %v97
    %v99 = vmul.f32 %v96, %v98
    %v100 = vadd.f32 %v96, %v99
    %vm101 = vweird.f32 %v95
    %vm102 = vweird.f32 %v96
    %vm103 = vmor %vm101, %vm102
    %v104 = vsel %vm103, %v96, %v100
    %v105 = vand.u32 2147483647, %v95
    %vm106 = vcmp.eq.f32.partialorder %v105, 8.507059e+37
    %v107 = vand.u32 %v95, 2147483648
    %v108 = vor.u32 1.1754944e-38, %v107
    %v109 = vsel %vm106, %v108, %v104
    %v110 = vmul.f32 %v85, %v109
    %v111 = vmin.f32 %v110, 1.0
    %v112 = vmax.f32 %v111, -1.0
    %v113 = vmul.f32 %v72, %v72
    %v114 = vmin.f32 16.0, %v113
    %v115 = vmul.f32 %v114, 2.1237322e-06
    %v116 = vadd.f32 %v115, 0.00028619796
    %v117 = vmul.f32 %v114, %v116
    %v118 = vadd.f32 %v117, 0.0036580483
    %v119 = vmul.f32 %v114, %v118
    %v120 = vadd.f32 %v119, 0.05243302
    %v121 = vmul.f32 %v114, %v120
    %v122 = vadd.f32 %v121, 0.18741608
    %v123 = vmul.f32 %v114, %v122
    %v124 = vadd.f32 %v123, 1.1283791
    %v125 = vmul.f32 %v72, %v124
    %v126 = vmul.f32 %v114, 3.8918573e-05
    %v127 = vadd.f32 %v126, 0.001143296
    %v128 = vmul.f32 %v114, %v127
    %v129 = vadd.f32 %v128, 0.014752088
    %v130 = vmul.f32 %v114, %v129
    %v131 = vadd.f32 %v130, 0.112945676
    %v132 = vmul.f32 %v114, %v131
    %v133 = vadd.f32 %v132, 0.4994258
    %v134 = vmul.f32 %v114, %v133
    %v135 = vadd.f32 %v134, 1.0
    %v136 = vrcp.pop %v135
    %v137 = vmul.f32 %v135, %v136
    %v138 = vsub.f32 1.0, %v137
    %v139 = vmul.f32 %v136, %v138
    %v140 = vadd.f32 %v136, %v139
    %vm141 = vweird.f32 %v135
    %vm142 = vweird.f32 %v136
    %vm143 = vmor %vm141, %vm142
    %v144 = vsel %vm143, %v136, %v140
    %v145 = vand.u32 2147483647, %v135
    %vm146 = vcmp.eq.f32.partialorder %v145, 8.507059e+37
    %v147 = vand.u32 %v135, 2147483648
    %v148 = vor.u32 1.1754944e-38, %v147
    %v149 = vsel %vm146, %v148, %v144
    %v150 = vmul.f32 %v125, %v149
    %v151 = vmin.f32 %v150, 1.0
    %v152 = vmax.f32 %v151, -1.0
    %v153 = vadd.f32 %v112, 1.0
    %v154 = vadd.f32 %v152, 1.0
    %v155 = vmul.f32 %v69, %v153
    %v156 = vmul.f32 %v70, %v154
    %v157 = vpack.c.bf16 %v156, %v155
    %v158 = vld [vmem:[%s3] sm:$0xf]
    %v159 = vld [vmem:[%s3 + $0x4] sm:$0xf]
    %v160 = vld [vmem:[%s3 + $0x8] sm:$0xf]
    %v161 = vld [vmem:[%s3 + $0xc] sm:$0xf]
    %v162 = vld [vmem:[%s3 + $0x10] sm:$0xf]
    %v163 = vld [vmem:[%s3 + $0x14] sm:$0xf]
    %v164 = vld [vmem:[%s3 + $0x18] sm:$0xf]
    %v165 = vld [vmem:[%s3 + $0x1c] sm:$0xf]
    %v166 = vld [vmem:[%s4] sm:$0x1]
    %v168 = vperm.slane %v166, 0
    %v178 = vunpack.c.l.b16 %v158
    %v179 = vunpack.c.l.b16 %v159
    %v180 = vunpack.c.l.b16 %v160
    %v181 = vunpack.c.l.b16 %v161
    %v182 = vunpack.c.l.b16 %v162
    %v183 = vunpack.c.l.b16 %v163
    %v184 = vunpack.c.l.b16 %v164
    %v185 = vunpack.c.l.b16 %v165
    %v186 = vpack.c.b16 %v179, %v178
    %v187 = vpack.c.b16 %v181, %v180
    %v188 = vpack.c.b16 %v183, %v182
    %v189 = vpack.c.b16 %v185, %v184
    %vm194 = vcmask 523264
    %v196 = vsel %vm194, %v157, 0
    %198 = vmatpush.bf16.msra.mxu0 0
    %199 = vmatpush.bf16.msra.mxu0 0
    %200 = vmatpush.bf16.msra.mxu0 0
    %201 = vmatpush.bf16.msra.mxu0 0
    %202 = vmatpush.bf16.msra.mxu0 %v189
    %203 = vmatpush.bf16.msra.mxu0 %v188
    %204 = vmatpush.bf16.msra.mxu0 %v187
    %205 = vmatpush.bf16.msra.mxu0 %v186
    %206 = vmatmul.bf16.gmra.mxu0 %v196
    %v207 = vpop.f32.mrf.mxu0
    %v208 = vadd.f32 %v168, %v207
    %v209 = vpop.f32.mrf.mxu0
    %v210 = vadd.f32 %v168, %v209
    %211 = vdwg.mxu0
    %v212 = vadd.f32 %v28, %v208
    %v213 = vadd.f32 %v29, %v210
    %v214 = vsel %vm51, %v212, 0.0
    %215 = vadd.xlane.f32.xlu0 %v214
    %v216 = vpop.xlane.xlu0 %215
    %v217 = vsel %vm51, %v213, 0.0
    %218 = vadd.xlane.f32.xlu0 %v217
    %v219 = vpop.xlane.xlu0 %218
    %v220 = vrcp.pop 32.0
    %v221 = vmul.f32 32.0, %v220
    %v222 = vsub.f32 1.0, %v221
    %v223 = vmul.f32 %v220, %v222
    %v224 = vadd.f32 %v220, %v223
    %vm225 = vweird.f32 %v220
    %v226 = vsel %vm225, %v220, %v224
    %v227 = vmul.f32 %v216, %v226
    %v228 = vmul.f32 %v219, %v226
    %v229 = vsub.f32 %v212, %v227
    %v230 = vsub.f32 %v213, %v228
    %v231 = vmul.f32 %v229, %v229
    %v232 = vmul.f32 %v230, %v230
    %v233 = vsel %vm51, %v231, 0.0
    %234 = vadd.xlane.f32.xlu0 %v233
    %v235 = vpop.xlane.xlu0 %234
    %v236 = vsel %vm51, %v232, 0.0
    %237 = vadd.xlane.f32.xlu0 %v236
    %v238 = vpop.xlane.xlu0 %237
    %v239 = vmul.f32 %v235, %v226
    %v240 = vmul.f32 %v238, %v226
    %v241 = vadd.f32 %v239, 1e-05
    %v242 = vadd.f32 %v240, 1e-05
    %v243 = vrsqrt.pop %v241
    %v244 = vmul.f32 %v243, %v241
    %v245 = vmul.f32 %v244, %v243
    %v246 = vmul.f32 0.5, %v245
    %v247 = vsub.f32 1.5, %v246
    %v248 = vmul.f32 %v243, %v247
    %vm249 = vweird.f32 %v241
    %vm250 = vweird.f32 %v243
    %vm251 = vmor %vm249, %vm250
    %v252 = vsel %vm251, %v243, %v248
    %v253 = vrsqrt.pop %v242
    %v254 = vmul.f32 %v253, %v242
    %v255 = vmul.f32 %v254, %v253
    %v256 = vmul.f32 0.5, %v255
    %v257 = vsub.f32 1.5, %v256
    %v258 = vmul.f32 %v253, %v257
    %vm259 = vweird.f32 %v242
    %vm260 = vweird.f32 %v253
    %vm261 = vmor %vm259, %vm260
    %v262 = vsel %vm261, %v253, %v258
    %v263 = vmul.f32 %v229, %v252
    %v264 = vmul.f32 %v230, %v262
    %v265 = vld [vmem:[%s5] sm:$0x1]
    %v267 = vperm.slane %v265, 0
    %v269 = vmul.f32 %v263, %v267
    %v270 = vmul.f32 %v264, %v267
    %v271 = vld [vmem:[%s6] sm:$0x1]
    %v273 = vperm.slane %v271, 0
    %v275 = vadd.f32 %v269, %v273
    %v276 = vadd.f32 %v270, %v273
    %277 = vst.msk [vmem:[#allocation2] sm:$0xff] %vm51, %v275
    %278 = vst.msk [vmem:[#allocation2 + $0x8] sm:$0xff] %vm51, %v276
    // Predicated region
    $region30: #{_lambda_.11} parent=1 // pred_check
      _
    $region31: #{_lambda_.11} parent=1 // pred_check_branch
      %280 = sbr.rel (0) target = $region33
    $region32: #{_lambda_.11} parent=1 // pred_region
      %282 = vsyncadd [#allocation3], 0
      %s283 = sshll.u32 [#allocation2], 4
      %s284 = int_to_ptr.vmem [resolvable:$true] %s283
      %s285 = sshll.u32 %s7, 4
      %s286 = int_to_ptr.hbm [resolvable:$true] %s285
      %291 = dma.vmem_to_hbm [thread:$0]  %s284, 256, %s286, [#allocation3], 128, 128, 8
    $region33: #{_lambda_.11} parent=1 // pred_fallthru
      _
    // Predicated region
    $region34: #{_lambda_.11} parent=1 // pred_check
      _
    $region35: #{_lambda_.11} parent=1 // pred_check_branch
      %293 = sbr.rel (0) target = $region37
    $region36: #{_lambda_.11} parent=1 // pred_region
      %295 = dma.done [#allocation3], 256
    $region37: #{_lambda_.11} parent=1 // pred_fallthru
      _
    %296 = vsyncpa [#allocation3], 1

// kernel: _lambda_.6
$region0: #{_lambda_.6}
  #allocation0 [shape = 'u32[]', space=smem, size = 0x4, offset = 0x4, fixed_abs, tag = 'smem constant byte address 0x4 - core index']
  #allocation1 [shape = 'u32[72,128]{1,0:T(1,128)}', space=vmem, size = 0x9000, scoped, tag = 'internal scratch']
  #allocation2 [shape = 'f32[8,32]{1,0:T(8,128)}', space=vmem, size = 0x1000, scoped, tag = 'scratch operand']
  %s0 = inlined_call_operand.vmem [shape: f32[2,8,32], index: 0, kind: input, shape index: {}, may-alias: {0,1}]
  %s1 = inlined_call_operand.vmem [shape: f32[1,2,8,32], index: 1, kind: input, shape index: {}, may-alias: {0,1}]
  %s2 = inlined_call_operand.vmem [shape: bf16[1,4,32,8], index: 2, kind: input, shape index: {}]
  %s3 = inlined_call_operand.vmem [shape: f32[1,4,1,8], index: 3, kind: input, shape index: {}]
  %s4 = inlined_call_operand.vmem [shape: bf16[1,4,32,8], index: 4, kind: input, shape index: {}]
  %s5 = inlined_call_operand.vmem [shape: f32[1,4,1,8], index: 5, kind: input, shape index: {}]
  %s6 = inlined_call_operand.vmem [shape: bf16[1,4,32,8], index: 6, kind: input, shape index: {}]
  %s7 = inlined_call_operand.vmem [shape: f32[1,4,1,8], index: 7, kind: input, shape index: {}]
  %s8 = inlined_call_operand.vmem [shape: bf16[1,4,8,32], index: 8, kind: input, shape index: {}]
  %s9 = inlined_call_operand.vmem [shape: f32[1,1,32], index: 9, kind: input, shape index: {}]
  %s10 = inlined_call_operand.vmem [shape: f32[1,32], index: 10, kind: input, shape index: {}]
  %s11 = inlined_call_operand.vmem [shape: f32[1,32], index: 11, kind: input, shape index: {}]
  %s12 = inlined_call_operand.vmem [shape: f32[2,8,32], index: 12, kind: output, shape index: {}]
  %s13 = sld [smem:[#allocation0]]
  $region89: #{_lambda_.6} parent=0
    _
  %s15 = ssub.s32 1, %s13
  %s16 = scalar_select 0, %s15, %s13
  loop: start=0, step=1, limit=4
  $region2: #{_lambda_.6} parent=0 // loop_pre_header
    _
  $region3: #{_lambda_.6} parent=0 // loop_header
    %s18 = sphi 0, %s22
    %p19 = scmp.ge.s32.totalorder %s18, 4
    %s25 = sphi 0, %s37
    %s26 = sphi 0, %s33
    %s27 = sphi 0, %s25
    %s28 = sphi 0, %s26
    %s29 = sphi 0, %s27
    %s30 = sphi 0, %s28
    %s40 = sphi 0, %s42
    %s43 = sphi 0, %s40
    %s44 = sphi 0, %s43
    %s60 = sphi 0, %s44
    %s68 = sphi 0, %s70
    %s71 = sphi 0, %s68
    %s72 = sphi 0, %s71
    %s88 = sphi 0, %s72
    %s94 = sphi 0, %s96
    %s97 = sphi 0, %s94
    %s98 = sphi 0, %s97
    %s114 = sphi 0, %s98
    %s120 = sphi 0, %s122
    %s123 = sphi 0, %s120
    %s124 = sphi 0, %s123
    %s140 = sphi 0, %s124
    %s146 = sphi 0, %s148
    %s149 = sphi 0, %s146
    %s150 = sphi 0, %s149
    %s166 = sphi 0, %s150
    %s172 = sphi 0, %s174
    %s175 = sphi 0, %s172
    %s176 = sphi 0, %s175
    %s192 = sphi 0, %s176
    %s198 = sphi 0, %s200
    %s201 = sphi 0, %s198
    %s202 = sphi 0, %s201
    %s218 = sphi 0, %s202
    %s224 = sphi 0, %s226
    %s227 = sphi 0, %s224
    %s228 = sphi 0, %s227
    %s244 = sphi 0, %s228
    %s250 = sphi 0, %s252
    %s253 = sphi 0, %s250
    %s254 = sphi 0, %s253
    %s270 = sphi 0, %s254
    %s276 = sphi 0, %s278
    %s279 = sphi 0, %s276
    %s280 = sphi 0, %s279
    %s296 = sphi 0, %s280
    %s300 = sphi 0, %s300
    %s302 = sphi 0, %s300
    %s303 = sphi 0, %s302
    %s317 = sphi 0, %s303
    %s321 = sphi 0, %s321
    %s323 = sphi 0, %s321
    %s324 = sphi 0, %s323
    %s338 = sphi 0, %s324
    %s344 = sphi 0, %s346
    %s347 = sphi 0, %s344
    %s348 = sphi 0, %s347
    %s364 = sphi 0, %s348
  $region4: #{_lambda_.6} parent=0 // loop_header_branch
    %21 = sbr.rel (%p19) target = $region8
  $region5: #{_lambda_.6} parent=0 // loop_body
    %s23 = ssub.s32 %s18, 1
    %s24 = ssub.s32 %s18, 2
    %s31 = sadd.s32 1, %s26
    %p32 = scmp.ge.s32.totalorder %s31, 1
    %s33 = scalar_select %p32, 0, %s31
    %s34 = sadd.s32 1, %s25
    %s35 = scalar_select %p32, %s34, %s25
    %p36 = scmp.ge.s32.totalorder %s35, 2
    %s37 = scalar_select %p36, 0, %s35
    %s38 = ssub.s32 %s25, %s37
    %p39 = scmp.eq.s32.totalorder %s38, 0
    %s41 = sadd.s32 %s40, 1
    %s42 = scalar_select %p39, %s40, %s41
    %p45 = pneg %p39
    %p46 = scmp.eq.s32.totalorder %s18, 1
    %p47 = por %p45, %p46
    %p48 = scmp.ne.s32.totalorder %s40, %s43
    %p49 = scmp.eq.s32.totalorder %s18, 0
    %p50 = por %p48, %p49
    %p51 = scmp.ne.s32.totalorder %s40, %s43
    %p52 = scmp.eq.s32.totalorder %s23, 1
    %p53 = por %p51, %p52
    %p54 = scmp.ne.s32.totalorder %s43, %s44
    %p55 = scmp.eq.s32.totalorder %s23, 0
    %p56 = por %p54, %p55
    %p57 = scmp.ne.s32.totalorder %s43, %s44
    %p58 = scmp.eq.s32.totalorder %s24, 1
    %p59 = por %p57, %p58
    %p61 = scmp.ne.s32.totalorder %s44, %s60
    %p62 = scmp.eq.s32.totalorder %s24, 0
    %p63 = por %p61, %p62
    %s64 = ssub.s32 %s26, %s33
    %s65 = ssub.s32 %s25, %s37
    %s66 = sor.u32 %s64, %s65
    %p67 = scmp.eq.s32.totalorder %s66, 0
    %s69 = sadd.s32 %s68, 1
    %s70 = scalar_select %p67, %s68, %s69
    %p73 = pneg %p67
    %p74 = scmp.eq.s32.totalorder %s18, 1
    %p75 = por %p73, %p74
    %p76 = scmp.ne.s32.totalorder %s68, %s71
    %p77 = scmp.eq.s32.totalorder %s18, 0
    %p78 = por %p76, %p77
    %p79 = scmp.ne.s32.totalorder %s68, %s71
    %p80 = scmp.eq.s32.totalorder %s23, 1
    %p81 = por %p79, %p80
    %p82 = scmp.ne.s32.totalorder %s71, %s72
    %p83 = scmp.eq.s32.totalorder %s23, 0
    %p84 = por %p82, %p83
    %p85 = scmp.ne.s32.totalorder %s71, %s72
    %p86 = scmp.eq.s32.totalorder %s24, 1
    %p87 = por %p85, %p86
    %p89 = scmp.ne.s32.totalorder %s72, %s88
    %p90 = scmp.eq.s32.totalorder %s24, 0
    %p91 = por %p89, %p90
    %s92 = ssub.s32 %s26, %s33
    %p93 = scmp.eq.s32.totalorder %s92, 0
    %s95 = sadd.s32 %s94, 1
    %s96 = scalar_select %p93, %s94, %s95
    %p99 = pneg %p93
    %p100 = scmp.eq.s32.totalorder %s18, 1
    %p101 = por %p99, %p100
    %p102 = scmp.ne.s32.totalorder %s94, %s97
    %p103 = scmp.eq.s32.totalorder %s18, 0
    %p104 = por %p102, %p103
    %p105 = scmp.ne.s32.totalorder %s94, %s97
    %p106 = scmp.eq.s32.totalorder %s23, 1
    %p107 = por %p105, %p106
    %p108 = scmp.ne.s32.totalorder %s97, %s98
    %p109 = scmp.eq.s32.totalorder %s23, 0
    %p110 = por %p108, %p109
    %p111 = scmp.ne.s32.totalorder %s97, %s98
    %p112 = scmp.eq.s32.totalorder %s24, 1
    %p113 = por %p111, %p112
    %p115 = scmp.ne.s32.totalorder %s98, %s114
    %p116 = scmp.eq.s32.totalorder %s24, 0
    %p117 = por %p115, %p116
    %s118 = ssub.s32 %s26, %s33
    %p119 = scmp.eq.s32.totalorder %s118, 0
    %s121 = sadd.s32 %s120, 1
    %s122 = scalar_select %p119, %s120, %s121
    %p125 = pneg %p119
    %p126 = scmp.eq.s32.totalorder %s18, 1
    %p127 = por %p125, %p126
    %p128 = scmp.ne.s32.totalorder %s120, %s123
    %p129 = scmp.eq.s32.totalorder %s18, 0
    %p130 = por %p128, %p129
    %p131 = scmp.ne.s32.totalorder %s120, %s123
    %p132 = scmp.eq.s32.totalorder %s23, 1
    %p133 = por %p131, %p132
    %p134 = scmp.ne.s32.totalorder %s123, %s124
    %p135 = scmp.eq.s32.totalorder %s23, 0
    %p136 = por %p134, %p135
    %p137 = scmp.ne.s32.totalorder %s123, %s124
    %p138 = scmp.eq.s32.totalorder %s24, 1
    %p139 = por %p137, %p138
    %p141 = scmp.ne.s32.totalorder %s124, %s140
    %p142 = scmp.eq.s32.totalorder %s24, 0
    %p143 = por %p141, %p142
    %s144 = ssub.s32 %s26, %s33
    %p145 = scmp.eq.s32.totalorder %s144, 0
    %s147 = sadd.s32 %s146, 1
    %s148 = scalar_select %p145, %s146, %s147
    %p151 = pneg %p145
    %p152 = scmp.eq.s32.totalorder %s18, 1
    %p153 = por %p151, %p152
    %p154 = scmp.ne.s32.totalorder %s146, %s149
    %p155 = scmp.eq.s32.totalorder %s18, 0
    %p156 = por %p154, %p155
    %p157 = scmp.ne.s32.totalorder %s146, %s149
    %p158 = scmp.eq.s32.totalorder %s23, 1
    %p159 = por %p157, %p158
    %p160 = scmp.ne.s32.totalorder %s149, %s150
    %p161 = scmp.eq.s32.totalorder %s23, 0
    %p162 = por %p160, %p161
    %p163 = scmp.ne.s32.totalorder %s149, %s150
    %p164 = scmp.eq.s32.totalorder %s24, 1
    %p165 = por %p163, %p164
    %p167 = scmp.ne.s32.totalorder %s150, %s166
    %p168 = scmp.eq.s32.totalorder %s24, 0
    %p169 = por %p167, %p168
    %s170 = ssub.s32 %s26, %s33
    %p171 = scmp.eq.s32.totalorder %s170, 0
    %s173 = sadd.s32 %s172, 1
    %s174 = scalar_select %p171, %s172, %s173
    %p177 = pneg %p171
    %p178 = scmp.eq.s32.totalorder %s18, 1
    %p179 = por %p177, %p178
    %p180 = scmp.ne.s32.totalorder %s172, %s175
    %p181 = scmp.eq.s32.totalorder %s18, 0
    %p182 = por %p180, %p181
    %p183 = scmp.ne.s32.totalorder %s172, %s175
    %p184 = scmp.eq.s32.totalorder %s23, 1
    %p185 = por %p183, %p184
    %p186 = scmp.ne.s32.totalorder %s175, %s176
    %p187 = scmp.eq.s32.totalorder %s23, 0
    %p188 = por %p186, %p187
    %p189 = scmp.ne.s32.totalorder %s175, %s176
    %p190 = scmp.eq.s32.totalorder %s24, 1
    %p191 = por %p189, %p190
    %p193 = scmp.ne.s32.totalorder %s176, %s192
    %p194 = scmp.eq.s32.totalorder %s24, 0
    %p195 = por %p193, %p194
    %s196 = ssub.s32 %s26, %s33
    %p197 = scmp.eq.s32.totalorder %s196, 0
    %s199 = sadd.s32 %s198, 1
    %s200 = scalar_select %p197, %s198, %s199
    %p203 = pneg %p197
    %p204 = scmp.eq.s32.totalorder %s18, 1
    %p205 = por %p203, %p204
    %p206 = scmp.ne.s32.totalorder %s198, %s201
    %p207 = scmp.eq.s32.totalorder %s18, 0
    %p208 = por %p206, %p207
    %p209 = scmp.ne.s32.totalorder %s198, %s201
    %p210 = scmp.eq.s32.totalorder %s23, 1
    %p211 = por %p209, %p210
    %p212 = scmp.ne.s32.totalorder %s201, %s202
    %p213 = scmp.eq.s32.totalorder %s23, 0
    %p214 = por %p212, %p213
    %p215 = scmp.ne.s32.totalorder %s201, %s202
    %p216 = scmp.eq.s32.totalorder %s24, 1
    %p217 = por %p215, %p216
    %p219 = scmp.ne.s32.totalorder %s202, %s218
    %p220 = scmp.eq.s32.totalorder %s24, 0
    %p221 = por %p219, %p220
    %s222 = ssub.s32 %s26, %s33
    %p223 = scmp.eq.s32.totalorder %s222, 0
    %s225 = sadd.s32 %s224, 1
    %s226 = scalar_select %p223, %s224, %s225
    %p229 = pneg %p223
    %p230 = scmp.eq.s32.totalorder %s18, 1
    %p231 = por %p229, %p230
    %p232 = scmp.ne.s32.totalorder %s224, %s227
    %p233 = scmp.eq.s32.totalorder %s18, 0
    %p234 = por %p232, %p233
    %p235 = scmp.ne.s32.totalorder %s224, %s227
    %p236 = scmp.eq.s32.totalorder %s23, 1
    %p237 = por %p235, %p236
    %p238 = scmp.ne.s32.totalorder %s227, %s228
    %p239 = scmp.eq.s32.totalorder %s23, 0
    %p240 = por %p238, %p239
    %p241 = scmp.ne.s32.totalorder %s227, %s228
    %p242 = scmp.eq.s32.totalorder %s24, 1
    %p243 = por %p241, %p242
    %p245 = scmp.ne.s32.totalorder %s228, %s244
    %p246 = scmp.eq.s32.totalorder %s24, 0
    %p247 = por %p245, %p246
    %s248 = ssub.s32 %s26, %s33
    %p249 = scmp.eq.s32.totalorder %s248, 0
    %s251 = sadd.s32 %s250, 1
    %s252 = scalar_select %p249, %s250, %s251
    %p255 = pneg %p249
    %p256 = scmp.eq.s32.totalorder %s18, 1
    %p257 = por %p255, %p256
    %p258 = scmp.ne.s32.totalorder %s250, %s253
    %p259 = scmp.eq.s32.totalorder %s18, 0
    %p260 = por %p258, %p259
    %p261 = scmp.ne.s32.totalorder %s250, %s253
    %p262 = scmp.eq.s32.totalorder %s23, 1
    %p263 = por %p261, %p262
    %p264 = scmp.ne.s32.totalorder %s253, %s254
    %p265 = scmp.eq.s32.totalorder %s23, 0
    %p266 = por %p264, %p265
    %p267 = scmp.ne.s32.totalorder %s253, %s254
    %p268 = scmp.eq.s32.totalorder %s24, 1
    %p269 = por %p267, %p268
    %p271 = scmp.ne.s32.totalorder %s254, %s270
    %p272 = scmp.eq.s32.totalorder %s24, 0
    %p273 = por %p271, %p272
    %s274 = ssub.s32 %s26, %s33
    %p275 = scmp.eq.s32.totalorder %s274, 0
    %s277 = sadd.s32 %s276, 1
    %s278 = scalar_select %p275, %s276, %s277
    %p281 = pneg %p275
    %p282 = scmp.eq.s32.totalorder %s18, 1
    %p283 = por %p281, %p282
    %p284 = scmp.ne.s32.totalorder %s276, %s279
    %p285 = scmp.eq.s32.totalorder %s18, 0
    %p286 = por %p284, %p285
    %p287 = scmp.ne.s32.totalorder %s276, %s279
    %p288 = scmp.eq.s32.totalorder %s23, 1
    %p289 = por %p287, %p288
    %p290 = scmp.ne.s32.totalorder %s279, %s280
    %p291 = scmp.eq.s32.totalorder %s23, 0
    %p292 = por %p290, %p291
    %p293 = scmp.ne.s32.totalorder %s279, %s280
    %p294 = scmp.eq.s32.totalorder %s24, 1
    %p295 = por %p293, %p294
    %p297 = scmp.ne.s32.totalorder %s280, %s296
    %p298 = scmp.eq.s32.totalorder %s24, 0
    %p299 = por %p297, %p298
    %s301 = sadd.s32 %s300, 1
    %p304 = scmp.eq.s32.totalorder %s18, 1
    %p305 = scmp.ne.s32.totalorder %s300, %s302
    %p306 = scmp.eq.s32.totalorder %s18, 0
    %p307 = por %p305, %p306
    %p308 = scmp.ne.s32.totalorder %s300, %s302
    %p309 = scmp.eq.s32.totalorder %s23, 1
    %p310 = por %p308, %p309
    %p311 = scmp.ne.s32.totalorder %s302, %s303
    %p312 = scmp.eq.s32.totalorder %s23, 0
    %p313 = por %p311, %p312
    %p314 = scmp.ne.s32.totalorder %s302, %s303
    %p315 = scmp.eq.s32.totalorder %s24, 1
    %p316 = por %p314, %p315
    %p318 = scmp.ne.s32.totalorder %s303, %s317
    %p319 = scmp.eq.s32.totalorder %s24, 0
    %p320 = por %p318, %p319
    %s322 = sadd.s32 %s321, 1
    %p325 = scmp.eq.s32.totalorder %s18, 1
    %p326 = scmp.ne.s32.totalorder %s321, %s323
    %p327 = scmp.eq.s32.totalorder %s18, 0
    %p328 = por %p326, %p327
    %p329 = scmp.ne.s32.totalorder %s321, %s323
    %p330 = scmp.eq.s32.totalorder %s23, 1
    %p331 = por %p329, %p330
    %p332 = scmp.ne.s32.totalorder %s323, %s324
    %p333 = scmp.eq.s32.totalorder %s23, 0
    %p334 = por %p332, %p333
    %p335 = scmp.ne.s32.totalorder %s323, %s324
    %p336 = scmp.eq.s32.totalorder %s24, 1
    %p337 = por %p335, %p336
    %p339 = scmp.ne.s32.totalorder %s324, %s338
    %p340 = scmp.eq.s32.totalorder %s24, 0
    %p341 = por %p339, %p340
    %s342 = ssub.s32 %s25, %s37
    %p343 = scmp.eq.s32.totalorder %s342, 0
    %s345 = sadd.s32 %s344, 1
    %s346 = scalar_select %p343, %s344, %s345
    %p349 = pneg %p343
    %p350 = scmp.eq.s32.totalorder %s18, 1
    %p351 = por %p349, %p350
    %p352 = scmp.ne.s32.totalorder %s344, %s347
    %p353 = scmp.eq.s32.totalorder %s18, 0
    %p354 = por %p352, %p353
    %p355 = scmp.ne.s32.totalorder %s344, %s347
    %p356 = scmp.eq.s32.totalorder %s23, 1
    %p357 = por %p355, %p356
    %p358 = scmp.ne.s32.totalorder %s347, %s348
    %p359 = scmp.eq.s32.totalorder %s23, 0
    %p360 = por %p358, %p359
    %p361 = scmp.ne.s32.totalorder %s347, %s348
    %p362 = scmp.eq.s32.totalorder %s24, 1
    %p363 = por %p361, %p362
    %p365 = scmp.ne.s32.totalorder %s348, %s364
    %p366 = scmp.eq.s32.totalorder %s24, 0
    %p367 = por %p365, %p366
    %p368 = scmp.le.s32.totalorder 1, %s18
    %p369 = scmp.lt.s32.totalorder %s18, 3
    %p370 = pnand %p368, %p369
    %p371 = pneg %p370
    // Predicated region
    $region9: #{_lambda_.6} parent=5 // pred_check
      _
    $region10: #{_lambda_.6} parent=5 // pred_check_branch
      %373 = sbr.rel (%p370) target = $region12
    $region11: #{_lambda_.6} parent=5 // pred_region
      %s374 = ssub.s32 %s18, 1
      // Predicated region
      $region13: #{_lambda_.6} parent=11 // pred_check
        %p375 = pneg %p110
      $region14: #{_lambda_.6} parent=11 // pred_check_branch
        %377 = sbr.rel (%p375) target = $region16
      $region15: #{_lambda_.6} parent=11 // pred_region
        %p378 = scmp.lt.s32.totalorder %s28, 0
        %s379 = scalar_select %p378, %s28, 0
        %s380 = smul.addr %s379, 16
        %s381 = smul.addr %s380, 4
        %s382 = scalar_lea.vmem %s2, %s381
      $region16: #{_lambda_.6} parent=11 // pred_fallthru
        _
      // Predicated region
      $region17: #{_lambda_.6} parent=11 // pred_check
        %p383 = pneg %p136
      $region18: #{_lambda_.6} parent=11 // pred_check_branch
        %385 = sbr.rel (%p383) target = $region20
      $region19: #{_lambda_.6} parent=11 // pred_region
        %p386 = scmp.lt.s32.totalorder %s28, 0
        %s387 = scalar_select %p386, %s28, 0
        %s388 = smul.addr %s387, 4
        %s389 = scalar_lea.vmem %s3, %s388
      $region20: #{_lambda_.6} parent=11 // pred_fallthru
        _
      // Predicated region
      $region21: #{_lambda_.6} parent=11 // pred_check
        %p390 = pneg %p162
      $region22: #{_lambda_.6} parent=11 // pred_check_branch
        %392 = sbr.rel (%p390) target = $region24
      $region23: #{_lambda_.6} parent=11 // pred_region
        %p393 = scmp.lt.s32.totalorder %s28, 0
        %s394 = scalar_select %p393, %s28, 0
        %s395 = smul.addr %s394, 16
        %s396 = smul.addr %s395, 4
        %s397 = scalar_lea.vmem %s4, %s396
      $region24: #{_lambda_.6} parent=11 // pred_fallthru
        _
      // Predicated region
      $region25: #{_lambda_.6} parent=11 // pred_check
        %p398 = pneg %p188
      $region26: #{_lambda_.6} parent=11 // pred_check_branch
        %400 = sbr.rel (%p398) target = $region28
      $region27: #{_lambda_.6} parent=11 // pred_region
        %p401 = scmp.lt.s32.totalorder %s28, 0
        %s402 = scalar_select %p401, %s28, 0
        %s403 = smul.addr %s402, 4
        %s404 = scalar_lea.vmem %s5, %s403
      $region28: #{_lambda_.6} parent=11 // pred_fallthru
        _
      // Predicated region
      $region29: #{_lambda_.6} parent=11 // pred_check
        %p405 = pneg %p214
      $region30: #{_lambda_.6} parent=11 // pred_check_branch
        %407 = sbr.rel (%p405) target = $region32
      $region31: #{_lambda_.6} parent=11 // pred_region
        %p408 = scmp.lt.s32.totalorder %s28, 0
        %s409 = scalar_select %p408, %s28, 0
        %s410 = smul.addr %s409, 16
        %s411 = smul.addr %s410, 4
        %s412 = scalar_lea.vmem %s6, %s411
      $region32: #{_lambda_.6} parent=11 // pred_fallthru
        _
      // Predicated region
      $region33: #{_lambda_.6} parent=11 // pred_check
        %p413 = pneg %p240
      $region34: #{_lambda_.6} parent=11 // pred_check_branch
        %415 = sbr.rel (%p413) target = $region36
      $region35: #{_lambda_.6} parent=11 // pred_region
        %p416 = scmp.lt.s32.totalorder %s28, 0
        %s417 = scalar_select %p416, %s28, 0
        %s418 = smul.addr %s417, 4
        %s419 = scalar_lea.vmem %s7, %s418
      $region36: #{_lambda_.6} parent=11 // pred_fallthru
        _
      // Predicated region
      $region37: #{_lambda_.6} parent=11 // pred_check
        %p420 = pneg %p266
      $region38: #{_lambda_.6} parent=11 // pred_check_branch
        %422 = sbr.rel (%p420) target = $region40
      $region39: #{_lambda_.6} parent=11 // pred_region
        %p423 = scmp.lt.s32.totalorder %s28, 0
        %s424 = scalar_select %p423, %s28, 0
        %s425 = smul.addr %s424, 4
        %s426 = smul.addr %s425, 4
        %s427 = scalar_lea.vmem %s8, %s426
      $region40: #{_lambda_.6} parent=11 // pred_fallthru
        _
      // Predicated region
      $region41: #{_lambda_.6} parent=11 // pred_check
        %p428 = pneg %p292
      $region42: #{_lambda_.6} parent=11 // pred_check_branch
        %430 = sbr.rel (%p428) target = $region44
      $region43: #{_lambda_.6} parent=11 // pred_region
        %p431 = scmp.lt.s32.totalorder %s28, 0
        %s432 = scalar_select %p431, %s28, 0
        %s433 = scalar_lea.vmem %s9, %s432
      $region44: #{_lambda_.6} parent=11 // pred_fallthru
        _
      // Predicated region
      $region45: #{_lambda_.6} parent=11 // pred_check
        %p434 = pneg %p313
      $region46: #{_lambda_.6} parent=11 // pred_check_branch
        %436 = sbr.rel (%p434) target = $region48
      $region47: #{_lambda_.6} parent=11 // pred_region
        _
      $region48: #{_lambda_.6} parent=11 // pred_fallthru
        _
      // Predicated region
      $region49: #{_lambda_.6} parent=11 // pred_check
        %p437 = pneg %p334
      $region50: #{_lambda_.6} parent=11 // pred_check_branch
        %439 = sbr.rel (%p437) target = $region52
      $region51: #{_lambda_.6} parent=11 // pred_region
        _
      $region52: #{_lambda_.6} parent=11 // pred_fallthru
        _
    $region12: #{_lambda_.6} parent=5 // pred_fallthru
      _
    %p440 = scmp.lt.s32.totalorder %s18, 2
    // Predicated region
    $region53: #{_lambda_.6} parent=5 // pred_check
      %p441 = pneg %p440
    $region54: #{_lambda_.6} parent=5 // pred_check_branch
      %443 = sbr.rel (%p441) target = $region56
    $region55: #{_lambda_.6} parent=5 // pred_region
      // Predicated region
      $region57: #{_lambda_.6} parent=55 // pred_check
        %p444 = pneg %p50
      $region58: #{_lambda_.6} parent=55 // pred_check_branch
        %446 = sbr.rel (%p444) target = $region60
      $region59: #{_lambda_.6} parent=55 // pred_region
        %p447 = scmp.lt.s32.totalorder %s25, 1
        %s448 = scalar_select %p447, %s25, 1
        %s449 = smul.addr %s448, 8
        %s450 = scalar_lea.vmem %s0, %s449
      $region60: #{_lambda_.6} parent=55 // pred_fallthru
        _
      // Predicated region
      $region61: #{_lambda_.6} parent=55 // pred_check
        %p451 = pneg %p78
      $region62: #{_lambda_.6} parent=55 // pred_check_branch
        %453 = sbr.rel (%p451) target = $region64
      $region63: #{_lambda_.6} parent=55 // pred_region
        %p454 = scmp.lt.s32.totalorder %s26, 0
        %s455 = scalar_select %p454, %s26, 0
        %p456 = scmp.lt.s32.totalorder %s25, 1
        %s457 = scalar_select %p456, %s25, 1
        %s458 = smul.addr %s455, 2
        %s459 = sadd.s32 %s457, %s458
        %s460 = smul.addr %s459, 8
        %s461 = scalar_lea.vmem %s1, %s460
      $region64: #{_lambda_.6} parent=55 // pred_fallthru
        _
    $region56: #{_lambda_.6} parent=5 // pred_fallthru
      _
    %p462 = scmp.le.s32.totalorder 1, %s18
    %p463 = scmp.lt.s32.totalorder %s18, 3
    %p464 = pnand %p462, %p463
    %p465 = pneg %p464
    // Predicated region
    $region65: #{_lambda_.6} parent=5 // pred_check
      _
    $region66: #{_lambda_.6} parent=5 // pred_check_branch
      %467 = sbr.rel (%p464) target = $region68
    $region67: #{_lambda_.6} parent=5 // pred_region
      %s468 = ssub.s32 %s18, 1
      %p469 = scmp.lt.s32.totalorder %s27, 1
      %s470 = scalar_select %p469, %s27, 1
      %s471 = smul.addr %s470, 8
      %s472 = scalar_lea.vmem %s0, %s471
      %p473 = pneg %p56
      %p474 = pneg %p53
      %p475 = scmp.lt.s32.totalorder %s28, 0
      %s476 = scalar_select %p475, %s28, 0
      %p477 = scmp.lt.s32.totalorder %s27, 1
      %s478 = scalar_select %p477, %s27, 1
      %s479 = smul.addr %s476, 2
      %s480 = sadd.s32 %s478, %s479
      %s481 = smul.addr %s480, 8
      %s482 = scalar_lea.vmem %s1, %s481
      %p483 = pneg %p84
      %p484 = pneg %p81
      %p485 = scmp.lt.s32.totalorder %s28, 0
      %s486 = scalar_select %p485, %s28, 0
      %s487 = smul.addr %s486, 16
      %s488 = smul.addr %s487, 4
      %s489 = scalar_lea.vmem %s2, %s488
      %p490 = pneg %p110
      %p491 = pneg %p107
      %p492 = scmp.lt.s32.totalorder %s28, 0
      %s493 = scalar_select %p492, %s28, 0
      %s494 = smul.addr %s493, 4
      %s495 = scalar_lea.vmem %s3, %s494
      %p496 = pneg %p136
      %p497 = pneg %p133
      %p498 = scmp.lt.s32.totalorder %s28, 0
      %s499 = scalar_select %p498, %s28, 0
      %s500 = smul.addr %s499, 16
      %s501 = smul.addr %s500, 4
      %s502 = scalar_lea.vmem %s4, %s501
      %p503 = pneg %p162
      %p504 = pneg %p159
      %p505 = scmp.lt.s32.totalorder %s28, 0
      %s506 = scalar_select %p505, %s28, 0
      %s507 = smul.addr %s506, 4
      %s508 = scalar_lea.vmem %s5, %s507
      %p509 = pneg %p188
      %p510 = pneg %p185
      %p511 = scmp.lt.s32.totalorder %s28, 0
      %s512 = scalar_select %p511, %s28, 0
      %s513 = smul.addr %s512, 16
      %s514 = smul.addr %s513, 4
      %s515 = scalar_lea.vmem %s6, %s514
      %p516 = pneg %p214
      %p517 = pneg %p211
      %p518 = scmp.lt.s32.totalorder %s28, 0
      %s519 = scalar_select %p518, %s28, 0
      %s520 = smul.addr %s519, 4
      %s521 = scalar_lea.vmem %s7, %s520
      %p522 = pneg %p240
      %p523 = pneg %p237
      %p524 = scmp.lt.s32.totalorder %s28, 0
      %s525 = scalar_select %p524, %s28, 0
      %s526 = smul.addr %s525, 4
      %s527 = smul.addr %s526, 4
      %s528 = scalar_lea.vmem %s8, %s527
      %p529 = pneg %p266
      %p530 = pneg %p263
      %p531 = scmp.lt.s32.totalorder %s28, 0
      %s532 = scalar_select %p531, %s28, 0
      %s533 = scalar_lea.vmem %s9, %s532
      %p534 = pneg %p292
      %p535 = pneg %p289
      %p536 = pneg %p313
      %p537 = pneg %p310
      %p538 = pneg %p334
      %p539 = pneg %p331
      %p540 = pneg %p360
      %p541 = pneg %p357
      %p542 = scmp.lt.s32.totalorder %s27, 1
      %s543 = scalar_select %p542, %s27, 1
      %s544 = smul.addr %s543, 8
      %s545 = scalar_lea.vmem %s12, %s544
      %p546 = scmp.lt.s32.totalorder %s27, 1
      %s547 = scalar_select %p546, %s27, 1
      %s548 = smul.addr %s547, 8
      %s549 = scalar_lea.vmem %s0, %s548
      %p550 = scmp.lt.s32.totalorder %s28, 0
      %s551 = scalar_select %p550, %s28, 0
      %p552 = scmp.lt.s32.totalorder %s27, 1
      %s553 = scalar_select %p552, %s27, 1
      %s554 = smul.addr %s551, 2
      %s555 = sadd.s32 %s553, %s554
      %s556 = smul.addr %s555, 8
      %s557 = scalar_lea.vmem %s1, %s556
      %p558 = scmp.lt.s32.totalorder %s28, 0
      %s559 = scalar_select %p558, %s28, 0
      %s560 = smul.addr %s559, 16
      %s561 = smul.addr %s560, 4
      %s562 = scalar_lea.vmem %s2, %s561
      %p563 = scmp.lt.s32.totalorder %s28, 0
      %s564 = scalar_select %p563, %s28, 0
      %s565 = smul.addr %s564, 4
      %s566 = scalar_lea.vmem %s3, %s565
      %p567 = scmp.lt.s32.totalorder %s28, 0
      %s568 = scalar_select %p567, %s28, 0
      %s569 = smul.addr %s568, 16
      %s570 = smul.addr %s569, 4
      %s571 = scalar_lea.vmem %s4, %s570
      %p572 = scmp.lt.s32.totalorder %s28, 0
      %s573 = scalar_select %p572, %s28, 0
      %s574 = smul.addr %s573, 4
      %s575 = scalar_lea.vmem %s5, %s574
      %p576 = scmp.lt.s32.totalorder %s28, 0
      %s577 = scalar_select %p576, %s28, 0
      %s578 = smul.addr %s577, 16
      %s579 = smul.addr %s578, 4
      %s580 = scalar_lea.vmem %s6, %s579
      %p581 = scmp.lt.s32.totalorder %s28, 0
      %s582 = scalar_select %p581, %s28, 0
      %s583 = smul.addr %s582, 4
      %s584 = scalar_lea.vmem %s7, %s583
      %p585 = scmp.lt.s32.totalorder %s28, 0
      %s586 = scalar_select %p585, %s28, 0
      %s587 = smul.addr %s586, 4
      %s588 = smul.addr %s587, 4
      %s589 = scalar_lea.vmem %s8, %s588
      %p590 = scmp.lt.s32.totalorder %s28, 0
      %s591 = scalar_select %p590, %s28, 0
      %s592 = scalar_lea.vmem %s9, %s591
      %p593 = scmp.lt.s32.totalorder %s27, 1
      %s594 = scalar_select %p593, %s27, 1
      %s595 = smul.addr %s594, 8
      %s596 = scalar_lea.vmem %s12, %s595
      %p598 = scmp.eq.s32.totalorder %s28, 0
      // Predicated region
      $region69: #{_lambda_.6} parent=67 // pred_check
        %p599 = pneg %p598
      $region70: #{_lambda_.6} parent=67 // pred_check_branch
        %601 = sbr.rel (%p599) target = $region72
      $region71: #{_lambda_.6} parent=67 // pred_region
        %vm602 = vcmask 261120
        %603 = vst.msk [vmem:[#allocation2] sm:$0xff] %vm602, 0.0
      $region72: #{_lambda_.6} parent=67 // pred_fallthru
        _
      %v604 = vld [vmem:[%s549] sm:$0xff]
      %v605 = vld [vmem:[%s557] sm:$0xff]
      %v606 = vpack.c.bf16 %v604, %v604
      %v607 = vpack.c.bf16 %v605, %v605
      %v608 = vld [vmem:[%s562] sm:$0xf]
      %v609 = vld [vmem:[%s562 + $0x4] sm:$0xf]
      %v610 = vld [vmem:[%s562 + $0x8] sm:$0xf]
      %v611 = vld [vmem:[%s562 + $0xc] sm:$0xf]
      %v612 = vld [vmem:[%s566] sm:$0x1]
      %v614 = vperm.slane %v612, 0
      %v620 = vunpack.c.l.b16 %v608
      %v621 = vunpack.c.l.b16 %v609
      %v622 = vunpack.c.l.b16 %v610
      %v623 = vunpack.c.l.b16 %v611
      %v624 = vpack.c.b16 %v621, %v620
      %v625 = vpack.c.b16 %v623, %v622
      %vm628 = vcmask 261120
      %v630 = vsel %vm628, %v606, 0
      %632 = vmatpush.bf16.msra.mxu0 0
      %633 = vmatpush.bf16.msra.mxu0 0
      %634 = vmatpush.bf16.msra.mxu0 0
      %635 = vmatpush.bf16.msra.mxu0 0
      %636 = vmatpush.bf16.msra.mxu0 0
      %637 = vmatpush.bf16.msra.mxu0 0
      %638 = vmatpush.bf16.msra.mxu0 %v625
      %639 = vmatpush.bf16.msra.mxu0 %v624
      %640 = vmatmul.bf16.gmra.mxu0 %v630
      %v641 = vpop.f32.mrf.mxu0
      %v642 = vadd.f32 %v614, %v641
      %v643 = vpop.f32.mrf.mxu0
      %644 = vdwg.mxu0
      %v645 = vmul.f32 %v642, 0.35355338
      %v646 = vld [vmem:[%s571] sm:$0xf]
      %v647 = vld [vmem:[%s571 + $0x4] sm:$0xf]
      %v648 = vld [vmem:[%s571 + $0x8] sm:$0xf]
      %v649 = vld [vmem:[%s571 + $0xc] sm:$0xf]
      %v650 = vld [vmem:[%s575] sm:$0x1]
      %v652 = vperm.slane %v650, 0
      %v658 = vunpack.c.l.b16 %v646
      %v659 = vunpack.c.l.b16 %v647
      %v660 = vunpack.c.l.b16 %v648
      %v661 = vunpack.c.l.b16 %v649
      %v662 = vpack.c.b16 %v659, %v658
      %v663 = vpack.c.b16 %v661, %v660
      %v667 = vsel %vm628, %v607, 0
      %669 = vmatpush.bf16.msra.mxu0 0
      %670 = vmatpush.bf16.msra.mxu0 0
      %671 = vmatpush.bf16.msra.mxu0 0
      %672 = vmatpush.bf16.msra.mxu0 0
      %673 = vmatpush.bf16.msra.mxu0 0
      %674 = vmatpush.bf16.msra.mxu0 0
      %675 = vmatpush.bf16.msra.mxu0 %v663
      %676 = vmatpush.bf16.msra.mxu0 %v662
      %677 = vmatmul.bf16.gmra.mxu0 %v667
      %v678 = vpop.f32.mrf.mxu0
      %v679 = vadd.f32 %v652, %v678
      %v680 = vpop.f32.mrf.mxu0
      %681 = vdwg.mxu0
      %v682 = vld [vmem:[%s580] sm:$0xf]
      %v683 = vld [vmem:[%s580 + $0x4] sm:$0xf]
      %v684 = vld [vmem:[%s580 + $0x8] sm:$0xf]
      %v685 = vld [vmem:[%s580 + $0xc] sm:$0xf]
      %v686 = vld [vmem:[%s584] sm:$0x1]
      %v688 = vperm.slane %v686, 0
      %v694 = vunpack.c.l.b16 %v682
      %v695 = vunpack.c.l.b16 %v683
      %v696 = vunpack.c.l.b16 %v684
      %v697 = vunpack.c.l.b16 %v685
      %v698 = vpack.c.b16 %v695, %v694
      %v699 = vpack.c.b16 %v697, %v696
      %702 = vmatpush.bf16.msra.mxu0 0
      %703 = vmatpush.bf16.msra.mxu0 0
      %704 = vmatpush.bf16.msra.mxu0 0
      %705 = vmatpush.bf16.msra.mxu0 0
      %706 = vmatpush.bf16.msra.mxu0 0
      %707 = vmatpush.bf16.msra.mxu0 0
      %708 = vmatpush.bf16.msra.mxu0 %v699
      %709 = vmatpush.bf16.msra.mxu0 %v698
      %710 = vmatmul.bf16.gmra.mxu0 %v667
      %v711 = vpop.f32.mrf.mxu0
      %v712 = vadd.f32 %v688, %v711
      %v713 = vpop.f32.mrf.mxu0
      %714 = vdwg.mxu0
      %v715 = vpack.c.bf16 %v645, %v645
      %v716 = vpack.c.bf16 %v679, %v679
      %vm717 = vcmask 64512
      %v719 = vsel %vm717, %v715, 0
      %v722 = vsel %vm717, %v716, 0
      %724 = vmatpush.bf16.xpose.msra.mxu0 0
      %725 = vmatpush.bf16.xpose.msra.mxu0 0
      %726 = vmatpush.bf16.xpose.msra.mxu0 0
      %727 = vmatpush.bf16.xpose.msra.mxu0 0
      %728 = vmatpush.bf16.xpose.msra.mxu0 0
      %729 = vmatpush.bf16.xpose.msra.mxu0 0
      %730 = vmatpush.bf16.xpose.msra.mxu0 0
      %731 = vmatpush.bf16.xpose.msra.mxu0 %v722
      %732 = vmatmul.bf16.gmra.mxu0 %v719
      %v733 = vpop.f32.mrf.mxu0
      %v734 = vadd.f32 0.0, %v733
      %v735 = vpop.f32.mrf.mxu0
      %736 = vdwg.mxu0
      %v737 = vsel %vm717, %v734, -inf
      %738 = vmax.xlane.f32.xlu0 %v737
      %v739 = vpop.xlane.xlu0 %738
      %v740 = vsub.f32 %v734, %v739
      %v741 = vmul.f32 %v740, 1.442695
      %v742 = vpow.pop %v741
      %v743 = vsel %vm717, %v742, 0.0
      %744 = vadd.xlane.f32.xlu0 %v743
      %v745 = vpop.xlane.xlu0 %744
      %v746 = vrcp.pop %v745
      %v747 = vmul.f32 %v742, %v746
      %v748 = vpack.c.bf16 %v747, %v747
      %v749 = vpack.c.bf16 %v712, %v712
      %v751 = vsel %vm717, %v748, 0
      %vm753 = vcmask 1043456
      %v755 = vsel %vm753, %v749, 0
      %757 = vmatpush.bf16.msra.mxu0 0
      %758 = vmatpush.bf16.msra.mxu0 0
      %759 = vmatpush.bf16.msra.mxu0 0
      %760 = vmatpush.bf16.msra.mxu0 0
      %761 = vmatpush.bf16.msra.mxu0 0
      %762 = vmatpush.bf16.msra.mxu0 0
      %763 = vmatpush.bf16.msra.mxu0 0
      %764 = vmatpush.bf16.msra.mxu0 %v755
      %765 = vmatmul.bf16.gmra.mxu0 %v751
      %v766 = vpop.f32.mrf.mxu0
      %v767 = vadd.f32 0.0, %v766
      %v768 = vpop.f32.mrf.mxu0
      %769 = vdwg.mxu0
      %v770 = vpack.c.bf16 %v767, %v767
      %v771 = vld [vmem:[%s589] sm:$0xf]
      %s772 = scalar_lea.vmem %s562, 16
      %v773 = vld [vmem:[%s772] sm:$0xf]
      %v774 = vld [vmem:[%s772 + $0x4] sm:$0xf]
      %v775 = vld [vmem:[%s772 + $0x8] sm:$0xf]
      %v776 = vld [vmem:[%s772 + $0xc] sm:$0xf]
      %s777 = scalar_lea.vmem %s566, 1
      %v778 = vld [vmem:[%s777] sm:$0x1]
      %v780 = vperm.slane %v778, 0
      %v786 = vunpack.c.l.b16 %v773
      %v787 = vunpack.c.l.b16 %v774
      %v788 = vunpack.c.l.b16 %v775
      %v789 = vunpack.c.l.b16 %v776
      %v790 = vpack.c.b16 %v787, %v786
      %v791 = vpack.c.b16 %v789, %v788
      %794 = vmatpush.bf16.msra.mxu0 0
      %795 = vmatpush.bf16.msra.mxu0 0
      %796 = vmatpush.bf16.msra.mxu0 0
      %797 = vmatpush.bf16.msra.mxu0 0
      %798 = vmatpush.bf16.msra.mxu0 0
      %799 = vmatpush.bf16.msra.mxu0 0
      %800 = vmatpush.bf16.msra.mxu0 %v791
      %801 = vmatpush.bf16.msra.mxu0 %v790
      %802 = vmatmul.bf16.gmra.mxu0 %v630
      %v803 = vpop.f32.mrf.mxu0
      %v804 = vadd.f32 %v780, %v803
      %v805 = vpop.f32.mrf.mxu0
      %806 = vdwg.mxu0
      %v807 = vmul.f32 %v804, 0.35355338
      %s808 = scalar_lea.vmem %s571, 16
      %v809 = vld [vmem:[%s808] sm:$0xf]
      %v810 = vld [vmem:[%s808 + $0x4] sm:$0xf]
      %v811 = vld [vmem:[%s808 + $0x8] sm:$0xf]
      %v812 = vld [vmem:[%s808 + $0xc] sm:$0xf]
      %s813 = scalar_lea.vmem %s575, 1
      %v814 = vld [vmem:[%s813] sm:$0x1]
      %v816 = vperm.slane %v814, 0
      %v822 = vunpack.c.l.b16 %v809
      %v823 = vunpack.c.l.b16 %v810
      %v824 = vunpack.c.l.b16 %v811
      %v825 = vunpack.c.l.b16 %v812
      %v826 = vpack.c.b16 %v823, %v822
      %v827 = vpack.c.b16 %v825, %v824
      %830 = vmatpush.bf16.msra.mxu0 0
      %831 = vmatpush.bf16.msra.mxu0 0
      %832 = vmatpush.bf16.msra.mxu0 0
      %833 = vmatpush.bf16.msra.mxu0 0
      %834 = vmatpush.bf16.msra.mxu0 0
      %835 = vmatpush.bf16.msra.mxu0 0
      %836 = vmatpush.bf16.msra.mxu0 %v827
      %837 = vmatpush.bf16.msra.mxu0 %v826
      %838 = vmatmul.bf16.gmra.mxu0 %v667
      %v839 = vpop.f32.mrf.mxu0
      %v840 = vadd.f32 %v816, %v839
      %v841 = vpop.f32.mrf.mxu0
      %842 = vdwg.mxu0
      %s843 = scalar_lea.vmem %s580, 16
      %v844 = vld [vmem:[%s843] sm:$0xf]
      %v845 = vld [vmem:[%s843 + $0x4] sm:$0xf]
      %v846 = vld [vmem:[%s843 + $0x8] sm:$0xf]
      %v847 = vld [vmem:[%s843 + $0xc] sm:$0xf]
      %s848 = scalar_lea.vmem %s584, 1
      %v849 = vld [vmem:[%s848] sm:$0x1]
      %v851 = vperm.slane %v849, 0
      %v857 = vunpack.c.l.b16 %v844
      %v858 = vunpack.c.l.b16 %v845
      %v859 = vunpack.c.l.b16 %v846
      %v860 = vunpack.c.l.b16 %v847
      %v861 = vpack.c.b16 %v858, %v857
      %v862 = vpack.c.b16 %v860, %v859
      %865 = vmatpush.bf16.msra.mxu0 0
      %866 = vmatpush.bf16.msra.mxu0 0
      %867 = vmatpush.bf16.msra.mxu0 0
      %868 = vmatpush.bf16.msra.mxu0 0
      %869 = vmatpush.bf16.msra.mxu0 0
      %870 = vmatpush.bf16.msra.mxu0 0
      %871 = vmatpush.bf16.msra.mxu0 %v862
      %872 = vmatpush.bf16.msra.mxu0 %v861
      %873 = vmatmul.bf16.gmra.mxu0 %v667
      %v874 = vpop.f32.mrf.mxu0
      %v875 = vadd.f32 %v851, %v874
      %v876 = vpop.f32.mrf.mxu0
      %877 = vdwg.mxu0
      %v878 = vpack.c.bf16 %v807, %v807
      %v879 = vpack.c.bf16 %v840, %v840
      %v881 = vsel %vm717, %v878, 0
      %v884 = vsel %vm717, %v879, 0
      %886 = vmatpush.bf16.xpose.msra.mxu0 0
      %887 = vmatpush.bf16.xpose.msra.mxu0 0
      %888 = vmatpush.bf16.xpose.msra.mxu0 0
      %889 = vmatpush.bf16.xpose.msra.mxu0 0
      %890 = vmatpush.bf16.xpose.msra.mxu0 0
      %891 = vmatpush.bf16.xpose.msra.mxu0 0
      %892 = vmatpush.bf16.xpose.msra.mxu0 0
      %893 = vmatpush.bf16.xpose.msra.mxu0 %v884
      %894 = vmatmul.bf16.gmra.mxu0 %v881
      %v895 = vpop.f32.mrf.mxu0
      %v896 = vadd.f32 0.0, %v895
      %v897 = vpop.f32.mrf.mxu0
      %898 = vdwg.mxu0
      %v899 = vsel %vm717, %v896, -inf
      %900 = vmax.xlane.f32.xlu0 %v899
      %v901 = vpop.xlane.xlu0 %900
      %v902 = vsub.f32 %v896, %v901
      %v903 = vmul.f32 %v902, 1.442695
      %v904 = vpow.pop %v903
      %v905 = vsel %vm717, %v904, 0.0
      %906 = vadd.xlane.f32.xlu0 %v905
      %v907 = vpop.xlane.xlu0 %906
      %v908 = vrcp.pop %v907
      %v909 = vmul.f32 %v904, %v908
      %v910 = vpack.c.bf16 %v909, %v909
      %v911 = vpack.c.bf16 %v875, %v875
      %v913 = vsel %vm717, %v910, 0
      %v916 = vsel %vm753, %v911, 0
      %918 = vmatpush.bf16.msra.mxu0 0
      %919 = vmatpush.bf16.msra.mxu0 0
      %920 = vmatpush.bf16.msra.mxu0 0
      %921 = vmatpush.bf16.msra.mxu0 0
      %922 = vmatpush.bf16.msra.mxu0 0
      %923 = vmatpush.bf16.msra.mxu0 0
      %924 = vmatpush.bf16.msra.mxu0 0
      %925 = vmatpush.bf16.msra.mxu0 %v916
      %926 = vmatmul.bf16.gmra.mxu0 %v913
      %v927 = vpop.f32.mrf.mxu0
      %v928 = vadd.f32 0.0, %v927
      %v929 = vpop.f32.mrf.mxu0
      %930 = vdwg.mxu0
      %v931 = vpack.c.bf16 %v928, %v928
      %s932 = scalar_lea.vmem %s589, 4
      %v933 = vld [vmem:[%s932] sm:$0xf]
      %v935 = vsel %vm717, %v931, 0
      %v938 = vsel %vm753, %v933, 0
      %940 = vmatpush.bf16.msra.mxu0 0
      %941 = vmatpush.bf16.msra.mxu0 0
      %942 = vmatpush.bf16.msra.mxu0 0
      %943 = vmatpush.bf16.msra.mxu0 0
      %944 = vmatpush.bf16.msra.mxu0 0
      %945 = vmatpush.bf16.msra.mxu0 0
      %946 = vmatpush.bf16.msra.mxu0 0
      %947 = vmatpush.bf16.msra.mxu0 %v938
      %948 = vmatmul.bf16.gmra.mxu0 %v935
      %v949 = vpop.f32.mrf.mxu0
      %v950 = vadd.f32 0.0, %v949
      %v951 = vpop.f32.mrf.mxu0
      %952 = vdwg.mxu0
      %v954 = vsel %vm717, %v770, 0
      %v957 = vsel %vm753, %v771, 0
      %959 = vmatpush.bf16.msra.mxu0 0
      %960 = vmatpush.bf16.msra.mxu0 0
      %961 = vmatpush.bf16.msra.mxu0 0
      %962 = vmatpush.bf16.msra.mxu0 0
      %963 = vmatpush.bf16.msra.mxu0 0
      %964 = vmatpush.bf16.msra.mxu0 0
      %965 = vmatpush.bf16.msra.mxu0 0
      %966 = vmatpush.bf16.msra.mxu0 %v957
      %967 = vmatmul.bf16.gmra.mxu0 %v954
      %v968 = vpop.f32.mrf.mxu0
      %v969 = vadd.f32 %v950, %v968
      %v970 = vpop.f32.mrf.mxu0
      %971 = vdwg.mxu0
      %s972 = scalar_lea.vmem %s562, 32
      %v973 = vld [vmem:[%s972] sm:$0xf]
      %v974 = vld [vmem:[%s972 + $0x4] sm:$0xf]
      %v975 = vld [vmem:[%s972 + $0x8] sm:$0xf]
      %v976 = vld [vmem:[%s972 + $0xc] sm:$0xf]
      %s977 = scalar_lea.vmem %s566, 2
      %v978 = vld [vmem:[%s977] sm:$0x1]
      %v980 = vperm.slane %v978, 0
      %v986 = vunpack.c.l.b16 %v973
      %v987 = vunpack.c.l.b16 %v974
      %v988 = vunpack.c.l.b16 %v975
      %v989 = vunpack.c.l.b16 %v976
      %v990 = vpack.c.b16 %v987, %v986
      %v991 = vpack.c.b16 %v989, %v988
      %994 = vmatpush.bf16.msra.mxu0 0
      %995 = vmatpush.bf16.msra.mxu0 0
      %996 = vmatpush.bf16.msra.mxu0 0
      %997 = vmatpush.bf16.msra.mxu0 0
      %998 = vmatpush.bf16.msra.mxu0 0
      %999 = vmatpush.bf16.msra.mxu0 0
      %1000 = vmatpush.bf16.msra.mxu0 %v991
      %1001 = vmatpush.bf16.msra.mxu0 %v990
      %1002 = vmatmul.bf16.gmra.mxu0 %v630
      %v1003 = vpop.f32.mrf.mxu0
      %v1004 = vadd.f32 %v980, %v1003
      %v1005 = vpop.f32.mrf.mxu0
      %1006 = vdwg.mxu0
      %v1007 = vmul.f32 %v1004, 0.35355338
      %s1008 = scalar_lea.vmem %s571, 32
      %v1009 = vld [vmem:[%s1008] sm:$0xf]
      %v1010 = vld [vmem:[%s1008 + $0x4] sm:$0xf]
      %v1011 = vld [vmem:[%s1008 + $0x8] sm:$0xf]
      %v1012 = vld [vmem:[%s1008 + $0xc] sm:$0xf]
      %s1013 = scalar_lea.vmem %s575, 2
      %v1014 = vld [vmem:[%s1013] sm:$0x1]
      %v1016 = vperm.slane %v1014, 0
      %v1022 = vunpack.c.l.b16 %v1009
      %v1023 = vunpack.c.l.b16 %v1010
      %v1024 = vunpack.c.l.b16 %v1011
      %v1025 = vunpack.c.l.b16 %v1012
      %v1026 = vpack.c.b16 %v1023, %v1022
      %v1027 = vpack.c.b16 %v1025, %v1024
      %1030 = vmatpush.bf16.msra.mxu0 0
      %1031 = vmatpush.bf16.msra.mxu0 0
      %1032 = vmatpush.bf16.msra.mxu0 0
      %1033 = vmatpush.bf16.msra.mxu0 0
      %1034 = vmatpush.bf16.msra.mxu0 0
      %1035 = vmatpush.bf16.msra.mxu0 0
      %1036 = vmatpush.bf16.msra.mxu0 %v1027
      %1037 = vmatpush.bf16.msra.mxu0 %v1026
      %1038 = vmatmul.bf16.gmra.mxu0 %v667
      %v1039 = vpop.f32.mrf.mxu0
      %v1040 = vadd.f32 %v1016, %v1039
      %v1041 = vpop.f32.mrf.mxu0
      %1042 = vdwg.mxu0
      %s1043 = scalar_lea.vmem %s580, 32
      %v1044 = vld [vmem:[%s1043] sm:$0xf]
      %v1045 = vld [vmem:[%s1043 + $0x4] sm:$0xf]
      %v1046 = vld [vmem:[%s1043 + $0x8] sm:$0xf]
      %v1047 = vld [vmem:[%s1043 + $0xc] sm:$0xf]
      %s1048 = scalar_lea.vmem %s584, 2
      %v1049 = vld [vmem:[%s1048] sm:$0x1]
      %v1051 = vperm.slane %v1049, 0
      %v1057 = vunpack.c.l.b16 %v1044
      %v1058 = vunpack.c.l.b16 %v1045
      %v1059 = vunpack.c.l.b16 %v1046
      %v1060 = vunpack.c.l.b16 %v1047
      %v1061 = vpack.c.b16 %v1058, %v1057
      %v1062 = vpack.c.b16 %v1060, %v1059
      %1065 = vmatpush.bf16.msra.mxu0 0
      %1066 = vmatpush.bf16.msra.mxu0 0
      %1067 = vmatpush.bf16.msra.mxu0 0
      %1068 = vmatpush.bf16.msra.mxu0 0
      %1069 = vmatpush.bf16.msra.mxu0 0
      %1070 = vmatpush.bf16.msra.mxu0 0
      %1071 = vmatpush.bf16.msra.mxu0 %v1062
      %1072 = vmatpush.bf16.msra.mxu0 %v1061
      %1073 = vmatmul.bf16.gmra.mxu0 %v667
      %v1074 = vpop.f32.mrf.mxu0
      %v1075 = vadd.f32 %v1051, %v1074
      %v1076 = vpop.f32.mrf.mxu0
      %1077 = vdwg.mxu0
      %v1078 = vpack.c.bf16 %v1007, %v1007
      %v1079 = vpack.c.bf16 %v1040, %v1040
      %v1081 = vsel %vm717, %v1078, 0
      %v1084 = vsel %vm717, %v1079, 0
      %1086 = vmatpush.bf16.xpose.msra.mxu0 0
      %1087 = vmatpush.bf16.xpose.msra.mxu0 0
      %1088 = vmatpush.bf16.xpose.msra.mxu0 0
      %1089 = vmatpush.bf16.xpose.msra.mxu0 0
      %1090 = vmatpush.bf16.xpose.msra.mxu0 0
      %1091 = vmatpush.bf16.xpose.msra.mxu0 0
      %1092 = vmatpush.bf16.xpose.msra.mxu0 0
      %1093 = vmatpush.bf16.xpose.msra.mxu0 %v1084
      %1094 = vmatmul.bf16.gmra.mxu0 %v1081
      %v1095 = vpop.f32.mrf.mxu0
      %v1096 = vadd.f32 0.0, %v1095
      %v1097 = vpop.f32.mrf.mxu0
      %1098 = vdwg.mxu0
      %v1099 = vsel %vm717, %v1096, -inf
      %1100 = vmax.xlane.f32.xlu0 %v1099
      %v1101 = vpop.xlane.xlu0 %1100
      %v1102 = vsub.f32 %v1096, %v1101
      %v1103 = vmul.f32 %v1102, 1.442695
      %v1104 = vpow.pop %v1103
      %v1105 = vsel %vm717, %v1104, 0.0
      %1106 = vadd.xlane.f32.xlu0 %v1105
      %v1107 = vpop.xlane.xlu0 %1106
      %v1108 = vrcp.pop %v1107
      %v1109 = vmul.f32 %v1104, %v1108
      %v1110 = vpack.c.bf16 %v1109, %v1109
      %v1111 = vpack.c.bf16 %v1075, %v1075
      %v1113 = vsel %vm717, %v1110, 0
      %v1116 = vsel %vm753, %v1111, 0
      %1118 = vmatpush.bf16.msra.mxu0 0
      %1119 = vmatpush.bf16.msra.mxu0 0
      %1120 = vmatpush.bf16.msra.mxu0 0
      %1121 = vmatpush.bf16.msra.mxu0 0
      %1122 = vmatpush.bf16.msra.mxu0 0
      %1123 = vmatpush.bf16.msra.mxu0 0
      %1124 = vmatpush.bf16.msra.mxu0 0
      %1125 = vmatpush.bf16.msra.mxu0 %v1116
      %1126 = vmatmul.bf16.gmra.mxu0 %v1113
      %v1127 = vpop.f32.mrf.mxu0
      %v1128 = vadd.f32 0.0, %v1127
      %v1129 = vpop.f32.mrf.mxu0
      %1130 = vdwg.mxu0
      %v1131 = vpack.c.bf16 %v1128, %v1128
      %s1132 = scalar_lea.vmem %s589, 8
      %v1133 = vld [vmem:[%s1132] sm:$0xf]
      %v1135 = vsel %vm717, %v1131, 0
      %v1138 = vsel %vm753, %v1133, 0
      %1140 = vmatpush.bf16.msra.mxu0 0
      %1141 = vmatpush.bf16.msra.mxu0 0
      %1142 = vmatpush.bf16.msra.mxu0 0
      %1143 = vmatpush.bf16.msra.mxu0 0
      %1144 = vmatpush.bf16.msra.mxu0 0
      %1145 = vmatpush.bf16.msra.mxu0 0
      %1146 = vmatpush.bf16.msra.mxu0 0
      %1147 = vmatpush.bf16.msra.mxu0 %v1138
      %1148 = vmatmul.bf16.gmra.mxu0 %v1135
      %v1149 = vpop.f32.mrf.mxu0
      %v1150 = vadd.f32 0.0, %v1149
      %v1151 = vpop.f32.mrf.mxu0
      %1152 = vdwg.mxu0
      %v1153 = vadd.f32 %v969, %v1150
      %s1154 = scalar_lea.vmem %s562, 48
      %v1155 = vld [vmem:[%s1154] sm:$0xf]
      %v1156 = vld [vmem:[%s1154 + $0x4] sm:$0xf]
      %v1157 = vld [vmem:[%s1154 + $0x8] sm:$0xf]
      %v1158 = vld [vmem:[%s1154 + $0xc] sm:$0xf]
      %s1159 = scalar_lea.vmem %s566, 3
      %v1160 = vld [vmem:[%s1159] sm:$0x1]
      %v1162 = vperm.slane %v1160, 0
      %v1168 = vunpack.c.l.b16 %v1155
      %v1169 = vunpack.c.l.b16 %v1156
      %v1170 = vunpack.c.l.b16 %v1157
      %v1171 = vunpack.c.l.b16 %v1158
      %v1172 = vpack.c.b16 %v1169, %v1168
      %v1173 = vpack.c.b16 %v1171, %v1170
      %1176 = vmatpush.bf16.msra.mxu0 0
      %1177 = vmatpush.bf16.msra.mxu0 0
      %1178 = vmatpush.bf16.msra.mxu0 0
      %1179 = vmatpush.bf16.msra.mxu0 0
      %1180 = vmatpush.bf16.msra.mxu0 0
      %1181 = vmatpush.bf16.msra.mxu0 0
      %1182 = vmatpush.bf16.msra.mxu0 %v1173
      %1183 = vmatpush.bf16.msra.mxu0 %v1172
      %1184 = vmatmul.bf16.gmra.mxu0 %v630
      %v1185 = vpop.f32.mrf.mxu0
      %v1186 = vadd.f32 %v1162, %v1185
      %v1187 = vpop.f32.mrf.mxu0
      %1188 = vdwg.mxu0
      %v1189 = vmul.f32 %v1186, 0.35355338
      %s1190 = scalar_lea.vmem %s571, 48
      %v1191 = vld [vmem:[%s1190] sm:$0xf]
      %v1192 = vld [vmem:[%s1190 + $0x4] sm:$0xf]
      %v1193 = vld [vmem:[%s1190 + $0x8] sm:$0xf]
      %v1194 = vld [vmem:[%s1190 + $0xc] sm:$0xf]
      %s1195 = scalar_lea.vmem %s575, 3
      %v1196 = vld [vmem:[%s1195] sm:$0x1]
      %v1198 = vperm.slane %v1196, 0
      %v1204 = vunpack.c.l.b16 %v1191
      %v1205 = vunpack.c.l.b16 %v1192
      %v1206 = vunpack.c.l.b16 %v1193
      %v1207 = vunpack.c.l.b16 %v1194
      %v1208 = vpack.c.b16 %v1205, %v1204
      %v1209 = vpack.c.b16 %v1207, %v1206
      %1212 = vmatpush.bf16.msra.mxu0 0
      %1213 = vmatpush.bf16.msra.mxu0 0
      %1214 = vmatpush.bf16.msra.mxu0 0
      %1215 = vmatpush.bf16.msra.mxu0 0
      %1216 = vmatpush.bf16.msra.mxu0 0
      %1217 = vmatpush.bf16.msra.mxu0 0
      %1218 = vmatpush.bf16.msra.mxu0 %v1209
      %1219 = vmatpush.bf16.msra.mxu0 %v1208
      %1220 = vmatmul.bf16.gmra.mxu0 %v667
      %v1221 = vpop.f32.mrf.mxu0
      %v1222 = vadd.f32 %v1198, %v1221
      %v1223 = vpop.f32.mrf.mxu0
      %1224 = vdwg.mxu0
      %s1225 = scalar_lea.vmem %s580, 48
      %v1226 = vld [vmem:[%s1225] sm:$0xf]
      %v1227 = vld [vmem:[%s1225 + $0x4] sm:$0xf]
      %v1228 = vld [vmem:[%s1225 + $0x8] sm:$0xf]
      %v1229 = vld [vmem:[%s1225 + $0xc] sm:$0xf]
      %s1230 = scalar_lea.vmem %s584, 3
      %v1231 = vld [vmem:[%s1230] sm:$0x1]
      %v1233 = vperm.slane %v1231, 0
      %v1239 = vunpack.c.l.b16 %v1226
      %v1240 = vunpack.c.l.b16 %v1227
      %v1241 = vunpack.c.l.b16 %v1228
      %v1242 = vunpack.c.l.b16 %v1229
      %v1243 = vpack.c.b16 %v1240, %v1239
      %v1244 = vpack.c.b16 %v1242, %v1241
      %1247 = vmatpush.bf16.msra.mxu0 0
      %1248 = vmatpush.bf16.msra.mxu0 0
      %1249 = vmatpush.bf16.msra.mxu0 0
      %1250 = vmatpush.bf16.msra.mxu0 0
      %1251 = vmatpush.bf16.msra.mxu0 0
      %1252 = vmatpush.bf16.msra.mxu0 0
      %1253 = vmatpush.bf16.msra.mxu0 %v1244
      %1254 = vmatpush.bf16.msra.mxu0 %v1243
      %1255 = vmatmul.bf16.gmra.mxu0 %v667
      %v1256 = vpop.f32.mrf.mxu0
      %v1257 = vadd.f32 %v1233, %v1256
      %v1258 = vpop.f32.mrf.mxu0
      %1259 = vdwg.mxu0
      %v1260 = vpack.c.bf16 %v1189, %v1189
      %v1261 = vpack.c.bf16 %v1222, %v1222
      %v1263 = vsel %vm717, %v1260, 0
      %v1266 = vsel %vm717, %v1261, 0
      %1268 = vmatpush.bf16.xpose.msra.mxu0 0
      %1269 = vmatpush.bf16.xpose.msra.mxu0 0
      %1270 = vmatpush.bf16.xpose.msra.mxu0 0
      %1271 = vmatpush.bf16.xpose.msra.mxu0 0
      %1272 = vmatpush.bf16.xpose.msra.mxu0 0
      %1273 = vmatpush.bf16.xpose.msra.mxu0 0
      %1274 = vmatpush.bf16.xpose.msra.mxu0 0
      %1275 = vmatpush.bf16.xpose.msra.mxu0 %v1266
      %1276 = vmatmul.bf16.gmra.mxu0 %v1263
      %v1277 = vpop.f32.mrf.mxu0
      %v1278 = vadd.f32 0.0, %v1277
      %v1279 = vpop.f32.mrf.mxu0
      %1280 = vdwg.mxu0
      %v1281 = vsel %vm717, %v1278, -inf
      %1282 = vmax.xlane.f32.xlu0 %v1281
      %v1283 = vpop.xlane.xlu0 %1282
      %v1284 = vsub.f32 %v1278, %v1283
      %v1285 = vmul.f32 %v1284, 1.442695
      %v1286 = vpow.pop %v1285
      %v1287 = vsel %vm717, %v1286, 0.0
      %1288 = vadd.xlane.f32.xlu0 %v1287
      %v1289 = vpop.xlane.xlu0 %1288
      %v1290 = vrcp.pop %v1289
      %v1291 = vmul.f32 %v1286, %v1290
      %v1292 = vpack.c.bf16 %v1291, %v1291
      %v1293 = vpack.c.bf16 %v1257, %v1257
      %v1295 = vsel %vm717, %v1292, 0
      %v1298 = vsel %vm753, %v1293, 0
      %1300 = vmatpush.bf16.msra.mxu0 0
      %1301 = vmatpush.bf16.msra.mxu0 0
      %1302 = vmatpush.bf16.msra.mxu0 0
      %1303 = vmatpush.bf16.msra.mxu0 0
      %1304 = vmatpush.bf16.msra.mxu0 0
      %1305 = vmatpush.bf16.msra.mxu0 0
      %1306 = vmatpush.bf16.msra.mxu0 0
      %1307 = vmatpush.bf16.msra.mxu0 %v1298
      %1308 = vmatmul.bf16.gmra.mxu0 %v1295
      %v1309 = vpop.f32.mrf.mxu0
      %v1310 = vadd.f32 0.0, %v1309
      %v1311 = vpop.f32.mrf.mxu0
      %1312 = vdwg.mxu0
      %v1313 = vpack.c.bf16 %v1310, %v1310
      %s1314 = scalar_lea.vmem %s589, 12
      %v1315 = vld [vmem:[%s1314] sm:$0xf]
      %v1317 = vsel %vm717, %v1313, 0
      %v1320 = vsel %vm753, %v1315, 0
      %1322 = vmatpush.bf16.msra.mxu0 0
      %1323 = vmatpush.bf16.msra.mxu0 0
      %1324 = vmatpush.bf16.msra.mxu0 0
      %1325 = vmatpush.bf16.msra.mxu0 0
      %1326 = vmatpush.bf16.msra.mxu0 0
      %1327 = vmatpush.bf16.msra.mxu0 0
      %1328 = vmatpush.bf16.msra.mxu0 0
      %1329 = vmatpush.bf16.msra.mxu0 %v1320
      %1330 = vmatmul.bf16.gmra.mxu0 %v1317
      %v1331 = vpop.f32.mrf.mxu0
      %v1332 = vadd.f32 0.0, %v1331
      %v1333 = vpop.f32.mrf.mxu0
      %1334 = vdwg.mxu0
      %v1335 = vadd.f32 %v1153, %v1332
      %v1336 = vld [vmem:[#allocation2] sm:$0xff]
      %v1337 = vld [vmem:[%s592] sm:$0x1]
      %v1339 = vperm.slane %v1337, 0
      %v1341 = vadd.f32 %v1335, %v1339
      %v1342 = vadd.f32 %v1336, %v1341
      %1343 = vst.msk [vmem:[#allocation2] sm:$0xff] %vm628, %v1342
      // Predicated region
      $region73: #{_lambda_.6} parent=67 // pred_check
        %p1344 = pneg %p598
      $region74: #{_lambda_.6} parent=67 // pred_check_branch
        %1346 = sbr.rel (%p1344) target = $region76
      $region75: #{_lambda_.6} parent=67 // pred_region
        %v1347 = vld [vmem:[#allocation2] sm:$0xff]
        %v1348 = vadd.f32 %v604, %v1347
        %v1349 = vsel %vm628, %v1348, 0.0
        %1350 = vadd.xlane.f32.xlu0 %v1349
        %v1351 = vpop.xlane.xlu0 %1350
        %v1352 = vrcp.pop 32.0
        %v1353 = vmul.f32 32.0, %v1352
        %v1354 = vsub.f32 1.0, %v1353
        %v1355 = vmul.f32 %v1352, %v1354
        %v1356 = vadd.f32 %v1352, %v1355
        %vm1357 = vweird.f32 %v1352
        %v1358 = vsel %vm1357, %v1352, %v1356
        %v1359 = vmul.f32 %v1351, %v1358
        %v1360 = vsub.f32 %v1348, %v1359
        %v1361 = vmul.f32 %v1360, %v1360
        %v1362 = vsel %vm628, %v1361, 0.0
        %1363 = vadd.xlane.f32.xlu0 %v1362
        %v1364 = vpop.xlane.xlu0 %1363
        %v1365 = vmul.f32 %v1364, %v1358
        %v1366 = vadd.f32 %v1365, 1e-05
        %v1367 = vrsqrt.pop %v1366
        %v1368 = vmul.f32 %v1367, %v1366
        %v1369 = vmul.f32 %v1368, %v1367
        %v1370 = vmul.f32 0.5, %v1369
        %v1371 = vsub.f32 1.5, %v1370
        %v1372 = vmul.f32 %v1367, %v1371
        %vm1373 = vweird.f32 %v1366
        %vm1374 = vweird.f32 %v1367
        %vm1375 = vmor %vm1373, %vm1374
        %v1376 = vsel %vm1375, %v1367, %v1372
        %v1377 = vmul.f32 %v1360, %v1376
        %v1378 = vld [vmem:[%s10] sm:$0x1]
        %v1380 = vperm.slane %v1378, 0
        %v1382 = vmul.f32 %v1377, %v1380
        %v1383 = vld [vmem:[%s11] sm:$0x1]
        %v1385 = vperm.slane %v1383, 0
        %v1387 = vadd.f32 %v1382, %v1385
        %1388 = vst.msk [vmem:[%s596] sm:$0xff] %vm628, %v1387
      $region76: #{_lambda_.6} parent=67 // pred_fallthru
        _
      %p1389 = scmp.lt.s32.totalorder %s27, 1
      %s1390 = scalar_select %p1389, %s27, 1
      %s1391 = smul.addr %s1390, 8
      %s1392 = scalar_lea.vmem %s12, %s1391
      // Predicated region
      $region77: #{_lambda_.6} parent=67 // pred_check
        %p1393 = pneg %p357
      $region78: #{_lambda_.6} parent=67 // pred_check_branch
        %1395 = sbr.rel (%p1393) target = $region80
      $region79: #{_lambda_.6} parent=67 // pred_region
        _
      $region80: #{_lambda_.6} parent=67 // pred_fallthru
        _
    $region68: #{_lambda_.6} parent=5 // pred_fallthru
      _
    %p1396 = scmp.le.s32.totalorder 2, %s18
    // Predicated region
    $region81: #{_lambda_.6} parent=5 // pred_check
      %p1397 = pneg %p1396
    $region82: #{_lambda_.6} parent=5 // pred_check_branch
      %1399 = sbr.rel (%p1397) target = $region84
    $region83: #{_lambda_.6} parent=5 // pred_region
      %s1400 = ssub.s32 %s18, 2
      // Predicated region
      $region85: #{_lambda_.6} parent=83 // pred_check
        %p1401 = pneg %p363
      $region86: #{_lambda_.6} parent=83 // pred_check_branch
        %1403 = sbr.rel (%p1401) target = $region88
      $region87: #{_lambda_.6} parent=83 // pred_region
        %p1404 = scmp.lt.s32.totalorder %s29, 1
        %s1405 = scalar_select %p1404, %s29, 1
        %s1406 = smul.addr %s1405, 8
        %s1407 = scalar_lea.vmem %s12, %s1406
      $region88: #{_lambda_.6} parent=83 // pred_fallthru
        _
    $region84: #{_lambda_.6} parent=5 // pred_fallthru
      _
  $region6: #{_lambda_.6} parent=0 // loop_footer
    %s22 = sadd.s32 1, %s18
  $region7: #{_lambda_.6} parent=0 // loop_footer_branch
    %17 = sbr.rel target = $region3
  $region8: #{_lambda_.6} parent=0 // loop_exit
    _

// kernel: _lambda_.7
$region0: #{_lambda_.7}
  #allocation0 [shape = 'u32[]', space=smem, size = 0x4, offset = 0x4, fixed_abs, tag = 'smem constant byte address 0x4 - core index']
  #allocation1 [shape = 'u32[72,128]{1,0:T(1,128)}', space=vmem, size = 0x9000, scoped, tag = 'internal scratch']
  #allocation2 [shape = 'f32[8,32]{1,0:T(8,128)}', space=vmem, size = 0x1000, scoped, tag = 'scratch operand']
  %s0 = inlined_call_operand.vmem [shape: f32[2,8,32], index: 0, kind: input, shape index: {}]
  %s1 = inlined_call_operand.vmem [shape: f32[2,2,8,32], index: 1, kind: input, shape index: {}]
  %s2 = inlined_call_operand.vmem [shape: bf16[2,4,32,8], index: 2, kind: input, shape index: {}]
  %s3 = inlined_call_operand.vmem [shape: f32[2,4,1,8], index: 3, kind: input, shape index: {}]
  %s4 = inlined_call_operand.vmem [shape: bf16[2,4,32,8], index: 4, kind: input, shape index: {}]
  %s5 = inlined_call_operand.vmem [shape: f32[2,4,1,8], index: 5, kind: input, shape index: {}]
  %s6 = inlined_call_operand.vmem [shape: bf16[2,4,32,8], index: 6, kind: input, shape index: {}]
  %s7 = inlined_call_operand.vmem [shape: f32[2,4,1,8], index: 7, kind: input, shape index: {}]
  %s8 = inlined_call_operand.vmem [shape: bf16[2,4,8,32], index: 8, kind: input, shape index: {}]
  %s9 = inlined_call_operand.vmem [shape: f32[2,1,32], index: 9, kind: input, shape index: {}]
  %s10 = inlined_call_operand.vmem [shape: f32[1,32], index: 10, kind: input, shape index: {}]
  %s11 = inlined_call_operand.vmem [shape: f32[1,32], index: 11, kind: input, shape index: {}]
  %s12 = inlined_call_operand.vmem [shape: f32[2,8,32], index: 12, kind: output, shape index: {}]
  %s13 = sld [smem:[#allocation0]]
  $region89: #{_lambda_.7} parent=0
    _
  %s15 = ssub.s32 1, %s13
  %s16 = scalar_select 0, %s15, %s13
  loop: start=0, step=1, limit=6
  $region2: #{_lambda_.7} parent=0 // loop_pre_header
    _
  $region3: #{_lambda_.7} parent=0 // loop_header
    %s18 = sphi 0, %s22
    %p19 = scmp.ge.s32.totalorder %s18, 6
    %s25 = sphi 0, %s37
    %s26 = sphi 0, %s33
    %s27 = sphi 0, %s25
    %s28 = sphi 0, %s26
    %s29 = sphi 0, %s27
    %s30 = sphi 0, %s28
    %s40 = sphi 0, %s42
    %s43 = sphi 0, %s40
    %s44 = sphi 0, %s43
    %s60 = sphi 0, %s44
    %s68 = sphi 0, %s70
    %s71 = sphi 0, %s68
    %s72 = sphi 0, %s71
    %s88 = sphi 0, %s72
    %s94 = sphi 0, %s96
    %s97 = sphi 0, %s94
    %s98 = sphi 0, %s97
    %s114 = sphi 0, %s98
    %s120 = sphi 0, %s122
    %s123 = sphi 0, %s120
    %s124 = sphi 0, %s123
    %s140 = sphi 0, %s124
    %s146 = sphi 0, %s148
    %s149 = sphi 0, %s146
    %s150 = sphi 0, %s149
    %s166 = sphi 0, %s150
    %s172 = sphi 0, %s174
    %s175 = sphi 0, %s172
    %s176 = sphi 0, %s175
    %s192 = sphi 0, %s176
    %s198 = sphi 0, %s200
    %s201 = sphi 0, %s198
    %s202 = sphi 0, %s201
    %s218 = sphi 0, %s202
    %s224 = sphi 0, %s226
    %s227 = sphi 0, %s224
    %s228 = sphi 0, %s227
    %s244 = sphi 0, %s228
    %s250 = sphi 0, %s252
    %s253 = sphi 0, %s250
    %s254 = sphi 0, %s253
    %s270 = sphi 0, %s254
    %s276 = sphi 0, %s278
    %s279 = sphi 0, %s276
    %s280 = sphi 0, %s279
    %s296 = sphi 0, %s280
    %s300 = sphi 0, %s300
    %s302 = sphi 0, %s300
    %s303 = sphi 0, %s302
    %s317 = sphi 0, %s303
    %s321 = sphi 0, %s321
    %s323 = sphi 0, %s321
    %s324 = sphi 0, %s323
    %s338 = sphi 0, %s324
    %s344 = sphi 0, %s346
    %s347 = sphi 0, %s344
    %s348 = sphi 0, %s347
    %s364 = sphi 0, %s348
  $region4: #{_lambda_.7} parent=0 // loop_header_branch
    %21 = sbr.rel (%p19) target = $region8
  $region5: #{_lambda_.7} parent=0 // loop_body
    %s23 = ssub.s32 %s18, 1
    %s24 = ssub.s32 %s18, 2
    %s31 = sadd.s32 1, %s26
    %p32 = scmp.ge.s32.totalorder %s31, 2
    %s33 = scalar_select %p32, 0, %s31
    %s34 = sadd.s32 1, %s25
    %s35 = scalar_select %p32, %s34, %s25
    %p36 = scmp.ge.s32.totalorder %s35, 2
    %s37 = scalar_select %p36, 0, %s35
    %s38 = ssub.s32 %s25, %s37
    %p39 = scmp.eq.s32.totalorder %s38, 0
    %s41 = sadd.s32 %s40, 1
    %s42 = scalar_select %p39, %s40, %s41
    %p45 = pneg %p39
    %p46 = scmp.eq.s32.totalorder %s18, 3
    %p47 = por %p45, %p46
    %p48 = scmp.ne.s32.totalorder %s40, %s43
    %p49 = scmp.eq.s32.totalorder %s18, 0
    %p50 = por %p48, %p49
    %p51 = scmp.ne.s32.totalorder %s40, %s43
    %p52 = scmp.eq.s32.totalorder %s23, 3
    %p53 = por %p51, %p52
    %p54 = scmp.ne.s32.totalorder %s43, %s44
    %p55 = scmp.eq.s32.totalorder %s23, 0
    %p56 = por %p54, %p55
    %p57 = scmp.ne.s32.totalorder %s43, %s44
    %p58 = scmp.eq.s32.totalorder %s24, 3
    %p59 = por %p57, %p58
    %p61 = scmp.ne.s32.totalorder %s44, %s60
    %p62 = scmp.eq.s32.totalorder %s24, 0
    %p63 = por %p61, %p62
    %s64 = ssub.s32 %s26, %s33
    %s65 = ssub.s32 %s25, %s37
    %s66 = sor.u32 %s64, %s65
    %p67 = scmp.eq.s32.totalorder %s66, 0
    %s69 = sadd.s32 %s68, 1
    %s70 = scalar_select %p67, %s68, %s69
    %p73 = pneg %p67
    %p74 = scmp.eq.s32.totalorder %s18, 3
    %p75 = por %p73, %p74
    %p76 = scmp.ne.s32.totalorder %s68, %s71
    %p77 = scmp.eq.s32.totalorder %s18, 0
    %p78 = por %p76, %p77
    %p79 = scmp.ne.s32.totalorder %s68, %s71
    %p80 = scmp.eq.s32.totalorder %s23, 3
    %p81 = por %p79, %p80
    %p82 = scmp.ne.s32.totalorder %s71, %s72
    %p83 = scmp.eq.s32.totalorder %s23, 0
    %p84 = por %p82, %p83
    %p85 = scmp.ne.s32.totalorder %s71, %s72
    %p86 = scmp.eq.s32.totalorder %s24, 3
    %p87 = por %p85, %p86
    %p89 = scmp.ne.s32.totalorder %s72, %s88
    %p90 = scmp.eq.s32.totalorder %s24, 0
    %p91 = por %p89, %p90
    %s92 = ssub.s32 %s26, %s33
    %p93 = scmp.eq.s32.totalorder %s92, 0
    %s95 = sadd.s32 %s94, 1
    %s96 = scalar_select %p93, %s94, %s95
    %p99 = pneg %p93
    %p100 = scmp.eq.s32.totalorder %s18, 3
    %p101 = por %p99, %p100
    %p102 = scmp.ne.s32.totalorder %s94, %s97
    %p103 = scmp.eq.s32.totalorder %s18, 0
    %p104 = por %p102, %p103
    %p105 = scmp.ne.s32.totalorder %s94, %s97
    %p106 = scmp.eq.s32.totalorder %s23, 3
    %p107 = por %p105, %p106
    %p108 = scmp.ne.s32.totalorder %s97, %s98
    %p109 = scmp.eq.s32.totalorder %s23, 0
    %p110 = por %p108, %p109
    %p111 = scmp.ne.s32.totalorder %s97, %s98
    %p112 = scmp.eq.s32.totalorder %s24, 3
    %p113 = por %p111, %p112
    %p115 = scmp.ne.s32.totalorder %s98, %s114
    %p116 = scmp.eq.s32.totalorder %s24, 0
    %p117 = por %p115, %p116
    %s118 = ssub.s32 %s26, %s33
    %p119 = scmp.eq.s32.totalorder %s118, 0
    %s121 = sadd.s32 %s120, 1
    %s122 = scalar_select %p119, %s120, %s121
    %p125 = pneg %p119
    %p126 = scmp.eq.s32.totalorder %s18, 3
    %p127 = por %p125, %p126
    %p128 = scmp.ne.s32.totalorder %s120, %s123
    %p129 = scmp.eq.s32.totalorder %s18, 0
    %p130 = por %p128, %p129
    %p131 = scmp.ne.s32.totalorder %s120, %s123
    %p132 = scmp.eq.s32.totalorder %s23, 3
    %p133 = por %p131, %p132
    %p134 = scmp.ne.s32.totalorder %s123, %s124
    %p135 = scmp.eq.s32.totalorder %s23, 0
    %p136 = por %p134, %p135
    %p137 = scmp.ne.s32.totalorder %s123, %s124
    %p138 = scmp.eq.s32.totalorder %s24, 3
    %p139 = por %p137, %p138
    %p141 = scmp.ne.s32.totalorder %s124, %s140
    %p142 = scmp.eq.s32.totalorder %s24, 0
    %p143 = por %p141, %p142
    %s144 = ssub.s32 %s26, %s33
    %p145 = scmp.eq.s32.totalorder %s144, 0
    %s147 = sadd.s32 %s146, 1
    %s148 = scalar_select %p145, %s146, %s147
    %p151 = pneg %p145
    %p152 = scmp.eq.s32.totalorder %s18, 3
    %p153 = por %p151, %p152
    %p154 = scmp.ne.s32.totalorder %s146, %s149
    %p155 = scmp.eq.s32.totalorder %s18, 0
    %p156 = por %p154, %p155
    %p157 = scmp.ne.s32.totalorder %s146, %s149
    %p158 = scmp.eq.s32.totalorder %s23, 3
    %p159 = por %p157, %p158
    %p160 = scmp.ne.s32.totalorder %s149, %s150
    %p161 = scmp.eq.s32.totalorder %s23, 0
    %p162 = por %p160, %p161
    %p163 = scmp.ne.s32.totalorder %s149, %s150
    %p164 = scmp.eq.s32.totalorder %s24, 3
    %p165 = por %p163, %p164
    %p167 = scmp.ne.s32.totalorder %s150, %s166
    %p168 = scmp.eq.s32.totalorder %s24, 0
    %p169 = por %p167, %p168
    %s170 = ssub.s32 %s26, %s33
    %p171 = scmp.eq.s32.totalorder %s170, 0
    %s173 = sadd.s32 %s172, 1
    %s174 = scalar_select %p171, %s172, %s173
    %p177 = pneg %p171
    %p178 = scmp.eq.s32.totalorder %s18, 3
    %p179 = por %p177, %p178
    %p180 = scmp.ne.s32.totalorder %s172, %s175
    %p181 = scmp.eq.s32.totalorder %s18, 0
    %p182 = por %p180, %p181
    %p183 = scmp.ne.s32.totalorder %s172, %s175
    %p184 = scmp.eq.s32.totalorder %s23, 3
    %p185 = por %p183, %p184
    %p186 = scmp.ne.s32.totalorder %s175, %s176
    %p187 = scmp.eq.s32.totalorder %s23, 0
    %p188 = por %p186, %p187
    %p189 = scmp.ne.s32.totalorder %s175, %s176
    %p190 = scmp.eq.s32.totalorder %s24, 3
    %p191 = por %p189, %p190
    %p193 = scmp.ne.s32.totalorder %s176, %s192
    %p194 = scmp.eq.s32.totalorder %s24, 0
    %p195 = por %p193, %p194
    %s196 = ssub.s32 %s26, %s33
    %p197 = scmp.eq.s32.totalorder %s196, 0
    %s199 = sadd.s32 %s198, 1
    %s200 = scalar_select %p197, %s198, %s199
    %p203 = pneg %p197
    %p204 = scmp.eq.s32.totalorder %s18, 3
    %p205 = por %p203, %p204
    %p206 = scmp.ne.s32.totalorder %s198, %s201
    %p207 = scmp.eq.s32.totalorder %s18, 0
    %p208 = por %p206, %p207
    %p209 = scmp.ne.s32.totalorder %s198, %s201
    %p210 = scmp.eq.s32.totalorder %s23, 3
    %p211 = por %p209, %p210
    %p212 = scmp.ne.s32.totalorder %s201, %s202
    %p213 = scmp.eq.s32.totalorder %s23, 0
    %p214 = por %p212, %p213
    %p215 = scmp.ne.s32.totalorder %s201, %s202
    %p216 = scmp.eq.s32.totalorder %s24, 3
    %p217 = por %p215, %p216
    %p219 = scmp.ne.s32.totalorder %s202, %s218
    %p220 = scmp.eq.s32.totalorder %s24, 0
    %p221 = por %p219, %p220
    %s222 = ssub.s32 %s26, %s33
    %p223 = scmp.eq.s32.totalorder %s222, 0
    %s225 = sadd.s32 %s224, 1
    %s226 = scalar_select %p223, %s224, %s225
    %p229 = pneg %p223
    %p230 = scmp.eq.s32.totalorder %s18, 3
    %p231 = por %p229, %p230
    %p232 = scmp.ne.s32.totalorder %s224, %s227
    %p233 = scmp.eq.s32.totalorder %s18, 0
    %p234 = por %p232, %p233
    %p235 = scmp.ne.s32.totalorder %s224, %s227
    %p236 = scmp.eq.s32.totalorder %s23, 3
    %p237 = por %p235, %p236
    %p238 = scmp.ne.s32.totalorder %s227, %s228
    %p239 = scmp.eq.s32.totalorder %s23, 0
    %p240 = por %p238, %p239
    %p241 = scmp.ne.s32.totalorder %s227, %s228
    %p242 = scmp.eq.s32.totalorder %s24, 3
    %p243 = por %p241, %p242
    %p245 = scmp.ne.s32.totalorder %s228, %s244
    %p246 = scmp.eq.s32.totalorder %s24, 0
    %p247 = por %p245, %p246
    %s248 = ssub.s32 %s26, %s33
    %p249 = scmp.eq.s32.totalorder %s248, 0
    %s251 = sadd.s32 %s250, 1
    %s252 = scalar_select %p249, %s250, %s251
    %p255 = pneg %p249
    %p256 = scmp.eq.s32.totalorder %s18, 3
    %p257 = por %p255, %p256
    %p258 = scmp.ne.s32.totalorder %s250, %s253
    %p259 = scmp.eq.s32.totalorder %s18, 0
    %p260 = por %p258, %p259
    %p261 = scmp.ne.s32.totalorder %s250, %s253
    %p262 = scmp.eq.s32.totalorder %s23, 3
    %p263 = por %p261, %p262
    %p264 = scmp.ne.s32.totalorder %s253, %s254
    %p265 = scmp.eq.s32.totalorder %s23, 0
    %p266 = por %p264, %p265
    %p267 = scmp.ne.s32.totalorder %s253, %s254
    %p268 = scmp.eq.s32.totalorder %s24, 3
    %p269 = por %p267, %p268
    %p271 = scmp.ne.s32.totalorder %s254, %s270
    %p272 = scmp.eq.s32.totalorder %s24, 0
    %p273 = por %p271, %p272
    %s274 = ssub.s32 %s26, %s33
    %p275 = scmp.eq.s32.totalorder %s274, 0
    %s277 = sadd.s32 %s276, 1
    %s278 = scalar_select %p275, %s276, %s277
    %p281 = pneg %p275
    %p282 = scmp.eq.s32.totalorder %s18, 3
    %p283 = por %p281, %p282
    %p284 = scmp.ne.s32.totalorder %s276, %s279
    %p285 = scmp.eq.s32.totalorder %s18, 0
    %p286 = por %p284, %p285
    %p287 = scmp.ne.s32.totalorder %s276, %s279
    %p288 = scmp.eq.s32.totalorder %s23, 3
    %p289 = por %p287, %p288
    %p290 = scmp.ne.s32.totalorder %s279, %s280
    %p291 = scmp.eq.s32.totalorder %s23, 0
    %p292 = por %p290, %p291
    %p293 = scmp.ne.s32.totalorder %s279, %s280
    %p294 = scmp.eq.s32.totalorder %s24, 3
    %p295 = por %p293, %p294
    %p297 = scmp.ne.s32.totalorder %s280, %s296
    %p298 = scmp.eq.s32.totalorder %s24, 0
    %p299 = por %p297, %p298
    %s301 = sadd.s32 %s300, 1
    %p304 = scmp.eq.s32.totalorder %s18, 3
    %p305 = scmp.ne.s32.totalorder %s300, %s302
    %p306 = scmp.eq.s32.totalorder %s18, 0
    %p307 = por %p305, %p306
    %p308 = scmp.ne.s32.totalorder %s300, %s302
    %p309 = scmp.eq.s32.totalorder %s23, 3
    %p310 = por %p308, %p309
    %p311 = scmp.ne.s32.totalorder %s302, %s303
    %p312 = scmp.eq.s32.totalorder %s23, 0
    %p313 = por %p311, %p312
    %p314 = scmp.ne.s32.totalorder %s302, %s303
    %p315 = scmp.eq.s32.totalorder %s24, 3
    %p316 = por %p314, %p315
    %p318 = scmp.ne.s32.totalorder %s303, %s317
    %p319 = scmp.eq.s32.totalorder %s24, 0
    %p320 = por %p318, %p319
    %s322 = sadd.s32 %s321, 1
    %p325 = scmp.eq.s32.totalorder %s18, 3
    %p326 = scmp.ne.s32.totalorder %s321, %s323
    %p327 = scmp.eq.s32.totalorder %s18, 0
    %p328 = por %p326, %p327
    %p329 = scmp.ne.s32.totalorder %s321, %s323
    %p330 = scmp.eq.s32.totalorder %s23, 3
    %p331 = por %p329, %p330
    %p332 = scmp.ne.s32.totalorder %s323, %s324
    %p333 = scmp.eq.s32.totalorder %s23, 0
    %p334 = por %p332, %p333
    %p335 = scmp.ne.s32.totalorder %s323, %s324
    %p336 = scmp.eq.s32.totalorder %s24, 3
    %p337 = por %p335, %p336
    %p339 = scmp.ne.s32.totalorder %s324, %s338
    %p340 = scmp.eq.s32.totalorder %s24, 0
    %p341 = por %p339, %p340
    %s342 = ssub.s32 %s25, %s37
    %p343 = scmp.eq.s32.totalorder %s342, 0
    %s345 = sadd.s32 %s344, 1
    %s346 = scalar_select %p343, %s344, %s345
    %p349 = pneg %p343
    %p350 = scmp.eq.s32.totalorder %s18, 3
    %p351 = por %p349, %p350
    %p352 = scmp.ne.s32.totalorder %s344, %s347
    %p353 = scmp.eq.s32.totalorder %s18, 0
    %p354 = por %p352, %p353
    %p355 = scmp.ne.s32.totalorder %s344, %s347
    %p356 = scmp.eq.s32.totalorder %s23, 3
    %p357 = por %p355, %p356
    %p358 = scmp.ne.s32.totalorder %s347, %s348
    %p359 = scmp.eq.s32.totalorder %s23, 0
    %p360 = por %p358, %p359
    %p361 = scmp.ne.s32.totalorder %s347, %s348
    %p362 = scmp.eq.s32.totalorder %s24, 3
    %p363 = por %p361, %p362
    %p365 = scmp.ne.s32.totalorder %s348, %s364
    %p366 = scmp.eq.s32.totalorder %s24, 0
    %p367 = por %p365, %p366
    %p368 = scmp.le.s32.totalorder 1, %s18
    %p369 = scmp.lt.s32.totalorder %s18, 5
    %p370 = pnand %p368, %p369
    %p371 = pneg %p370
    // Predicated region
    $region9: #{_lambda_.7} parent=5 // pred_check
      _
    $region10: #{_lambda_.7} parent=5 // pred_check_branch
      %373 = sbr.rel (%p370) target = $region12
    $region11: #{_lambda_.7} parent=5 // pred_region
      %s374 = ssub.s32 %s18, 1
      // Predicated region
      $region13: #{_lambda_.7} parent=11 // pred_check
        %p375 = pneg %p313
      $region14: #{_lambda_.7} parent=11 // pred_check_branch
        %377 = sbr.rel (%p375) target = $region16
      $region15: #{_lambda_.7} parent=11 // pred_region
        _
      $region16: #{_lambda_.7} parent=11 // pred_fallthru
        _
      // Predicated region
      $region17: #{_lambda_.7} parent=11 // pred_check
        %p378 = pneg %p334
      $region18: #{_lambda_.7} parent=11 // pred_check_branch
        %380 = sbr.rel (%p378) target = $region20
      $region19: #{_lambda_.7} parent=11 // pred_region
        _
      $region20: #{_lambda_.7} parent=11 // pred_fallthru
        _
    $region12: #{_lambda_.7} parent=5 // pred_fallthru
      _
    %p381 = scmp.lt.s32.totalorder %s18, 4
    // Predicated region
    $region21: #{_lambda_.7} parent=5 // pred_check
      %p382 = pneg %p381
    $region22: #{_lambda_.7} parent=5 // pred_check_branch
      %384 = sbr.rel (%p382) target = $region24
    $region23: #{_lambda_.7} parent=5 // pred_region
      // Predicated region
      $region25: #{_lambda_.7} parent=23 // pred_check
        %p385 = pneg %p50
      $region26: #{_lambda_.7} parent=23 // pred_check_branch
        %387 = sbr.rel (%p385) target = $region28
      $region27: #{_lambda_.7} parent=23 // pred_region
        %p388 = scmp.lt.s32.totalorder %s25, 1
        %s389 = scalar_select %p388, %s25, 1
        %s390 = smul.addr %s389, 8
        %s391 = scalar_lea.vmem %s0, %s390
      $region28: #{_lambda_.7} parent=23 // pred_fallthru
        _
      // Predicated region
      $region29: #{_lambda_.7} parent=23 // pred_check
        %p392 = pneg %p78
      $region30: #{_lambda_.7} parent=23 // pred_check_branch
        %394 = sbr.rel (%p392) target = $region32
      $region31: #{_lambda_.7} parent=23 // pred_region
        %p395 = scmp.lt.s32.totalorder %s26, 1
        %s396 = scalar_select %p395, %s26, 1
        %p397 = scmp.lt.s32.totalorder %s25, 1
        %s398 = scalar_select %p397, %s25, 1
        %s399 = smul.addr %s396, 2
        %s400 = sadd.s32 %s398, %s399
        %s401 = smul.addr %s400, 8
        %s402 = scalar_lea.vmem %s1, %s401
      $region32: #{_lambda_.7} parent=23 // pred_fallthru
        _
      // Predicated region
      $region33: #{_lambda_.7} parent=23 // pred_check
        %p403 = pneg %p104
      $region34: #{_lambda_.7} parent=23 // pred_check_branch
        %405 = sbr.rel (%p403) target = $region36
      $region35: #{_lambda_.7} parent=23 // pred_region
        %p406 = scmp.lt.s32.totalorder %s26, 1
        %s407 = scalar_select %p406, %s26, 1
        %s408 = smul.addr %s407, 16
        %s409 = smul.addr %s408, 4
        %s410 = scalar_lea.vmem %s2, %s409
      $region36: #{_lambda_.7} parent=23 // pred_fallthru
        _
      // Predicated region
      $region37: #{_lambda_.7} parent=23 // pred_check
        %p411 = pneg %p130
      $region38: #{_lambda_.7} parent=23 // pred_check_branch
        %413 = sbr.rel (%p411) target = $region40
      $region39: #{_lambda_.7} parent=23 // pred_region
        %p414 = scmp.lt.s32.totalorder %s26, 1
        %s415 = scalar_select %p414, %s26, 1
        %s416 = smul.addr %s415, 4
        %s417 = scalar_lea.vmem %s3, %s416
      $region40: #{_lambda_.7} parent=23 // pred_fallthru
        _
      // Predicated region
      $region41: #{_lambda_.7} parent=23 // pred_check
        %p418 = pneg %p156
      $region42: #{_lambda_.7} parent=23 // pred_check_branch
        %420 = sbr.rel (%p418) target = $region44
      $region43: #{_lambda_.7} parent=23 // pred_region
        %p421 = scmp.lt.s32.totalorder %s26, 1
        %s422 = scalar_select %p421, %s26, 1
        %s423 = smul.addr %s422, 16
        %s424 = smul.addr %s423, 4
        %s425 = scalar_lea.vmem %s4, %s424
      $region44: #{_lambda_.7} parent=23 // pred_fallthru
        _
      // Predicated region
      $region45: #{_lambda_.7} parent=23 // pred_check
        %p426 = pneg %p182
      $region46: #{_lambda_.7} parent=23 // pred_check_branch
        %428 = sbr.rel (%p426) target = $region48
      $region47: #{_lambda_.7} parent=23 // pred_region
        %p429 = scmp.lt.s32.totalorder %s26, 1
        %s430 = scalar_select %p429, %s26, 1
        %s431 = smul.addr %s430, 4
        %s432 = scalar_lea.vmem %s5, %s431
      $region48: #{_lambda_.7} parent=23 // pred_fallthru
        _
      // Predicated region
      $region49: #{_lambda_.7} parent=23 // pred_check
        %p433 = pneg %p208
      $region50: #{_lambda_.7} parent=23 // pred_check_branch
        %435 = sbr.rel (%p433) target = $region52
      $region51: #{_lambda_.7} parent=23 // pred_region
        %p436 = scmp.lt.s32.totalorder %s26, 1
        %s437 = scalar_select %p436, %s26, 1
        %s438 = smul.addr %s437, 16
        %s439 = smul.addr %s438, 4
        %s440 = scalar_lea.vmem %s6, %s439
      $region52: #{_lambda_.7} parent=23 // pred_fallthru
        _
      // Predicated region
      $region53: #{_lambda_.7} parent=23 // pred_check
        %p441 = pneg %p234
      $region54: #{_lambda_.7} parent=23 // pred_check_branch
        %443 = sbr.rel (%p441) target = $region56
      $region55: #{_lambda_.7} parent=23 // pred_region
        %p444 = scmp.lt.s32.totalorder %s26, 1
        %s445 = scalar_select %p444, %s26, 1
        %s446 = smul.addr %s445, 4
        %s447 = scalar_lea.vmem %s7, %s446
      $region56: #{_lambda_.7} parent=23 // pred_fallthru
        _
      // Predicated region
      $region57: #{_lambda_.7} parent=23 // pred_check
        %p448 = pneg %p260
      $region58: #{_lambda_.7} parent=23 // pred_check_branch
        %450 = sbr.rel (%p448) target = $region60
      $region59: #{_lambda_.7} parent=23 // pred_region
        %p451 = scmp.lt.s32.totalorder %s26, 1
        %s452 = scalar_select %p451, %s26, 1
        %s453 = smul.addr %s452, 4
        %s454 = smul.addr %s453, 4
        %s455 = scalar_lea.vmem %s8, %s454
      $region60: #{_lambda_.7} parent=23 // pred_fallthru
        _
      // Predicated region
      $region61: #{_lambda_.7} parent=23 // pred_check
        %p456 = pneg %p286
      $region62: #{_lambda_.7} parent=23 // pred_check_branch
        %458 = sbr.rel (%p456) target = $region64
      $region63: #{_lambda_.7} parent=23 // pred_region
        %p459 = scmp.lt.s32.totalorder %s26, 1
        %s460 = scalar_select %p459, %s26, 1
        %s461 = scalar_lea.vmem %s9, %s460
      $region64: #{_lambda_.7} parent=23 // pred_fallthru
        _
    $region24: #{_lambda_.7} parent=5 // pred_fallthru
      _
    %p462 = scmp.le.s32.totalorder 1, %s18
    %p463 = scmp.lt.s32.totalorder %s18, 5
    %p464 = pnand %p462, %p463
    %p465 = pneg %p464
    // Predicated region
    $region65: #{_lambda_.7} parent=5 // pred_check
      _
    $region66: #{_lambda_.7} parent=5 // pred_check_branch
      %467 = sbr.rel (%p464) target = $region68
    $region67: #{_lambda_.7} parent=5 // pred_region
      %s468 = ssub.s32 %s18, 1
      %p469 = scmp.lt.s32.totalorder %s27, 1
      %s470 = scalar_select %p469, %s27, 1
      %s471 = smul.addr %s470, 8
      %s472 = scalar_lea.vmem %s0, %s471
      %p473 = pneg %p56
      %p474 = pneg %p53
      %p475 = scmp.lt.s32.totalorder %s28, 1
      %s476 = scalar_select %p475, %s28, 1
      %p477 = scmp.lt.s32.totalorder %s27, 1
      %s478 = scalar_select %p477, %s27, 1
      %s479 = smul.addr %s476, 2
      %s480 = sadd.s32 %s478, %s479
      %s481 = smul.addr %s480, 8
      %s482 = scalar_lea.vmem %s1, %s481
      %p483 = pneg %p84
      %p484 = pneg %p81
      %p485 = scmp.lt.s32.totalorder %s28, 1
      %s486 = scalar_select %p485, %s28, 1
      %s487 = smul.addr %s486, 16
      %s488 = smul.addr %s487, 4
      %s489 = scalar_lea.vmem %s2, %s488
      %p490 = pneg %p110
      %p491 = pneg %p107
      %p492 = scmp.lt.s32.totalorder %s28, 1
      %s493 = scalar_select %p492, %s28, 1
      %s494 = smul.addr %s493, 4
      %s495 = scalar_lea.vmem %s3, %s494
      %p496 = pneg %p136
      %p497 = pneg %p133
      %p498 = scmp.lt.s32.totalorder %s28, 1
      %s499 = scalar_select %p498, %s28, 1
      %s500 = smul.addr %s499, 16
      %s501 = smul.addr %s500, 4
      %s502 = scalar_lea.vmem %s4, %s501
      %p503 = pneg %p162
      %p504 = pneg %p159
      %p505 = scmp.lt.s32.totalorder %s28, 1
      %s506 = scalar_select %p505, %s28, 1
      %s507 = smul.addr %s506, 4
      %s508 = scalar_lea.vmem %s5, %s507
      %p509 = pneg %p188
      %p510 = pneg %p185
      %p511 = scmp.lt.s32.totalorder %s28, 1
      %s512 = scalar_select %p511, %s28, 1
      %s513 = smul.addr %s512, 16
      %s514 = smul.addr %s513, 4
      %s515 = scalar_lea.vmem %s6, %s514
      %p516 = pneg %p214
      %p517 = pneg %p211
      %p518 = scmp.lt.s32.totalorder %s28, 1
      %s519 = scalar_select %p518, %s28, 1
      %s520 = smul.addr %s519, 4
      %s521 = scalar_lea.vmem %s7, %s520
      %p522 = pneg %p240
      %p523 = pneg %p237
      %p524 = scmp.lt.s32.totalorder %s28, 1
      %s525 = scalar_select %p524, %s28, 1
      %s526 = smul.addr %s525, 4
      %s527 = smul.addr %s526, 4
      %s528 = scalar_lea.vmem %s8, %s527
      %p529 = pneg %p266
      %p530 = pneg %p263
      %p531 = scmp.lt.s32.totalorder %s28, 1
      %s532 = scalar_select %p531, %s28, 1
      %s533 = scalar_lea.vmem %s9, %s532
      %p534 = pneg %p292
      %p535 = pneg %p289
      %p536 = pneg %p313
      %p537 = pneg %p310
      %p538 = pneg %p334
      %p539 = pneg %p331
      %p540 = pneg %p360
      %p541 = pneg %p357
      %p542 = scmp.lt.s32.totalorder %s27, 1
      %s543 = scalar_select %p542, %s27, 1
      %s544 = smul.addr %s543, 8
      %s545 = scalar_lea.vmem %s12, %s544
      %p546 = scmp.lt.s32.totalorder %s27, 1
      %s547 = scalar_select %p546, %s27, 1
      %s548 = smul.addr %s547, 8
      %s549 = scalar_lea.vmem %s0, %s548
      %p550 = scmp.lt.s32.totalorder %s28, 1
      %s551 = scalar_select %p550, %s28, 1
      %p552 = scmp.lt.s32.totalorder %s27, 1
      %s553 = scalar_select %p552, %s27, 1
      %s554 = smul.addr %s551, 2
      %s555 = sadd.s32 %s553, %s554
      %s556 = smul.addr %s555, 8
      %s557 = scalar_lea.vmem %s1, %s556
      %p558 = scmp.lt.s32.totalorder %s28, 1
      %s559 = scalar_select %p558, %s28, 1
      %s560 = smul.addr %s559, 16
      %s561 = smul.addr %s560, 4
      %s562 = scalar_lea.vmem %s2, %s561
      %p563 = scmp.lt.s32.totalorder %s28, 1
      %s564 = scalar_select %p563, %s28, 1
      %s565 = smul.addr %s564, 4
      %s566 = scalar_lea.vmem %s3, %s565
      %p567 = scmp.lt.s32.totalorder %s28, 1
      %s568 = scalar_select %p567, %s28, 1
      %s569 = smul.addr %s568, 16
      %s570 = smul.addr %s569, 4
      %s571 = scalar_lea.vmem %s4, %s570
      %p572 = scmp.lt.s32.totalorder %s28, 1
      %s573 = scalar_select %p572, %s28, 1
      %s574 = smul.addr %s573, 4
      %s575 = scalar_lea.vmem %s5, %s574
      %p576 = scmp.lt.s32.totalorder %s28, 1
      %s577 = scalar_select %p576, %s28, 1
      %s578 = smul.addr %s577, 16
      %s579 = smul.addr %s578, 4
      %s580 = scalar_lea.vmem %s6, %s579
      %p581 = scmp.lt.s32.totalorder %s28, 1
      %s582 = scalar_select %p581, %s28, 1
      %s583 = smul.addr %s582, 4
      %s584 = scalar_lea.vmem %s7, %s583
      %p585 = scmp.lt.s32.totalorder %s28, 1
      %s586 = scalar_select %p585, %s28, 1
      %s587 = smul.addr %s586, 4
      %s588 = smul.addr %s587, 4
      %s589 = scalar_lea.vmem %s8, %s588
      %p590 = scmp.lt.s32.totalorder %s28, 1
      %s591 = scalar_select %p590, %s28, 1
      %s592 = scalar_lea.vmem %s9, %s591
      %p593 = scmp.lt.s32.totalorder %s27, 1
      %s594 = scalar_select %p593, %s27, 1
      %s595 = smul.addr %s594, 8
      %s596 = scalar_lea.vmem %s12, %s595
      %p598 = scmp.eq.s32.totalorder %s28, 0
      // Predicated region
      $region69: #{_lambda_.7} parent=67 // pred_check
        %p599 = pneg %p598
      $region70: #{_lambda_.7} parent=67 // pred_check_branch
        %601 = sbr.rel (%p599) target = $region72
      $region71: #{_lambda_.7} parent=67 // pred_region
        %vm602 = vcmask 261120
        %603 = vst.msk [vmem:[#allocation2] sm:$0xff] %vm602, 0.0
      $region72: #{_lambda_.7} parent=67 // pred_fallthru
        _
      %v604 = vld [vmem:[%s549] sm:$0xff]
      %v605 = vld [vmem:[%s557] sm:$0xff]
      %v606 = vpack.c.bf16 %v604, %v604
      %v607 = vpack.c.bf16 %v605, %v605
      %v608 = vld [vmem:[%s562] sm:$0xf]
      %v609 = vld [vmem:[%s562 + $0x4] sm:$0xf]
      %v610 = vld [vmem:[%s562 + $0x8] sm:$0xf]
      %v611 = vld [vmem:[%s562 + $0xc] sm:$0xf]
      %v612 = vld [vmem:[%s566] sm:$0x1]
      %v614 = vperm.slane %v612, 0
      %v620 = vunpack.c.l.b16 %v608
      %v621 = vunpack.c.l.b16 %v609
      %v622 = vunpack.c.l.b16 %v610
      %v623 = vunpack.c.l.b16 %v611
      %v624 = vpack.c.b16 %v621, %v620
      %v625 = vpack.c.b16 %v623, %v622
      %vm628 = vcmask 261120
      %v630 = vsel %vm628, %v606, 0
      %632 = vmatpush.bf16.msra.mxu0 0
      %633 = vmatpush.bf16.msra.mxu0 0
      %634 = vmatpush.bf16.msra.mxu0 0
      %635 = vmatpush.bf16.msra.mxu0 0
      %636 = vmatpush.bf16.msra.mxu0 0
      %637 = vmatpush.bf16.msra.mxu0 0
      %638 = vmatpush.bf16.msra.mxu0 %v625
      %639 = vmatpush.bf16.msra.mxu0 %v624
      %640 = vmatmul.bf16.gmra.mxu0 %v630
      %v641 = vpop.f32.mrf.mxu0
      %v642 = vadd.f32 %v614, %v641
      %v643 = vpop.f32.mrf.mxu0
      %644 = vdwg.mxu0
      %v645 = vmul.f32 %v642, 0.35355338
      %v646 = vld [vmem:[%s571] sm:$0xf]
      %v647 = vld [vmem:[%s571 + $0x4] sm:$0xf]
      %v648 = vld [vmem:[%s571 + $0x8] sm:$0xf]
      %v649 = vld [vmem:[%s571 + $0xc] sm:$0xf]
      %v650 = vld [vmem:[%s575] sm:$0x1]
      %v652 = vperm.slane %v650, 0
      %v658 = vunpack.c.l.b16 %v646
      %v659 = vunpack.c.l.b16 %v647
      %v660 = vunpack.c.l.b16 %v648
      %v661 = vunpack.c.l.b16 %v649
      %v662 = vpack.c.b16 %v659, %v658
      %v663 = vpack.c.b16 %v661, %v660
      %v667 = vsel %vm628, %v607, 0
      %669 = vmatpush.bf16.msra.mxu0 0
      %670 = vmatpush.bf16.msra.mxu0 0
      %671 = vmatpush.bf16.msra.mxu0 0
      %672 = vmatpush.bf16.msra.mxu0 0
      %673 = vmatpush.bf16.msra.mxu0 0
      %674 = vmatpush.bf16.msra.mxu0 0
      %675 = vmatpush.bf16.msra.mxu0 %v663
      %676 = vmatpush.bf16.msra.mxu0 %v662
      %677 = vmatmul.bf16.gmra.mxu0 %v667
      %v678 = vpop.f32.mrf.mxu0
      %v679 = vadd.f32 %v652, %v678
      %v680 = vpop.f32.mrf.mxu0
      %681 = vdwg.mxu0
      %v682 = vld [vmem:[%s580] sm:$0xf]
      %v683 = vld [vmem:[%s580 + $0x4] sm:$0xf]
      %v684 = vld [vmem:[%s580 + $0x8] sm:$0xf]
      %v685 = vld [vmem:[%s580 + $0xc] sm:$0xf]
      %v686 = vld [vmem:[%s584] sm:$0x1]
      %v688 = vperm.slane %v686, 0
      %v694 = vunpack.c.l.b16 %v682
      %v695 = vunpack.c.l.b16 %v683
      %v696 = vunpack.c.l.b16 %v684
      %v697 = vunpack.c.l.b16 %v685
      %v698 = vpack.c.b16 %v695, %v694
      %v699 = vpack.c.b16 %v697, %v696
      %702 = vmatpush.bf16.msra.mxu0 0
      %703 = vmatpush.bf16.msra.mxu0 0
      %704 = vmatpush.bf16.msra.mxu0 0
      %705 = vmatpush.bf16.msra.mxu0 0
      %706 = vmatpush.bf16.msra.mxu0 0
      %707 = vmatpush.bf16.msra.mxu0 0
      %708 = vmatpush.bf16.msra.mxu0 %v699
      %709 = vmatpush.bf16.msra.mxu0 %v698
      %710 = vmatmul.bf16.gmra.mxu0 %v667
      %v711 = vpop.f32.mrf.mxu0
      %v712 = vadd.f32 %v688, %v711
      %v713 = vpop.f32.mrf.mxu0
      %714 = vdwg.mxu0
      %v715 = vpack.c.bf16 %v645, %v645
      %v716 = vpack.c.bf16 %v679, %v679
      %vm717 = vcmask 64512
      %v719 = vsel %vm717, %v715, 0
      %v722 = vsel %vm717, %v716, 0
      %724 = vmatpush.bf16.xpose.msra.mxu0 0
      %725 = vmatpush.bf16.xpose.msra.mxu0 0
      %726 = vmatpush.bf16.xpose.msra.mxu0 0
      %727 = vmatpush.bf16.xpose.msra.mxu0 0
      %728 = vmatpush.bf16.xpose.msra.mxu0 0
      %729 = vmatpush.bf16.xpose.msra.mxu0 0
      %730 = vmatpush.bf16.xpose.msra.mxu0 0
      %731 = vmatpush.bf16.xpose.msra.mxu0 %v722
      %732 = vmatmul.bf16.gmra.mxu0 %v719
      %v733 = vpop.f32.mrf.mxu0
      %v734 = vadd.f32 0.0, %v733
      %v735 = vpop.f32.mrf.mxu0
      %736 = vdwg.mxu0
      %v737 = vsel %vm717, %v734, -inf
      %738 = vmax.xlane.f32.xlu0 %v737
      %v739 = vpop.xlane.xlu0 %738
      %v740 = vsub.f32 %v734, %v739
      %v741 = vmul.f32 %v740, 1.442695
      %v742 = vpow.pop %v741
      %v743 = vsel %vm717, %v742, 0.0
      %744 = vadd.xlane.f32.xlu0 %v743
      %v745 = vpop.xlane.xlu0 %744
      %v746 = vrcp.pop %v745
      %v747 = vmul.f32 %v742, %v746
      %v748 = vpack.c.bf16 %v747, %v747
      %v749 = vpack.c.bf16 %v712, %v712
      %v751 = vsel %vm717, %v748, 0
      %vm753 = vcmask 1043456
      %v755 = vsel %vm753, %v749, 0
      %757 = vmatpush.bf16.msra.mxu0 0
      %758 = vmatpush.bf16.msra.mxu0 0
      %759 = vmatpush.bf16.msra.mxu0 0
      %760 = vmatpush.bf16.msra.mxu0 0
      %761 = vmatpush.bf16.msra.mxu0 0
      %762 = vmatpush.bf16.msra.mxu0 0
      %763 = vmatpush.bf16.msra.mxu0 0
      %764 = vmatpush.bf16.msra.mxu0 %v755
      %765 = vmatmul.bf16.gmra.mxu0 %v751
      %v766 = vpop.f32.mrf.mxu0
      %v767 = vadd.f32 0.0, %v766
      %v768 = vpop.f32.mrf.mxu0
      %769 = vdwg.mxu0
      %v770 = vpack.c.bf16 %v767, %v767
      %v771 = vld [vmem:[%s589] sm:$0xf]
      %s772 = scalar_lea.vmem %s562, 16
      %v773 = vld [vmem:[%s772] sm:$0xf]
      %v774 = vld [vmem:[%s772 + $0x4] sm:$0xf]
      %v775 = vld [vmem:[%s772 + $0x8] sm:$0xf]
      %v776 = vld [vmem:[%s772 + $0xc] sm:$0xf]
      %s777 = scalar_lea.vmem %s566, 1
      %v778 = vld [vmem:[%s777] sm:$0x1]
      %v780 = vperm.slane %v778, 0
      %v786 = vunpack.c.l.b16 %v773
      %v787 = vunpack.c.l.b16 %v774
      %v788 = vunpack.c.l.b16 %v775
      %v789 = vunpack.c.l.b16 %v776
      %v790 = vpack.c.b16 %v787, %v786
      %v791 = vpack.c.b16 %v789, %v788
      %794 = vmatpush.bf16.msra.mxu0 0
      %795 = vmatpush.bf16.msra.mxu0 0
      %796 = vmatpush.bf16.msra.mxu0 0
      %797 = vmatpush.bf16.msra.mxu0 0
      %798 = vmatpush.bf16.msra.mxu0 0
      %799 = vmatpush.bf16.msra.mxu0 0
      %800 = vmatpush.bf16.msra.mxu0 %v791
      %801 = vmatpush.bf16.msra.mxu0 %v790
      %802 = vmatmul.bf16.gmra.mxu0 %v630
      %v803 = vpop.f32.mrf.mxu0
      %v804 = vadd.f32 %v780, %v803
      %v805 = vpop.f32.mrf.mxu0
      %806 = vdwg.mxu0
      %v807 = vmul.f32 %v804, 0.35355338
      %s808 = scalar_lea.vmem %s571, 16
      %v809 = vld [vmem:[%s808] sm:$0xf]
      %v810 = vld [vmem:[%s808 + $0x4] sm:$0xf]
      %v811 = vld [vmem:[%s808 + $0x8] sm:$0xf]
      %v812 = vld [vmem:[%s808 + $0xc] sm:$0xf]
      %s813 = scalar_lea.vmem %s575, 1
      %v814 = vld [vmem:[%s813] sm:$0x1]
      %v816 = vperm.slane %v814, 0
      %v822 = vunpack.c.l.b16 %v809
      %v823 = vunpack.c.l.b16 %v810
      %v824 = vunpack.c.l.b16 %v811
      %v825 = vunpack.c.l.b16 %v812
      %v826 = vpack.c.b16 %v823, %v822
      %v827 = vpack.c.b16 %v825, %v824
      %830 = vmatpush.bf16.msra.mxu0 0
      %831 = vmatpush.bf16.msra.mxu0 0
      %832 = vmatpush.bf16.msra.mxu0 0
      %833 = vmatpush.bf16.msra.mxu0 0
      %834 = vmatpush.bf16.msra.mxu0 0
      %835 = vmatpush.bf16.msra.mxu0 0
      %836 = vmatpush.bf16.msra.mxu0 %v827
      %837 = vmatpush.bf16.msra.mxu0 %v826
      %838 = vmatmul.bf16.gmra.mxu0 %v667
      %v839 = vpop.f32.mrf.mxu0
      %v840 = vadd.f32 %v816, %v839
      %v841 = vpop.f32.mrf.mxu0
      %842 = vdwg.mxu0
      %s843 = scalar_lea.vmem %s580, 16
      %v844 = vld [vmem:[%s843] sm:$0xf]
      %v845 = vld [vmem:[%s843 + $0x4] sm:$0xf]
      %v846 = vld [vmem:[%s843 + $0x8] sm:$0xf]
      %v847 = vld [vmem:[%s843 + $0xc] sm:$0xf]
      %s848 = scalar_lea.vmem %s584, 1
      %v849 = vld [vmem:[%s848] sm:$0x1]
      %v851 = vperm.slane %v849, 0
      %v857 = vunpack.c.l.b16 %v844
      %v858 = vunpack.c.l.b16 %v845
      %v859 = vunpack.c.l.b16 %v846
      %v860 = vunpack.c.l.b16 %v847
      %v861 = vpack.c.b16 %v858, %v857
      %v862 = vpack.c.b16 %v860, %v859
      %865 = vmatpush.bf16.msra.mxu0 0
      %866 = vmatpush.bf16.msra.mxu0 0
      %867 = vmatpush.bf16.msra.mxu0 0
      %868 = vmatpush.bf16.msra.mxu0 0
      %869 = vmatpush.bf16.msra.mxu0 0
      %870 = vmatpush.bf16.msra.mxu0 0
      %871 = vmatpush.bf16.msra.mxu0 %v862
      %872 = vmatpush.bf16.msra.mxu0 %v861
      %873 = vmatmul.bf16.gmra.mxu0 %v667
      %v874 = vpop.f32.mrf.mxu0
      %v875 = vadd.f32 %v851, %v874
      %v876 = vpop.f32.mrf.mxu0
      %877 = vdwg.mxu0
      %v878 = vpack.c.bf16 %v807, %v807
      %v879 = vpack.c.bf16 %v840, %v840
      %v881 = vsel %vm717, %v878, 0
      %v884 = vsel %vm717, %v879, 0
      %886 = vmatpush.bf16.xpose.msra.mxu0 0
      %887 = vmatpush.bf16.xpose.msra.mxu0 0
      %888 = vmatpush.bf16.xpose.msra.mxu0 0
      %889 = vmatpush.bf16.xpose.msra.mxu0 0
      %890 = vmatpush.bf16.xpose.msra.mxu0 0
      %891 = vmatpush.bf16.xpose.msra.mxu0 0
      %892 = vmatpush.bf16.xpose.msra.mxu0 0
      %893 = vmatpush.bf16.xpose.msra.mxu0 %v884
      %894 = vmatmul.bf16.gmra.mxu0 %v881
      %v895 = vpop.f32.mrf.mxu0
      %v896 = vadd.f32 0.0, %v895
      %v897 = vpop.f32.mrf.mxu0
      %898 = vdwg.mxu0
      %v899 = vsel %vm717, %v896, -inf
      %900 = vmax.xlane.f32.xlu0 %v899
      %v901 = vpop.xlane.xlu0 %900
      %v902 = vsub.f32 %v896, %v901
      %v903 = vmul.f32 %v902, 1.442695
      %v904 = vpow.pop %v903
      %v905 = vsel %vm717, %v904, 0.0
      %906 = vadd.xlane.f32.xlu0 %v905
      %v907 = vpop.xlane.xlu0 %906
      %v908 = vrcp.pop %v907
      %v909 = vmul.f32 %v904, %v908
      %v910 = vpack.c.bf16 %v909, %v909
      %v911 = vpack.c.bf16 %v875, %v875
      %v913 = vsel %vm717, %v910, 0
      %v916 = vsel %vm753, %v911, 0
      %918 = vmatpush.bf16.msra.mxu0 0
      %919 = vmatpush.bf16.msra.mxu0 0
      %920 = vmatpush.bf16.msra.mxu0 0
      %921 = vmatpush.bf16.msra.mxu0 0
      %922 = vmatpush.bf16.msra.mxu0 0
      %923 = vmatpush.bf16.msra.mxu0 0
      %924 = vmatpush.bf16.msra.mxu0 0
      %925 = vmatpush.bf16.msra.mxu0 %v916
      %926 = vmatmul.bf16.gmra.mxu0 %v913
      %v927 = vpop.f32.mrf.mxu0
      %v928 = vadd.f32 0.0, %v927
      %v929 = vpop.f32.mrf.mxu0
      %930 = vdwg.mxu0
      %v931 = vpack.c.bf16 %v928, %v928
      %s932 = scalar_lea.vmem %s589, 4
      %v933 = vld [vmem:[%s932] sm:$0xf]
      %v935 = vsel %vm717, %v931, 0
      %v938 = vsel %vm753, %v933, 0
      %940 = vmatpush.bf16.msra.mxu0 0
      %941 = vmatpush.bf16.msra.mxu0 0
      %942 = vmatpush.bf16.msra.mxu0 0
      %943 = vmatpush.bf16.msra.mxu0 0
      %944 = vmatpush.bf16.msra.mxu0 0
      %945 = vmatpush.bf16.msra.mxu0 0
      %946 = vmatpush.bf16.msra.mxu0 0
      %947 = vmatpush.bf16.msra.mxu0 %v938
      %948 = vmatmul.bf16.gmra.mxu0 %v935
      %v949 = vpop.f32.mrf.mxu0
      %v950 = vadd.f32 0.0, %v949
      %v951 = vpop.f32.mrf.mxu0
      %952 = vdwg.mxu0
      %v954 = vsel %vm717, %v770, 0
      %v957 = vsel %vm753, %v771, 0
      %959 = vmatpush.bf16.msra.mxu0 0
      %960 = vmatpush.bf16.msra.mxu0 0
      %961 = vmatpush.bf16.msra.mxu0 0
      %962 = vmatpush.bf16.msra.mxu0 0
      %963 = vmatpush.bf16.msra.mxu0 0
      %964 = vmatpush.bf16.msra.mxu0 0
      %965 = vmatpush.bf16.msra.mxu0 0
      %966 = vmatpush.bf16.msra.mxu0 %v957
      %967 = vmatmul.bf16.gmra.mxu0 %v954
      %v968 = vpop.f32.mrf.mxu0
      %v969 = vadd.f32 %v950, %v968
      %v970 = vpop.f32.mrf.mxu0
      %971 = vdwg.mxu0
      %s972 = scalar_lea.vmem %s562, 32
      %v973 = vld [vmem:[%s972] sm:$0xf]
      %v974 = vld [vmem:[%s972 + $0x4] sm:$0xf]
      %v975 = vld [vmem:[%s972 + $0x8] sm:$0xf]
      %v976 = vld [vmem:[%s972 + $0xc] sm:$0xf]
      %s977 = scalar_lea.vmem %s566, 2
      %v978 = vld [vmem:[%s977] sm:$0x1]
      %v980 = vperm.slane %v978, 0
      %v986 = vunpack.c.l.b16 %v973
      %v987 = vunpack.c.l.b16 %v974
      %v988 = vunpack.c.l.b16 %v975
      %v989 = vunpack.c.l.b16 %v976
      %v990 = vpack.c.b16 %v987, %v986
      %v991 = vpack.c.b16 %v989, %v988
      %994 = vmatpush.bf16.msra.mxu0 0
      %995 = vmatpush.bf16.msra.mxu0 0
      %996 = vmatpush.bf16.msra.mxu0 0
      %997 = vmatpush.bf16.msra.mxu0 0
      %998 = vmatpush.bf16.msra.mxu0 0
      %999 = vmatpush.bf16.msra.mxu0 0
      %1000 = vmatpush.bf16.msra.mxu0 %v991
      %1001 = vmatpush.bf16.msra.mxu0 %v990
      %1002 = vmatmul.bf16.gmra.mxu0 %v630
      %v1003 = vpop.f32.mrf.mxu0
      %v1004 = vadd.f32 %v980, %v1003
      %v1005 = vpop.f32.mrf.mxu0
      %1006 = vdwg.mxu0
      %v1007 = vmul.f32 %v1004, 0.35355338
      %s1008 = scalar_lea.vmem %s571, 32
      %v1009 = vld [vmem:[%s1008] sm:$0xf]
      %v1010 = vld [vmem:[%s1008 + $0x4] sm:$0xf]
      %v1011 = vld [vmem:[%s1008 + $0x8] sm:$0xf]
      %v1012 = vld [vmem:[%s1008 + $0xc] sm:$0xf]
      %s1013 = scalar_lea.vmem %s575, 2
      %v1014 = vld [vmem:[%s1013] sm:$0x1]
      %v1016 = vperm.slane %v1014, 0
      %v1022 = vunpack.c.l.b16 %v1009
      %v1023 = vunpack.c.l.b16 %v1010
      %v1024 = vunpack.c.l.b16 %v1011
      %v1025 = vunpack.c.l.b16 %v1012
      %v1026 = vpack.c.b16 %v1023, %v1022
      %v1027 = vpack.c.b16 %v1025, %v1024
      %1030 = vmatpush.bf16.msra.mxu0 0
      %1031 = vmatpush.bf16.msra.mxu0 0
      %1032 = vmatpush.bf16.msra.mxu0 0
      %1033 = vmatpush.bf16.msra.mxu0 0
      %1034 = vmatpush.bf16.msra.mxu0 0
      %1035 = vmatpush.bf16.msra.mxu0 0
      %1036 = vmatpush.bf16.msra.mxu0 %v1027
      %1037 = vmatpush.bf16.msra.mxu0 %v1026
      %1038 = vmatmul.bf16.gmra.mxu0 %v667
      %v1039 = vpop.f32.mrf.mxu0
      %v1040 = vadd.f32 %v1016, %v1039
      %v1041 = vpop.f32.mrf.mxu0
      %1042 = vdwg.mxu0
      %s1043 = scalar_lea.vmem %s580, 32
      %v1044 = vld [vmem:[%s1043] sm:$0xf]
      %v1045 = vld [vmem:[%s1043 + $0x4] sm:$0xf]
      %v1046 = vld [vmem:[%s1043 + $0x8] sm:$0xf]
      %v1047 = vld [vmem:[%s1043 + $0xc] sm:$0xf]
      %s1048 = scalar_lea.vmem %s584, 2
      %v1049 = vld [vmem:[%s1048] sm:$0x1]
      %v1051 = vperm.slane %v1049, 0
      %v1057 = vunpack.c.l.b16 %v1044
      %v1058 = vunpack.c.l.b16 %v1045
      %v1059 = vunpack.c.l.b16 %v1046
      %v1060 = vunpack.c.l.b16 %v1047
      %v1061 = vpack.c.b16 %v1058, %v1057
      %v1062 = vpack.c.b16 %v1060, %v1059
      %1065 = vmatpush.bf16.msra.mxu0 0
      %1066 = vmatpush.bf16.msra.mxu0 0
      %1067 = vmatpush.bf16.msra.mxu0 0
      %1068 = vmatpush.bf16.msra.mxu0 0
      %1069 = vmatpush.bf16.msra.mxu0 0
      %1070 = vmatpush.bf16.msra.mxu0 0
      %1071 = vmatpush.bf16.msra.mxu0 %v1062
      %1072 = vmatpush.bf16.msra.mxu0 %v1061
      %1073 = vmatmul.bf16.gmra.mxu0 %v667
      %v1074 = vpop.f32.mrf.mxu0
      %v1075 = vadd.f32 %v1051, %v1074
      %v1076 = vpop.f32.mrf.mxu0
      %1077 = vdwg.mxu0
      %v1078 = vpack.c.bf16 %v1007, %v1007
      %v1079 = vpack.c.bf16 %v1040, %v1040
      %v1081 = vsel %vm717, %v1078, 0
      %v1084 = vsel %vm717, %v1079, 0
      %1086 = vmatpush.bf16.xpose.msra.mxu0 0
      %1087 = vmatpush.bf16.xpose.msra.mxu0 0
      %1088 = vmatpush.bf16.xpose.msra.mxu0 0
      %1089 = vmatpush.bf16.xpose.msra.mxu0 0
      %1090 = vmatpush.bf16.xpose.msra.mxu0 0
      %1091 = vmatpush.bf16.xpose.msra.mxu0 0
      %1092 = vmatpush.bf16.xpose.msra.mxu0 0
      %1093 = vmatpush.bf16.xpose.msra.mxu0 %v1084
      %1094 = vmatmul.bf16.gmra.mxu0 %v1081
      %v1095 = vpop.f32.mrf.mxu0
      %v1096 = vadd.f32 0.0, %v1095
      %v1097 = vpop.f32.mrf.mxu0
      %1098 = vdwg.mxu0
      %v1099 = vsel %vm717, %v1096, -inf
      %1100 = vmax.xlane.f32.xlu0 %v1099
      %v1101 = vpop.xlane.xlu0 %1100
      %v1102 = vsub.f32 %v1096, %v1101
      %v1103 = vmul.f32 %v1102, 1.442695
      %v1104 = vpow.pop %v1103
      %v1105 = vsel %vm717, %v1104, 0.0
      %1106 = vadd.xlane.f32.xlu0 %v1105
      %v1107 = vpop.xlane.xlu0 %1106
      %v1108 = vrcp.pop %v1107
      %v1109 = vmul.f32 %v1104, %v1108
      %v1110 = vpack.c.bf16 %v1109, %v1109
      %v1111 = vpack.c.bf16 %v1075, %v1075
      %v1113 = vsel %vm717, %v1110, 0
      %v1116 = vsel %vm753, %v1111, 0
      %1118 = vmatpush.bf16.msra.mxu0 0
      %1119 = vmatpush.bf16.msra.mxu0 0
      %1120 = vmatpush.bf16.msra.mxu0 0
      %1121 = vmatpush.bf16.msra.mxu0 0
      %1122 = vmatpush.bf16.msra.mxu0 0
      %1123 = vmatpush.bf16.msra.mxu0 0
      %1124 = vmatpush.bf16.msra.mxu0 0
      %1125 = vmatpush.bf16.msra.mxu0 %v1116
      %1126 = vmatmul.bf16.gmra.mxu0 %v1113
      %v1127 = vpop.f32.mrf.mxu0
      %v1128 = vadd.f32 0.0, %v1127
      %v1129 = vpop.f32.mrf.mxu0
      %1130 = vdwg.mxu0
      %v1131 = vpack.c.bf16 %v1128, %v1128
      %s1132 = scalar_lea.vmem %s589, 8
      %v1133 = vld [vmem:[%s1132] sm:$0xf]
      %v1135 = vsel %vm717, %v1131, 0
      %v1138 = vsel %vm753, %v1133, 0
      %1140 = vmatpush.bf16.msra.mxu0 0
      %1141 = vmatpush.bf16.msra.mxu0 0
      %1142 = vmatpush.bf16.msra.mxu0 0
      %1143 = vmatpush.bf16.msra.mxu0 0
      %1144 = vmatpush.bf16.msra.mxu0 0
      %1145 = vmatpush.bf16.msra.mxu0 0
      %1146 = vmatpush.bf16.msra.mxu0 0
      %1147 = vmatpush.bf16.msra.mxu0 %v1138
      %1148 = vmatmul.bf16.gmra.mxu0 %v1135
      %v1149 = vpop.f32.mrf.mxu0
      %v1150 = vadd.f32 0.0, %v1149
      %v1151 = vpop.f32.mrf.mxu0
      %1152 = vdwg.mxu0
      %v1153 = vadd.f32 %v969, %v1150
      %s1154 = scalar_lea.vmem %s562, 48
      %v1155 = vld [vmem:[%s1154] sm:$0xf]
      %v1156 = vld [vmem:[%s1154 + $0x4] sm:$0xf]
      %v1157 = vld [vmem:[%s1154 + $0x8] sm:$0xf]
      %v1158 = vld [vmem:[%s1154 + $0xc] sm:$0xf]
      %s1159 = scalar_lea.vmem %s566, 3
      %v1160 = vld [vmem:[%s1159] sm:$0x1]
      %v1162 = vperm.slane %v1160, 0
      %v1168 = vunpack.c.l.b16 %v1155
      %v1169 = vunpack.c.l.b16 %v1156
      %v1170 = vunpack.c.l.b16 %v1157
      %v1171 = vunpack.c.l.b16 %v1158
      %v1172 = vpack.c.b16 %v1169, %v1168
      %v1173 = vpack.c.b16 %v1171, %v1170
      %1176 = vmatpush.bf16.msra.mxu0 0
      %1177 = vmatpush.bf16.msra.mxu0 0
      %1178 = vmatpush.bf16.msra.mxu0 0
      %1179 = vmatpush.bf16.msra.mxu0 0
      %1180 = vmatpush.bf16.msra.mxu0 0
      %1181 = vmatpush.bf16.msra.mxu0 0
      %1182 = vmatpush.bf16.msra.mxu0 %v1173
      %1183 = vmatpush.bf16.msra.mxu0 %v1172
      %1184 = vmatmul.bf16.gmra.mxu0 %v630
      %v1185 = vpop.f32.mrf.mxu0
      %v1186 = vadd.f32 %v1162, %v1185
      %v1187 = vpop.f32.mrf.mxu0
      %1188 = vdwg.mxu0
      %v1189 = vmul.f32 %v1186, 0.35355338
      %s1190 = scalar_lea.vmem %s571, 48
      %v1191 = vld [vmem:[%s1190] sm:$0xf]
      %v1192 = vld [vmem:[%s1190 + $0x4] sm:$0xf]
      %v1193 = vld [vmem:[%s1190 + $0x8] sm:$0xf]
      %v1194 = vld [vmem:[%s1190 + $0xc] sm:$0xf]
      %s1195 = scalar_lea.vmem %s575, 3
      %v1196 = vld [vmem:[%s1195] sm:$0x1]
      %v1198 = vperm.slane %v1196, 0
      %v1204 = vunpack.c.l.b16 %v1191
      %v1205 = vunpack.c.l.b16 %v1192
      %v1206 = vunpack.c.l.b16 %v1193
      %v1207 = vunpack.c.l.b16 %v1194
      %v1208 = vpack.c.b16 %v1205, %v1204
      %v1209 = vpack.c.b16 %v1207, %v1206
      %1212 = vmatpush.bf16.msra.mxu0 0
      %1213 = vmatpush.bf16.msra.mxu0 0
      %1214 = vmatpush.bf16.msra.mxu0 0
      %1215 = vmatpush.bf16.msra.mxu0 0
      %1216 = vmatpush.bf16.msra.mxu0 0
      %1217 = vmatpush.bf16.msra.mxu0 0
      %1218 = vmatpush.bf16.msra.mxu0 %v1209
      %1219 = vmatpush.bf16.msra.mxu0 %v1208
      %1220 = vmatmul.bf16.gmra.mxu0 %v667
      %v1221 = vpop.f32.mrf.mxu0
      %v1222 = vadd.f32 %v1198, %v1221
      %v1223 = vpop.f32.mrf.mxu0
      %1224 = vdwg.mxu0
      %s1225 = scalar_lea.vmem %s580, 48
      %v1226 = vld [vmem:[%s1225] sm:$0xf]
      %v1227 = vld [vmem:[%s1225 + $0x4] sm:$0xf]
      %v1228 = vld [vmem:[%s1225 + $0x8] sm:$0xf]
      %v1229 = vld [vmem:[%s1225 + $0xc] sm:$0xf]
      %s1230 = scalar_lea.vmem %s584, 3
      %v1231 = vld [vmem:[%s1230] sm:$0x1]
      %v1233 = vperm.slane %v1231, 0
      %v1239 = vunpack.c.l.b16 %v1226
      %v1240 = vunpack.c.l.b16 %v1227
      %v1241 = vunpack.c.l.b16 %v1228
      %v1242 = vunpack.c.l.b16 %v1229
      %v1243 = vpack.c.b16 %v1240, %v1239
      %v1244 = vpack.c.b16 %v1242, %v1241
      %1247 = vmatpush.bf16.msra.mxu0 0
      %1248 = vmatpush.bf16.msra.mxu0 0
      %1249 = vmatpush.bf16.msra.mxu0 0
      %1250 = vmatpush.bf16.msra.mxu0 0
      %1251 = vmatpush.bf16.msra.mxu0 0
      %1252 = vmatpush.bf16.msra.mxu0 0
      %1253 = vmatpush.bf16.msra.mxu0 %v1244
      %1254 = vmatpush.bf16.msra.mxu0 %v1243
      %1255 = vmatmul.bf16.gmra.mxu0 %v667
      %v1256 = vpop.f32.mrf.mxu0
      %v1257 = vadd.f32 %v1233, %v1256
      %v1258 = vpop.f32.mrf.mxu0
      %1259 = vdwg.mxu0
      %v1260 = vpack.c.bf16 %v1189, %v1189
      %v1261 = vpack.c.bf16 %v1222, %v1222
      %v1263 = vsel %vm717, %v1260, 0
      %v1266 = vsel %vm717, %v1261, 0
      %1268 = vmatpush.bf16.xpose.msra.mxu0 0
      %1269 = vmatpush.bf16.xpose.msra.mxu0 0
      %1270 = vmatpush.bf16.xpose.msra.mxu0 0
      %1271 = vmatpush.bf16.xpose.msra.mxu0 0
      %1272 = vmatpush.bf16.xpose.msra.mxu0 0
      %1273 = vmatpush.bf16.xpose.msra.mxu0 0
      %1274 = vmatpush.bf16.xpose.msra.mxu0 0
      %1275 = vmatpush.bf16.xpose.msra.mxu0 %v1266
      %1276 = vmatmul.bf16.gmra.mxu0 %v1263
      %v1277 = vpop.f32.mrf.mxu0
      %v1278 = vadd.f32 0.0, %v1277
      %v1279 = vpop.f32.mrf.mxu0
      %1280 = vdwg.mxu0
      %v1281 = vsel %vm717, %v1278, -inf
      %1282 = vmax.xlane.f32.xlu0 %v1281
      %v1283 = vpop.xlane.xlu0 %1282
      %v1284 = vsub.f32 %v1278, %v1283
      %v1285 = vmul.f32 %v1284, 1.442695
      %v1286 = vpow.pop %v1285
      %v1287 = vsel %vm717, %v1286, 0.0
      %1288 = vadd.xlane.f32.xlu0 %v1287
      %v1289 = vpop.xlane.xlu0 %1288
      %v1290 = vrcp.pop %v1289
      %v1291 = vmul.f32 %v1286, %v1290
      %v1292 = vpack.c.bf16 %v1291, %v1291
      %v1293 = vpack.c.bf16 %v1257, %v1257
      %v1295 = vsel %vm717, %v1292, 0
      %v1298 = vsel %vm753, %v1293, 0
      %1300 = vmatpush.bf16.msra.mxu0 0
      %1301 = vmatpush.bf16.msra.mxu0 0
      %1302 = vmatpush.bf16.msra.mxu0 0
      %1303 = vmatpush.bf16.msra.mxu0 0
      %1304 = vmatpush.bf16.msra.mxu0 0
      %1305 = vmatpush.bf16.msra.mxu0 0
      %1306 = vmatpush.bf16.msra.mxu0 0
      %1307 = vmatpush.bf16.msra.mxu0 %v1298
      %1308 = vmatmul.bf16.gmra.mxu0 %v1295
      %v1309 = vpop.f32.mrf.mxu0
      %v1310 = vadd.f32 0.0, %v1309
      %v1311 = vpop.f32.mrf.mxu0
      %1312 = vdwg.mxu0
      %v1313 = vpack.c.bf16 %v1310, %v1310
      %s1314 = scalar_lea.vmem %s589, 12
      %v1315 = vld [vmem:[%s1314] sm:$0xf]
      %v1317 = vsel %vm717, %v1313, 0
      %v1320 = vsel %vm753, %v1315, 0
      %1322 = vmatpush.bf16.msra.mxu0 0
      %1323 = vmatpush.bf16.msra.mxu0 0
      %1324 = vmatpush.bf16.msra.mxu0 0
      %1325 = vmatpush.bf16.msra.mxu0 0
      %1326 = vmatpush.bf16.msra.mxu0 0
      %1327 = vmatpush.bf16.msra.mxu0 0
      %1328 = vmatpush.bf16.msra.mxu0 0
      %1329 = vmatpush.bf16.msra.mxu0 %v1320
      %1330 = vmatmul.bf16.gmra.mxu0 %v1317
      %v1331 = vpop.f32.mrf.mxu0
      %v1332 = vadd.f32 0.0, %v1331
      %v1333 = vpop.f32.mrf.mxu0
      %1334 = vdwg.mxu0
      %v1335 = vadd.f32 %v1153, %v1332
      %v1336 = vld [vmem:[#allocation2] sm:$0xff]
      %v1337 = vld [vmem:[%s592] sm:$0x1]
      %v1339 = vperm.slane %v1337, 0
      %v1341 = vadd.f32 %v1335, %v1339
      %v1342 = vadd.f32 %v1336, %v1341
      %1343 = vst.msk [vmem:[#allocation2] sm:$0xff] %vm628, %v1342
      %p1344 = scmp.eq.s32.totalorder %s28, 1
      // Predicated region
      $region73: #{_lambda_.7} parent=67 // pred_check
        %p1345 = pneg %p1344
      $region74: #{_lambda_.7} parent=67 // pred_check_branch
        %1347 = sbr.rel (%p1345) target = $region76
      $region75: #{_lambda_.7} parent=67 // pred_region
        %v1348 = vld [vmem:[#allocation2] sm:$0xff]
        %v1349 = vadd.f32 %v604, %v1348
        %v1350 = vsel %vm628, %v1349, 0.0
        %1351 = vadd.xlane.f32.xlu0 %v1350
        %v1352 = vpop.xlane.xlu0 %1351
        %v1353 = vrcp.pop 32.0
        %v1354 = vmul.f32 32.0, %v1353
        %v1355 = vsub.f32 1.0, %v1354
        %v1356 = vmul.f32 %v1353, %v1355
        %v1357 = vadd.f32 %v1353, %v1356
        %vm1358 = vweird.f32 %v1353
        %v1359 = vsel %vm1358, %v1353, %v1357
        %v1360 = vmul.f32 %v1352, %v1359
        %v1361 = vsub.f32 %v1349, %v1360
        %v1362 = vmul.f32 %v1361, %v1361
        %v1363 = vsel %vm628, %v1362, 0.0
        %1364 = vadd.xlane.f32.xlu0 %v1363
        %v1365 = vpop.xlane.xlu0 %1364
        %v1366 = vmul.f32 %v1365, %v1359
        %v1367 = vadd.f32 %v1366, 1e-05
        %v1368 = vrsqrt.pop %v1367
        %v1369 = vmul.f32 %v1368, %v1367
        %v1370 = vmul.f32 %v1369, %v1368
        %v1371 = vmul.f32 0.5, %v1370
        %v1372 = vsub.f32 1.5, %v1371
        %v1373 = vmul.f32 %v1368, %v1372
        %vm1374 = vweird.f32 %v1367
        %vm1375 = vweird.f32 %v1368
        %vm1376 = vmor %vm1374, %vm1375
        %v1377 = vsel %vm1376, %v1368, %v1373
        %v1378 = vmul.f32 %v1361, %v1377
        %v1379 = vld [vmem:[%s10] sm:$0x1]
        %v1381 = vperm.slane %v1379, 0
        %v1383 = vmul.f32 %v1378, %v1381
        %v1384 = vld [vmem:[%s11] sm:$0x1]
        %v1386 = vperm.slane %v1384, 0
        %v1388 = vadd.f32 %v1383, %v1386
        %1389 = vst.msk [vmem:[%s596] sm:$0xff] %vm628, %v1388
      $region76: #{_lambda_.7} parent=67 // pred_fallthru
        _
      %p1390 = scmp.lt.s32.totalorder %s27, 1
      %s1391 = scalar_select %p1390, %s27, 1
      %s1392 = smul.addr %s1391, 8
      %s1393 = scalar_lea.vmem %s12, %s1392
      // Predicated region
      $region77: #{_lambda_.7} parent=67 // pred_check
        %p1394 = pneg %p357
      $region78: #{_lambda_.7} parent=67 // pred_check_branch
        %1396 = sbr.rel (%p1394) target = $region80
      $region79: #{_lambda_.7} parent=67 // pred_region
        _
      $region80: #{_lambda_.7} parent=67 // pred_fallthru
        _
    $region68: #{_lambda_.7} parent=5 // pred_fallthru
      _
    %p1397 = scmp.le.s32.totalorder 2, %s18
    // Predicated region
    $region81: #{_lambda_.7} parent=5 // pred_check
      %p1398 = pneg %p1397
    $region82: #{_lambda_.7} parent=5 // pred_check_branch
      %1400 = sbr.rel (%p1398) target = $region84
    $region83: #{_lambda_.7} parent=5 // pred_region
      %s1401 = ssub.s32 %s18, 2
      // Predicated region
      $region85: #{_lambda_.7} parent=83 // pred_check
        %p1402 = pneg %p363
      $region86: #{_lambda_.7} parent=83 // pred_check_branch
        %1404 = sbr.rel (%p1402) target = $region88
      $region87: #{_lambda_.7} parent=83 // pred_region
        %p1405 = scmp.lt.s32.totalorder %s29, 1
        %s1406 = scalar_select %p1405, %s29, 1
        %s1407 = smul.addr %s1406, 8
        %s1408 = scalar_lea.vmem %s12, %s1407
      $region88: #{_lambda_.7} parent=83 // pred_fallthru
        _
    $region84: #{_lambda_.7} parent=5 // pred_fallthru
      _
  $region6: #{_lambda_.7} parent=0 // loop_footer
    %s22 = sadd.s32 1, %s18
  $region7: #{_lambda_.7} parent=0 // loop_footer_branch
    %17 = sbr.rel target = $region3
  $region8: #{_lambda_.7} parent=0 // loop_exit
    _

</llo_original>
